<compile_context>
chip_gen: v7x
topology: tpu7x:2x2x1
jax: 0.10.0
libtpu: 0.0.40
codegen_flags: <defaults>
</compile_context>

<pallas_src>
import functools

import jax
import jax.numpy as jnp
from jax.experimental import pallas as pl
from jax.experimental.pallas import tpu as pltpu


def _boundary_kernel(x_ref, p_ref, o_ref, *, K, H, W, depth):
    """Fused forward of `depth` DSCBlocks, whole batch in one tile.

    x_ref: (B*C, H*W)              one (batch, channel) image per sublane row
    p_ref: (depth, B*C, 128)       packed params per layer (last dim lane-padded):
             [:, :, :K*K]          depthwise tap weights (row = (b,c), col = kh*K+kw)
             [:, :, K*K:K*K+B*C]   folded pointwise matrix, block-diagonal per batch
             [:, :, K*K+B*C]       folded bias b_eff
    o_ref: (B*C, H*W)
    """
    BC, HW = x_ref.shape
    KK = K * K
    P = K // 2

    t = x_ref[...].astype(jnp.float32)                        # (BC, HW)

    # Per-lane spatial coordinates (each row is one full H*W image; lane rolls
    # are per-row, so images never leak into each other).
    li = jax.lax.broadcasted_iota(jnp.int32, (BC, HW), 1)
    if W & (W - 1) == 0:                                      # power of two -> bit ops
        w_idx = jnp.bitwise_and(li, W - 1)
    else:
        w_idx = li % W

    for layer in range(depth):
        pk = p_ref[layer].astype(jnp.float32)                 # (BC, 128) aligned load

        # ---- depthwise KxK conv, zero 'same' padding, via lane rolls + masks ----
        # Masks are recomputed at the point of use (cheap vcmp) instead of being
        # hoisted and held live across both unrolled layers.
        u = []
        for dw in range(-P, P + 1):
            if dw == 0:
                u.append(t)
            else:
                s = pltpu.roll(t, (-dw) % HW, axis=1)
                if dw > 0:
                    s = jnp.where(w_idx < (W - dw), s, 0.0)
                else:
                    s = jnp.where(w_idx >= (-dw), s, 0.0)
                u.append(s)

        acc = None
        for dh in range(-P, P + 1):
            inner = None
            for j in range(K):
                tap = (dh + P) * K + j
                term = u[j] * pk[:, tap:tap + 1]              # per-row tap weight (BC,1)
                inner = term if inner is None else inner + term
            if dh != 0:
                inner = pltpu.roll(inner, (-dh * W) % HW, axis=1)
                if dh > 0:
                    inner = jnp.where(li < (H - dh) * W, inner, 0.0)
                else:
                    inner = jnp.where(li >= (-dh) * W, inner, 0.0)
            acc = inner if acc is None else acc + inner       # (BC, HW)

        # ---- pointwise 1x1 (block-diag W_eff) + folded biases/BN + ReLU ----
        # Exact f32 VPU broadcast-FMAs; bias is a (BC,1) column, broadcast on add.
        # (If a bundle dump shows the XLU slot saturating, swap this loop for
        #  jnp.dot(pk[:, KK:KK+BC], acc, preferred_element_type=jnp.float32).)
        y = pk[:, KK + BC:KK + BC + 1]                        # (BC, 1) folded bias
        for ci in range(BC):
            y = y + pk[:, KK + ci:KK + ci + 1] * acc[ci:ci + 1, :]
        t = jnp.maximum(y, 0.0)

    o_ref[...] = t.astype(o_ref.dtype)


def boundary_branch(x_nchw, packed_params, *, K, depth):
    """BoundaryBranch forward. x_nchw: (B, C, H, W). packed_params: (depth, B*C, 128)."""
    assert K % 2 == 1, "odd kernel_size assumed (PyTorch padding=K//2 'same')"
    B, C, H, W = x_nchw.shape
    BC, HW = B * C, H * W
    assert HW % 128 == 0, "lane-dense layout needs H*W to be a multiple of 128"
    x2 = x_nchw.reshape(BC, HW)                               # contiguous reshape, free

    kernel = functools.partial(_boundary_kernel, K=K, H=H, W=W, depth=depth)
    out = pl.pallas_call(
        kernel,
        out_shape=jax.ShapeDtypeStruct((BC, HW), x_nchw.dtype),
        grid_spec=pltpu.PrefetchScalarGridSpec(
            num_scalar_prefetch=0,
            grid=(1,),                                        # single fused grid step
            in_specs=[
                pl.BlockSpec((BC, HW), lambda i: (0, 0)),
                pl.BlockSpec(packed_params.shape, lambda i: (0, 0, 0)),
            ],
            out_specs=pl.BlockSpec((BC, HW), lambda i: (0, 0)),
        ),
        compiler_params=pltpu.CompilerParams(
            dimension_semantics=("arbitrary",)),
    )(x2, packed_params)
    return out.reshape(B, C, H, W)


def make_dsc_params(key, C, K, eps=1e-5):
    """Deterministic synthetic DSCBlock params (PyTorch conventions), BN folded."""
    k1, k2, k3, k4, k5, k6, k7, k8 = jax.random.split(key, 8)
    dw_w = jax.random.normal(k1, (C, K, K), jnp.float32) * 0.05   # depthwise (C,1,K,K) squeezed
    dw_b = jax.random.normal(k2, (C,), jnp.float32) * 0.05
    pw_w = jax.random.normal(k3, (C, C), jnp.float32) * 0.2       # (out, in)
    pw_b = jax.random.normal(k4, (C,), jnp.float32) * 0.05
    gamma = 1.0 + 0.1 * jax.random.normal(k5, (C,), jnp.float32)
    beta = 0.1 * jax.random.normal(k6, (C,), jnp.float32)
    run_mean = 0.1 * jax.random.normal(k7, (C,), jnp.float32)
    run_var = jnp.abs(1.0 + 0.1 * jax.random.normal(k8, (C,), jnp.float32))
    bn_scale = gamma / jnp.sqrt(run_var + eps)
    bn_shift = beta - run_mean * bn_scale
    return (dw_w, dw_b, pw_w, pw_b, bn_scale, bn_shift)


def pack_params(raw_params, K, batch, lane_pad=128):
    """Fold BN/biases, replicate taps to B*C rows, block-diagonalize the pointwise,
    and pad each layer's slab to `lane_pad` lanes for aligned vector loads."""
    packed = []
    for dw_w, dw_b, pw_w, pw_b, s, t in raw_params:
        C = dw_w.shape[0]
        dw_taps = jnp.tile(dw_w.reshape(C, K * K), (batch, 1))          # (B*C, K*K)
        w_eff = pw_w * s[:, None]                                       # fold BN scale
        b_eff = w_eff @ dw_b + s * pw_b + t                             # fold dw/pw bias + BN shift
        w_blk = jnp.kron(jnp.eye(batch, dtype=w_eff.dtype), w_eff)      # (B*C, B*C) block-diag
        b_rep = jnp.tile(b_eff, batch)[:, None]                         # (B*C, 1)
        slab = jnp.concatenate([dw_taps, w_blk, b_rep], axis=1)
        pad = (-slab.shape[1]) % lane_pad
        if pad:
            slab = jnp.pad(slab, ((0, 0), (0, pad)))
        packed.append(slab)
    return jnp.stack(packed, axis=0)                                    # (depth, B*C, 128)


def reference_forward(x, raw_params, K):
    """Pure-JAX reference (unfolded): depthwise -> pointwise -> BN(eval) -> ReLU."""
    P = K // 2
    _, _, H, W = x.shape
    y = x
    for dw_w, dw_b, pw_w, pw_b, s, t in raw_params:
        yp = jnp.pad(y, ((0, 0), (0, 0), (P, P), (P, P)))
        z = jnp.zeros_like(y)
        for kh in range(K):
            for kw in range(K):
                z = z + yp[:, :, kh:kh + H, kw:kw + W] * dw_w[None, :, kh, kw, None, None]
        z = z + dw_b[None, :, None, None]
        p = jnp.einsum("oc,bchw->bohw", pw_w, z,
                       precision=jax.lax.Precision.HIGHEST)
        p = p + pw_b[None, :, None, None]
        y = jnp.maximum(p * s[None, :, None, None] + t[None, :, None, None], 0.0)
    return y


if __name__ == "__main__":
    B, C, H, W = 2, 4, 16, 16
    K = 9
    DEPTH = 2

    root = jax.random.PRNGKey(0)
    kx, *layer_keys = jax.random.split(root, DEPTH + 1)

    x = jax.random.normal(kx, (B, C, H, W), jnp.float32)
    raw_params = [make_dsc_params(k, C, K) for k in layer_keys]
    packed = pack_params(raw_params, K, batch=B)

    out = boundary_branch(x, packed, K=K, depth=DEPTH)
    out = jax.block_until_ready(out)

    assert out.shape == (B, C, H, W)
    assert bool(jnp.all(jnp.isfinite(out)))

    ref = jax.jit(functools.partial(reference_forward, K=K))(x, raw_params)
    ref = jax.block_until_ready(ref)
    max_err = float(jnp.max(jnp.abs(out - ref)))
    assert max_err < 1e-4, f"kernel/reference mismatch: max |err| = {max_err}"

    print("KERNEL_OK")
</pallas_src>

<mosaic_0001>
module attributes {stable_mosaic.version = 11 : i64} {
  func.func @_boundary_kernel(%arg0: i32, %arg1: memref<8x256xf32, #tpu.memory_space<vmem>>, %arg2: memref<2x8x128xf32, #tpu.memory_space<vmem>>, %arg3: memref<8x256xf32, #tpu.memory_space<vmem>>) attributes {dimension_semantics = [#tpu.dimension_semantics<arbitrary>], iteration_bounds = array<i64: 1>, scalar_prefetch = 0 : i64, scratch_operands = 0 : i64, tpu.core_type = #tpu.core_type<tc>, window_params = [{pipeline_mode = #tpu.pipeline_mode<synchronous>, transform_indices = @transform_0, window_bounds = array<i64: 8, 256>}, {pipeline_mode = #tpu.pipeline_mode<synchronous>, transform_indices = @transform_1, window_bounds = array<i64: 2, 8, 128>}, {pipeline_mode = #tpu.pipeline_mode<synchronous>, transform_indices = @transform_2, window_bounds = array<i64: 8, 256>}]} {
    %c0 = arith.constant 0 : index
    %c0_0 = arith.constant 0 : index
    %0 = vector.load %arg1[%c0, %c0_0] : memref<8x256xf32, #tpu.memory_space<vmem>>, vector<8x256xf32>
    %1 = tpu.iota {dimensions = array<i32: 1>} : vector<8x256xi32>
    %c15_i32 = arith.constant 15 : i32
    %2 = vector.broadcast %c15_i32 : i32 to vector<8x256xi32>
    %3 = arith.andi %1, %2 : vector<8x256xi32>
    %c0_1 = arith.constant 0 : index
    %c0_2 = arith.constant 0 : index
    %c0_3 = arith.constant 0 : index
    %4 = vector.load %arg2[%c0_1, %c0_2, %c0_3] : memref<2x8x128xf32, #tpu.memory_space<vmem>>, vector<1x8x128xf32>
    %5 = vector.shape_cast %4 : vector<1x8x128xf32> to vector<8x128xf32>
    %c4_i32 = arith.constant 4 : i32
    %6 = tpu.dynamic_rotate %0 by %c4_i32 dim 1 : vector<8x256xf32>, i32 -> vector<8x256xf32>
    %c4_i32_4 = arith.constant 4 : i32
    %7 = vector.broadcast %c4_i32_4 : i32 to vector<8x256xi32>
    %8 = arith.cmpi sge, %3, %7 : vector<8x256xi32>
    %cst = arith.constant 0.000000e+00 : f32
    %9 = vector.broadcast %cst : f32 to vector<8x256xf32>
    %10 = arith.select %8, %6, %9 : vector<8x256xi1>, vector<8x256xf32>
    %c3_i32 = arith.constant 3 : i32
    %11 = tpu.dynamic_rotate %0 by %c3_i32 dim 1 : vector<8x256xf32>, i32 -> vector<8x256xf32>
    %c3_i32_5 = arith.constant 3 : i32
    %12 = vector.broadcast %c3_i32_5 : i32 to vector<8x256xi32>
    %13 = arith.cmpi sge, %3, %12 : vector<8x256xi32>
    %cst_6 = arith.constant 0.000000e+00 : f32
    %14 = vector.broadcast %cst_6 : f32 to vector<8x256xf32>
    %15 = arith.select %13, %11, %14 : vector<8x256xi1>, vector<8x256xf32>
    %c2_i32 = arith.constant 2 : i32
    %16 = tpu.dynamic_rotate %0 by %c2_i32 dim 1 : vector<8x256xf32>, i32 -> vector<8x256xf32>
    %c2_i32_7 = arith.constant 2 : i32
    %17 = vector.broadcast %c2_i32_7 : i32 to vector<8x256xi32>
    %18 = arith.cmpi sge, %3, %17 : vector<8x256xi32>
    %cst_8 = arith.constant 0.000000e+00 : f32
    %19 = vector.broadcast %cst_8 : f32 to vector<8x256xf32>
    %20 = arith.select %18, %16, %19 : vector<8x256xi1>, vector<8x256xf32>
    %c1_i32 = arith.constant 1 : i32
    %21 = tpu.dynamic_rotate %0 by %c1_i32 dim 1 : vector<8x256xf32>, i32 -> vector<8x256xf32>
    %c1_i32_9 = arith.constant 1 : i32
    %22 = vector.broadcast %c1_i32_9 : i32 to vector<8x256xi32>
    %23 = arith.cmpi sge, %3, %22 : vector<8x256xi32>
    %cst_10 = arith.constant 0.000000e+00 : f32
    %24 = vector.broadcast %cst_10 : f32 to vector<8x256xf32>
    %25 = arith.select %23, %21, %24 : vector<8x256xi1>, vector<8x256xf32>
    %c255_i32 = arith.constant 255 : i32
    %26 = tpu.dynamic_rotate %0 by %c255_i32 dim 1 : vector<8x256xf32>, i32 -> vector<8x256xf32>
    %c15_i32_11 = arith.constant 15 : i32
    %27 = vector.broadcast %c15_i32_11 : i32 to vector<8x256xi32>
    %28 = arith.cmpi slt, %3, %27 : vector<8x256xi32>
    %cst_12 = arith.constant 0.000000e+00 : f32
    %29 = vector.broadcast %cst_12 : f32 to vector<8x256xf32>
    %30 = arith.select %28, %26, %29 : vector<8x256xi1>, vector<8x256xf32>
    %c254_i32 = arith.constant 254 : i32
    %31 = tpu.dynamic_rotate %0 by %c254_i32 dim 1 : vector<8x256xf32>, i32 -> vector<8x256xf32>
    %c14_i32 = arith.constant 14 : i32
    %32 = vector.broadcast %c14_i32 : i32 to vector<8x256xi32>
    %33 = arith.cmpi slt, %3, %32 : vector<8x256xi32>
    %cst_13 = arith.constant 0.000000e+00 : f32
    %34 = vector.broadcast %cst_13 : f32 to vector<8x256xf32>
    %35 = arith.select %33, %31, %34 : vector<8x256xi1>, vector<8x256xf32>
    %c253_i32 = arith.constant 253 : i32
    %36 = tpu.dynamic_rotate %0 by %c253_i32 dim 1 : vector<8x256xf32>, i32 -> vector<8x256xf32>
    %c13_i32 = arith.constant 13 : i32
    %37 = vector.broadcast %c13_i32 : i32 to vector<8x256xi32>
    %38 = arith.cmpi slt, %3, %37 : vector<8x256xi32>
    %cst_14 = arith.constant 0.000000e+00 : f32
    %39 = vector.broadcast %cst_14 : f32 to vector<8x256xf32>
    %40 = arith.select %38, %36, %39 : vector<8x256xi1>, vector<8x256xf32>
    %c252_i32 = arith.constant 252 : i32
    %41 = tpu.dynamic_rotate %0 by %c252_i32 dim 1 : vector<8x256xf32>, i32 -> vector<8x256xf32>
    %c12_i32 = arith.constant 12 : i32
    %42 = vector.broadcast %c12_i32 : i32 to vector<8x256xi32>
    %43 = arith.cmpi slt, %3, %42 : vector<8x256xi32>
    %cst_15 = arith.constant 0.000000e+00 : f32
    %44 = vector.broadcast %cst_15 : f32 to vector<8x256xf32>
    %45 = arith.select %43, %41, %44 : vector<8x256xi1>, vector<8x256xf32>
    %46 = vector.extract_strided_slice %5 {offsets = [0, 0], sizes = [8, 1], strides = [1, 1]} : vector<8x128xf32> to vector<8x1xf32>
    %47 = vector.broadcast %46 : vector<8x1xf32> to vector<8x256xf32>
    %48 = arith.mulf %10, %47 : vector<8x256xf32>
    %49 = vector.extract_strided_slice %5 {offsets = [0, 1], sizes = [8, 1], strides = [1, 1]} : vector<8x128xf32> to vector<8x1xf32>
    %50 = vector.broadcast %49 : vector<8x1xf32> to vector<8x256xf32>
    %51 = arith.mulf %15, %50 : vector<8x256xf32>
    %52 = arith.addf %48, %51 : vector<8x256xf32>
    %53 = vector.extract_strided_slice %5 {offsets = [0, 2], sizes = [8, 1], strides = [1, 1]} : vector<8x128xf32> to vector<8x1xf32>
    %54 = vector.broadcast %53 : vector<8x1xf32> to vector<8x256xf32>
    %55 = arith.mulf %20, %54 : vector<8x256xf32>
    %56 = arith.addf %52, %55 : vector<8x256xf32>
    %57 = vector.extract_strided_slice %5 {offsets = [0, 3], sizes = [8, 1], strides = [1, 1]} : vector<8x128xf32> to vector<8x1xf32>
    %58 = vector.broadcast %57 : vector<8x1xf32> to vector<8x256xf32>
    %59 = arith.mulf %25, %58 : vector<8x256xf32>
    %60 = arith.addf %56, %59 : vector<8x256xf32>
    %61 = vector.extract_strided_slice %5 {offsets = [0, 4], sizes = [8, 1], strides = [1, 1]} : vector<8x128xf32> to vector<8x1xf32>
    %62 = vector.broadcast %61 : vector<8x1xf32> to vector<8x256xf32>
    %63 = arith.mulf %0, %62 : vector<8x256xf32>
    %64 = arith.addf %60, %63 : vector<8x256xf32>
    %65 = vector.extract_strided_slice %5 {offsets = [0, 5], sizes = [8, 1], strides = [1, 1]} : vector<8x128xf32> to vector<8x1xf32>
    %66 = vector.broadcast %65 : vector<8x1xf32> to vector<8x256xf32>
    %67 = arith.mulf %30, %66 : vector<8x256xf32>
    %68 = arith.addf %64, %67 : vector<8x256xf32>
    %69 = vector.extract_strided_slice %5 {offsets = [0, 6], sizes = [8, 1], strides = [1, 1]} : vector<8x128xf32> to vector<8x1xf32>
    %70 = vector.broadcast %69 : vector<8x1xf32> to vector<8x256xf32>
    %71 = arith.mulf %35, %70 : vector<8x256xf32>
    %72 = arith.addf %68, %71 : vector<8x256xf32>
    %73 = vector.extract_strided_slice %5 {offsets = [0, 7], sizes = [8, 1], strides = [1, 1]} : vector<8x128xf32> to vector<8x1xf32>
    %74 = vector.broadcast %73 : vector<8x1xf32> to vector<8x256xf32>
    %75 = arith.mulf %40, %74 : vector<8x256xf32>
    %76 = arith.addf %72, %75 : vector<8x256xf32>
    %77 = vector.extract_strided_slice %5 {offsets = [0, 8], sizes = [8, 1], strides = [1, 1]} : vector<8x128xf32> to vector<8x1xf32>
    %78 = vector.broadcast %77 : vector<8x1xf32> to vector<8x256xf32>
    %79 = arith.mulf %45, %78 : vector<8x256xf32>
    %80 = arith.addf %76, %79 : vector<8x256xf32>
    %c64_i32 = arith.constant 64 : i32
    %81 = tpu.dynamic_rotate %80 by %c64_i32 dim 1 : vector<8x256xf32>, i32 -> vector<8x256xf32>
    %c64_i32_16 = arith.constant 64 : i32
    %82 = vector.broadcast %c64_i32_16 : i32 to vector<8x256xi32>
    %83 = arith.cmpi sge, %1, %82 : vector<8x256xi32>
    %cst_17 = arith.constant 0.000000e+00 : f32
    %84 = vector.broadcast %cst_17 : f32 to vector<8x256xf32>
    %85 = arith.select %83, %81, %84 : vector<8x256xi1>, vector<8x256xf32>
    %86 = vector.extract_strided_slice %5 {offsets = [0, 9], sizes = [8, 1], strides = [1, 1]} : vector<8x128xf32> to vector<8x1xf32>
    %87 = vector.broadcast %86 : vector<8x1xf32> to vector<8x256xf32>
    %88 = arith.mulf %10, %87 : vector<8x256xf32>
    %89 = vector.extract_strided_slice %5 {offsets = [0, 10], sizes = [8, 1], strides = [1, 1]} : vector<8x128xf32> to vector<8x1xf32>
    %90 = vector.broadcast %89 : vector<8x1xf32> to vector<8x256xf32>
    %91 = arith.mulf %15, %90 : vector<8x256xf32>
    %92 = arith.addf %88, %91 : vector<8x256xf32>
    %93 = vector.extract_strided_slice %5 {offsets = [0, 11], sizes = [8, 1], strides = [1, 1]} : vector<8x128xf32> to vector<8x1xf32>
    %94 = vector.broadcast %93 : vector<8x1xf32> to vector<8x256xf32>
    %95 = arith.mulf %20, %94 : vector<8x256xf32>
    %96 = arith.addf %92, %95 : vector<8x256xf32>
    %97 = vector.extract_strided_slice %5 {offsets = [0, 12], sizes = [8, 1], strides = [1, 1]} : vector<8x128xf32> to vector<8x1xf32>
    %98 = vector.broadcast %97 : vector<8x1xf32> to vector<8x256xf32>
    %99 = arith.mulf %25, %98 : vector<8x256xf32>
    %100 = arith.addf %96, %99 : vector<8x256xf32>
    %101 = vector.extract_strided_slice %5 {offsets = [0, 13], sizes = [8, 1], strides = [1, 1]} : vector<8x128xf32> to vector<8x1xf32>
    %102 = vector.broadcast %101 : vector<8x1xf32> to vector<8x256xf32>
    %103 = arith.mulf %0, %102 : vector<8x256xf32>
    %104 = arith.addf %100, %103 : vector<8x256xf32>
    %105 = vector.extract_strided_slice %5 {offsets = [0, 14], sizes = [8, 1], strides = [1, 1]} : vector<8x128xf32> to vector<8x1xf32>
    %106 = vector.broadcast %105 : vector<8x1xf32> to vector<8x256xf32>
    %107 = arith.mulf %30, %106 : vector<8x256xf32>
    %108 = arith.addf %104, %107 : vector<8x256xf32>
    %109 = vector.extract_strided_slice %5 {offsets = [0, 15], sizes = [8, 1], strides = [1, 1]} : vector<8x128xf32> to vector<8x1xf32>
    %110 = vector.broadcast %109 : vector<8x1xf32> to vector<8x256xf32>
    %111 = arith.mulf %35, %110 : vector<8x256xf32>
    %112 = arith.addf %108, %111 : vector<8x256xf32>
    %113 = vector.extract_strided_slice %5 {offsets = [0, 16], sizes = [8, 1], strides = [1, 1]} : vector<8x128xf32> to vector<8x1xf32>
    %114 = vector.broadcast %113 : vector<8x1xf32> to vector<8x256xf32>
    %115 = arith.mulf %40, %114 : vector<8x256xf32>
    %116 = arith.addf %112, %115 : vector<8x256xf32>
    %117 = vector.extract_strided_slice %5 {offsets = [0, 17], sizes = [8, 1], strides = [1, 1]} : vector<8x128xf32> to vector<8x1xf32>
    %118 = vector.broadcast %117 : vector<8x1xf32> to vector<8x256xf32>
    %119 = arith.mulf %45, %118 : vector<8x256xf32>
    %120 = arith.addf %116, %119 : vector<8x256xf32>
    %c48_i32 = arith.constant 48 : i32
    %121 = tpu.dynamic_rotate %120 by %c48_i32 dim 1 : vector<8x256xf32>, i32 -> vector<8x256xf32>
    %c48_i32_18 = arith.constant 48 : i32
    %122 = vector.broadcast %c48_i32_18 : i32 to vector<8x256xi32>
    %123 = arith.cmpi sge, %1, %122 : vector<8x256xi32>
    %cst_19 = arith.constant 0.000000e+00 : f32
    %124 = vector.broadcast %cst_19 : f32 to vector<8x256xf32>
    %125 = arith.select %123, %121, %124 : vector<8x256xi1>, vector<8x256xf32>
    %126 = arith.addf %85, %125 : vector<8x256xf32>
    %127 = vector.extract_strided_slice %5 {offsets = [0, 18], sizes = [8, 1], strides = [1, 1]} : vector<8x128xf32> to vector<8x1xf32>
    %128 = vector.broadcast %127 : vector<8x1xf32> to vector<8x256xf32>
    %129 = arith.mulf %10, %128 : vector<8x256xf32>
    %130 = vector.extract_strided_slice %5 {offsets = [0, 19], sizes = [8, 1], strides = [1, 1]} : vector<8x128xf32> to vector<8x1xf32>
    %131 = vector.broadcast %130 : vector<8x1xf32> to vector<8x256xf32>
    %132 = arith.mulf %15, %131 : vector<8x256xf32>
    %133 = arith.addf %129, %132 : vector<8x256xf32>
    %134 = vector.extract_strided_slice %5 {offsets = [0, 20], sizes = [8, 1], strides = [1, 1]} : vector<8x128xf32> to vector<8x1xf32>
    %135 = vector.broadcast %134 : vector<8x1xf32> to vector<8x256xf32>
    %136 = arith.mulf %20, %135 : vector<8x256xf32>
    %137 = arith.addf %133, %136 : vector<8x256xf32>
    %138 = vector.extract_strided_slice %5 {offsets = [0, 21], sizes = [8, 1], strides = [1, 1]} : vector<8x128xf32> to vector<8x1xf32>
    %139 = vector.broadcast %138 : vector<8x1xf32> to vector<8x256xf32>
    %140 = arith.mulf %25, %139 : vector<8x256xf32>
    %141 = arith.addf %137, %140 : vector<8x256xf32>
    %142 = vector.extract_strided_slice %5 {offsets = [0, 22], sizes = [8, 1], strides = [1, 1]} : vector<8x128xf32> to vector<8x1xf32>
    %143 = vector.broadcast %142 : vector<8x1xf32> to vector<8x256xf32>
    %144 = arith.mulf %0, %143 : vector<8x256xf32>
    %145 = arith.addf %141, %144 : vector<8x256xf32>
    %146 = vector.extract_strided_slice %5 {offsets = [0, 23], sizes = [8, 1], strides = [1, 1]} : vector<8x128xf32> to vector<8x1xf32>
    %147 = vector.broadcast %146 : vector<8x1xf32> to vector<8x256xf32>
    %148 = arith.mulf %30, %147 : vector<8x256xf32>
    %149 = arith.addf %145, %148 : vector<8x256xf32>
    %150 = vector.extract_strided_slice %5 {offsets = [0, 24], sizes = [8, 1], strides = [1, 1]} : vector<8x128xf32> to vector<8x1xf32>
    %151 = vector.broadcast %150 : vector<8x1xf32> to vector<8x256xf32>
    %152 = arith.mulf %35, %151 : vector<8x256xf32>
    %153 = arith.addf %149, %152 : vector<8x256xf32>
    %154 = vector.extract_strided_slice %5 {offsets = [0, 25], sizes = [8, 1], strides = [1, 1]} : vector<8x128xf32> to vector<8x1xf32>
    %155 = vector.broadcast %154 : vector<8x1xf32> to vector<8x256xf32>
    %156 = arith.mulf %40, %155 : vector<8x256xf32>
    %157 = arith.addf %153, %156 : vector<8x256xf32>
    %158 = vector.extract_strided_slice %5 {offsets = [0, 26], sizes = [8, 1], strides = [1, 1]} : vector<8x128xf32> to vector<8x1xf32>
    %159 = vector.broadcast %158 : vector<8x1xf32> to vector<8x256xf32>
    %160 = arith.mulf %45, %159 : vector<8x256xf32>
    %161 = arith.addf %157, %160 : vector<8x256xf32>
    %c32_i32 = arith.constant 32 : i32
    %162 = tpu.dynamic_rotate %161 by %c32_i32 dim 1 : vector<8x256xf32>, i32 -> vector<8x256xf32>
    %c32_i32_20 = arith.constant 32 : i32
    %163 = vector.broadcast %c32_i32_20 : i32 to vector<8x256xi32>
    %164 = arith.cmpi sge, %1, %163 : vector<8x256xi32>
    %cst_21 = arith.constant 0.000000e+00 : f32
    %165 = vector.broadcast %cst_21 : f32 to vector<8x256xf32>
    %166 = arith.select %164, %162, %165 : vector<8x256xi1>, vector<8x256xf32>
    %167 = arith.addf %126, %166 : vector<8x256xf32>
    %168 = vector.extract_strided_slice %5 {offsets = [0, 27], sizes = [8, 1], strides = [1, 1]} : vector<8x128xf32> to vector<8x1xf32>
    %169 = vector.broadcast %168 : vector<8x1xf32> to vector<8x256xf32>
    %170 = arith.mulf %10, %169 : vector<8x256xf32>
    %171 = vector.extract_strided_slice %5 {offsets = [0, 28], sizes = [8, 1], strides = [1, 1]} : vector<8x128xf32> to vector<8x1xf32>
    %172 = vector.broadcast %171 : vector<8x1xf32> to vector<8x256xf32>
    %173 = arith.mulf %15, %172 : vector<8x256xf32>
    %174 = arith.addf %170, %173 : vector<8x256xf32>
    %175 = vector.extract_strided_slice %5 {offsets = [0, 29], sizes = [8, 1], strides = [1, 1]} : vector<8x128xf32> to vector<8x1xf32>
    %176 = vector.broadcast %175 : vector<8x1xf32> to vector<8x256xf32>
    %177 = arith.mulf %20, %176 : vector<8x256xf32>
    %178 = arith.addf %174, %177 : vector<8x256xf32>
    %179 = vector.extract_strided_slice %5 {offsets = [0, 30], sizes = [8, 1], strides = [1, 1]} : vector<8x128xf32> to vector<8x1xf32>
    %180 = vector.broadcast %179 : vector<8x1xf32> to vector<8x256xf32>
    %181 = arith.mulf %25, %180 : vector<8x256xf32>
    %182 = arith.addf %178, %181 : vector<8x256xf32>
    %183 = vector.extract_strided_slice %5 {offsets = [0, 31], sizes = [8, 1], strides = [1, 1]} : vector<8x128xf32> to vector<8x1xf32>
    %184 = vector.broadcast %183 : vector<8x1xf32> to vector<8x256xf32>
    %185 = arith.mulf %0, %184 : vector<8x256xf32>
    %186 = arith.addf %182, %185 : vector<8x256xf32>
    %187 = vector.extract_strided_slice %5 {offsets = [0, 32], sizes = [8, 1], strides = [1, 1]} : vector<8x128xf32> to vector<8x1xf32>
    %188 = vector.broadcast %187 : vector<8x1xf32> to vector<8x256xf32>
    %189 = arith.mulf %30, %188 : vector<8x256xf32>
    %190 = arith.addf %186, %189 : vector<8x256xf32>
    %191 = vector.extract_strided_slice %5 {offsets = [0, 33], sizes = [8, 1], strides = [1, 1]} : vector<8x128xf32> to vector<8x1xf32>
    %192 = vector.broadcast %191 : vector<8x1xf32> to vector<8x256xf32>
    %193 = arith.mulf %35, %192 : vector<8x256xf32>
    %194 = arith.addf %190, %193 : vector<8x256xf32>
    %195 = vector.extract_strided_slice %5 {offsets = [0, 34], sizes = [8, 1], strides = [1, 1]} : vector<8x128xf32> to vector<8x1xf32>
    %196 = vector.broadcast %195 : vector<8x1xf32> to vector<8x256xf32>
    %197 = arith.mulf %40, %196 : vector<8x256xf32>
    %198 = arith.addf %194, %197 : vector<8x256xf32>
    %199 = vector.extract_strided_slice %5 {offsets = [0, 35], sizes = [8, 1], strides = [1, 1]} : vector<8x128xf32> to vector<8x1xf32>
    %200 = vector.broadcast %199 : vector<8x1xf32> to vector<8x256xf32>
    %201 = arith.mulf %45, %200 : vector<8x256xf32>
    %202 = arith.addf %198, %201 : vector<8x256xf32>
    %c16_i32 = arith.constant 16 : i32
    %203 = tpu.dynamic_rotate %202 by %c16_i32 dim 1 : vector<8x256xf32>, i32 -> vector<8x256xf32>
    %c16_i32_22 = arith.constant 16 : i32
    %204 = vector.broadcast %c16_i32_22 : i32 to vector<8x256xi32>
    %205 = arith.cmpi sge, %1, %204 : vector<8x256xi32>
    %cst_23 = arith.constant 0.000000e+00 : f32
    %206 = vector.broadcast %cst_23 : f32 to vector<8x256xf32>
    %207 = arith.select %205, %203, %206 : vector<8x256xi1>, vector<8x256xf32>
    %208 = arith.addf %167, %207 : vector<8x256xf32>
    %209 = vector.extract_strided_slice %5 {offsets = [0, 36], sizes = [8, 1], strides = [1, 1]} : vector<8x128xf32> to vector<8x1xf32>
    %210 = vector.broadcast %209 : vector<8x1xf32> to vector<8x256xf32>
    %211 = arith.mulf %10, %210 : vector<8x256xf32>
    %212 = vector.extract_strided_slice %5 {offsets = [0, 37], sizes = [8, 1], strides = [1, 1]} : vector<8x128xf32> to vector<8x1xf32>
    %213 = vector.broadcast %212 : vector<8x1xf32> to vector<8x256xf32>
    %214 = arith.mulf %15, %213 : vector<8x256xf32>
    %215 = arith.addf %211, %214 : vector<8x256xf32>
    %216 = vector.extract_strided_slice %5 {offsets = [0, 38], sizes = [8, 1], strides = [1, 1]} : vector<8x128xf32> to vector<8x1xf32>
    %217 = vector.broadcast %216 : vector<8x1xf32> to vector<8x256xf32>
    %218 = arith.mulf %20, %217 : vector<8x256xf32>
    %219 = arith.addf %215, %218 : vector<8x256xf32>
    %220 = vector.extract_strided_slice %5 {offsets = [0, 39], sizes = [8, 1], strides = [1, 1]} : vector<8x128xf32> to vector<8x1xf32>
    %221 = vector.broadcast %220 : vector<8x1xf32> to vector<8x256xf32>
    %222 = arith.mulf %25, %221 : vector<8x256xf32>
    %223 = arith.addf %219, %222 : vector<8x256xf32>
    %224 = vector.extract_strided_slice %5 {offsets = [0, 40], sizes = [8, 1], strides = [1, 1]} : vector<8x128xf32> to vector<8x1xf32>
    %225 = vector.broadcast %224 : vector<8x1xf32> to vector<8x256xf32>
    %226 = arith.mulf %0, %225 : vector<8x256xf32>
    %227 = arith.addf %223, %226 : vector<8x256xf32>
    %228 = vector.extract_strided_slice %5 {offsets = [0, 41], sizes = [8, 1], strides = [1, 1]} : vector<8x128xf32> to vector<8x1xf32>
    %229 = vector.broadcast %228 : vector<8x1xf32> to vector<8x256xf32>
    %230 = arith.mulf %30, %229 : vector<8x256xf32>
    %231 = arith.addf %227, %230 : vector<8x256xf32>
    %232 = vector.extract_strided_slice %5 {offsets = [0, 42], sizes = [8, 1], strides = [1, 1]} : vector<8x128xf32> to vector<8x1xf32>
    %233 = vector.broadcast %232 : vector<8x1xf32> to vector<8x256xf32>
    %234 = arith.mulf %35, %233 : vector<8x256xf32>
    %235 = arith.addf %231, %234 : vector<8x256xf32>
    %236 = vector.extract_strided_slice %5 {offsets = [0, 43], sizes = [8, 1], strides = [1, 1]} : vector<8x128xf32> to vector<8x1xf32>
    %237 = vector.broadcast %236 : vector<8x1xf32> to vector<8x256xf32>
    %238 = arith.mulf %40, %237 : vector<8x256xf32>
    %239 = arith.addf %235, %238 : vector<8x256xf32>
    %240 = vector.extract_strided_slice %5 {offsets = [0, 44], sizes = [8, 1], strides = [1, 1]} : vector<8x128xf32> to vector<8x1xf32>
    %241 = vector.broadcast %240 : vector<8x1xf32> to vector<8x256xf32>
    %242 = arith.mulf %45, %241 : vector<8x256xf32>
    %243 = arith.addf %239, %242 : vector<8x256xf32>
    %244 = arith.addf %208, %243 : vector<8x256xf32>
    %245 = vector.extract_strided_slice %5 {offsets = [0, 45], sizes = [8, 1], strides = [1, 1]} : vector<8x128xf32> to vector<8x1xf32>
    %246 = vector.broadcast %245 : vector<8x1xf32> to vector<8x256xf32>
    %247 = arith.mulf %10, %246 : vector<8x256xf32>
    %248 = vector.extract_strided_slice %5 {offsets = [0, 46], sizes = [8, 1], strides = [1, 1]} : vector<8x128xf32> to vector<8x1xf32>
    %249 = vector.broadcast %248 : vector<8x1xf32> to vector<8x256xf32>
    %250 = arith.mulf %15, %249 : vector<8x256xf32>
    %251 = arith.addf %247, %250 : vector<8x256xf32>
    %252 = vector.extract_strided_slice %5 {offsets = [0, 47], sizes = [8, 1], strides = [1, 1]} : vector<8x128xf32> to vector<8x1xf32>
    %253 = vector.broadcast %252 : vector<8x1xf32> to vector<8x256xf32>
    %254 = arith.mulf %20, %253 : vector<8x256xf32>
    %255 = arith.addf %251, %254 : vector<8x256xf32>
    %256 = vector.extract_strided_slice %5 {offsets = [0, 48], sizes = [8, 1], strides = [1, 1]} : vector<8x128xf32> to vector<8x1xf32>
    %257 = vector.broadcast %256 : vector<8x1xf32> to vector<8x256xf32>
    %258 = arith.mulf %25, %257 : vector<8x256xf32>
    %259 = arith.addf %255, %258 : vector<8x256xf32>
    %260 = vector.extract_strided_slice %5 {offsets = [0, 49], sizes = [8, 1], strides = [1, 1]} : vector<8x128xf32> to vector<8x1xf32>
    %261 = vector.broadcast %260 : vector<8x1xf32> to vector<8x256xf32>
    %262 = arith.mulf %0, %261 : vector<8x256xf32>
    %263 = arith.addf %259, %262 : vector<8x256xf32>
    %264 = vector.extract_strided_slice %5 {offsets = [0, 50], sizes = [8, 1], strides = [1, 1]} : vector<8x128xf32> to vector<8x1xf32>
    %265 = vector.broadcast %264 : vector<8x1xf32> to vector<8x256xf32>
    %266 = arith.mulf %30, %265 : vector<8x256xf32>
    %267 = arith.addf %263, %266 : vector<8x256xf32>
    %268 = vector.extract_strided_slice %5 {offsets = [0, 51], sizes = [8, 1], strides = [1, 1]} : vector<8x128xf32> to vector<8x1xf32>
    %269 = vector.broadcast %268 : vector<8x1xf32> to vector<8x256xf32>
    %270 = arith.mulf %35, %269 : vector<8x256xf32>
    %271 = arith.addf %267, %270 : vector<8x256xf32>
    %272 = vector.extract_strided_slice %5 {offsets = [0, 52], sizes = [8, 1], strides = [1, 1]} : vector<8x128xf32> to vector<8x1xf32>
    %273 = vector.broadcast %272 : vector<8x1xf32> to vector<8x256xf32>
    %274 = arith.mulf %40, %273 : vector<8x256xf32>
    %275 = arith.addf %271, %274 : vector<8x256xf32>
    %276 = vector.extract_strided_slice %5 {offsets = [0, 53], sizes = [8, 1], strides = [1, 1]} : vector<8x128xf32> to vector<8x1xf32>
    %277 = vector.broadcast %276 : vector<8x1xf32> to vector<8x256xf32>
    %278 = arith.mulf %45, %277 : vector<8x256xf32>
    %279 = arith.addf %275, %278 : vector<8x256xf32>
    %c240_i32 = arith.constant 240 : i32
    %280 = tpu.dynamic_rotate %279 by %c240_i32 dim 1 : vector<8x256xf32>, i32 -> vector<8x256xf32>
    %c240_i32_24 = arith.constant 240 : i32
    %281 = vector.broadcast %c240_i32_24 : i32 to vector<8x256xi32>
    %282 = arith.cmpi slt, %1, %281 : vector<8x256xi32>
    %cst_25 = arith.constant 0.000000e+00 : f32
    %283 = vector.broadcast %cst_25 : f32 to vector<8x256xf32>
    %284 = arith.select %282, %280, %283 : vector<8x256xi1>, vector<8x256xf32>
    %285 = arith.addf %244, %284 : vector<8x256xf32>
    %286 = vector.extract_strided_slice %5 {offsets = [0, 54], sizes = [8, 1], strides = [1, 1]} : vector<8x128xf32> to vector<8x1xf32>
    %287 = vector.broadcast %286 : vector<8x1xf32> to vector<8x256xf32>
    %288 = arith.mulf %10, %287 : vector<8x256xf32>
    %289 = vector.extract_strided_slice %5 {offsets = [0, 55], sizes = [8, 1], strides = [1, 1]} : vector<8x128xf32> to vector<8x1xf32>
    %290 = vector.broadcast %289 : vector<8x1xf32> to vector<8x256xf32>
    %291 = arith.mulf %15, %290 : vector<8x256xf32>
    %292 = arith.addf %288, %291 : vector<8x256xf32>
    %293 = vector.extract_strided_slice %5 {offsets = [0, 56], sizes = [8, 1], strides = [1, 1]} : vector<8x128xf32> to vector<8x1xf32>
    %294 = vector.broadcast %293 : vector<8x1xf32> to vector<8x256xf32>
    %295 = arith.mulf %20, %294 : vector<8x256xf32>
    %296 = arith.addf %292, %295 : vector<8x256xf32>
    %297 = vector.extract_strided_slice %5 {offsets = [0, 57], sizes = [8, 1], strides = [1, 1]} : vector<8x128xf32> to vector<8x1xf32>
    %298 = vector.broadcast %297 : vector<8x1xf32> to vector<8x256xf32>
    %299 = arith.mulf %25, %298 : vector<8x256xf32>
    %300 = arith.addf %296, %299 : vector<8x256xf32>
    %301 = vector.extract_strided_slice %5 {offsets = [0, 58], sizes = [8, 1], strides = [1, 1]} : vector<8x128xf32> to vector<8x1xf32>
    %302 = vector.broadcast %301 : vector<8x1xf32> to vector<8x256xf32>
    %303 = arith.mulf %0, %302 : vector<8x256xf32>
    %304 = arith.addf %300, %303 : vector<8x256xf32>
    %305 = vector.extract_strided_slice %5 {offsets = [0, 59], sizes = [8, 1], strides = [1, 1]} : vector<8x128xf32> to vector<8x1xf32>
    %306 = vector.broadcast %305 : vector<8x1xf32> to vector<8x256xf32>
    %307 = arith.mulf %30, %306 : vector<8x256xf32>
    %308 = arith.addf %304, %307 : vector<8x256xf32>
    %309 = vector.extract_strided_slice %5 {offsets = [0, 60], sizes = [8, 1], strides = [1, 1]} : vector<8x128xf32> to vector<8x1xf32>
    %310 = vector.broadcast %309 : vector<8x1xf32> to vector<8x256xf32>
    %311 = arith.mulf %35, %310 : vector<8x256xf32>
    %312 = arith.addf %308, %311 : vector<8x256xf32>
    %313 = vector.extract_strided_slice %5 {offsets = [0, 61], sizes = [8, 1], strides = [1, 1]} : vector<8x128xf32> to vector<8x1xf32>
    %314 = vector.broadcast %313 : vector<8x1xf32> to vector<8x256xf32>
    %315 = arith.mulf %40, %314 : vector<8x256xf32>
    %316 = arith.addf %312, %315 : vector<8x256xf32>
    %317 = vector.extract_strided_slice %5 {offsets = [0, 62], sizes = [8, 1], strides = [1, 1]} : vector<8x128xf32> to vector<8x1xf32>
    %318 = vector.broadcast %317 : vector<8x1xf32> to vector<8x256xf32>
    %319 = arith.mulf %45, %318 : vector<8x256xf32>
    %320 = arith.addf %316, %319 : vector<8x256xf32>
    %c224_i32 = arith.constant 224 : i32
    %321 = tpu.dynamic_rotate %320 by %c224_i32 dim 1 : vector<8x256xf32>, i32 -> vector<8x256xf32>
    %c224_i32_26 = arith.constant 224 : i32
    %322 = vector.broadcast %c224_i32_26 : i32 to vector<8x256xi32>
    %323 = arith.cmpi slt, %1, %322 : vector<8x256xi32>
    %cst_27 = arith.constant 0.000000e+00 : f32
    %324 = vector.broadcast %cst_27 : f32 to vector<8x256xf32>
    %325 = arith.select %323, %321, %324 : vector<8x256xi1>, vector<8x256xf32>
    %326 = arith.addf %285, %325 : vector<8x256xf32>
    %327 = vector.extract_strided_slice %5 {offsets = [0, 63], sizes = [8, 1], strides = [1, 1]} : vector<8x128xf32> to vector<8x1xf32>
    %328 = vector.broadcast %327 : vector<8x1xf32> to vector<8x256xf32>
    %329 = arith.mulf %10, %328 : vector<8x256xf32>
    %330 = vector.extract_strided_slice %5 {offsets = [0, 64], sizes = [8, 1], strides = [1, 1]} : vector<8x128xf32> to vector<8x1xf32>
    %331 = vector.broadcast %330 : vector<8x1xf32> to vector<8x256xf32>
    %332 = arith.mulf %15, %331 : vector<8x256xf32>
    %333 = arith.addf %329, %332 : vector<8x256xf32>
    %334 = vector.extract_strided_slice %5 {offsets = [0, 65], sizes = [8, 1], strides = [1, 1]} : vector<8x128xf32> to vector<8x1xf32>
    %335 = vector.broadcast %334 : vector<8x1xf32> to vector<8x256xf32>
    %336 = arith.mulf %20, %335 : vector<8x256xf32>
    %337 = arith.addf %333, %336 : vector<8x256xf32>
    %338 = vector.extract_strided_slice %5 {offsets = [0, 66], sizes = [8, 1], strides = [1, 1]} : vector<8x128xf32> to vector<8x1xf32>
    %339 = vector.broadcast %338 : vector<8x1xf32> to vector<8x256xf32>
    %340 = arith.mulf %25, %339 : vector<8x256xf32>
    %341 = arith.addf %337, %340 : vector<8x256xf32>
    %342 = vector.extract_strided_slice %5 {offsets = [0, 67], sizes = [8, 1], strides = [1, 1]} : vector<8x128xf32> to vector<8x1xf32>
    %343 = vector.broadcast %342 : vector<8x1xf32> to vector<8x256xf32>
    %344 = arith.mulf %0, %343 : vector<8x256xf32>
    %345 = arith.addf %341, %344 : vector<8x256xf32>
    %346 = vector.extract_strided_slice %5 {offsets = [0, 68], sizes = [8, 1], strides = [1, 1]} : vector<8x128xf32> to vector<8x1xf32>
    %347 = vector.broadcast %346 : vector<8x1xf32> to vector<8x256xf32>
    %348 = arith.mulf %30, %347 : vector<8x256xf32>
    %349 = arith.addf %345, %348 : vector<8x256xf32>
    %350 = vector.extract_strided_slice %5 {offsets = [0, 69], sizes = [8, 1], strides = [1, 1]} : vector<8x128xf32> to vector<8x1xf32>
    %351 = vector.broadcast %350 : vector<8x1xf32> to vector<8x256xf32>
    %352 = arith.mulf %35, %351 : vector<8x256xf32>
    %353 = arith.addf %349, %352 : vector<8x256xf32>
    %354 = vector.extract_strided_slice %5 {offsets = [0, 70], sizes = [8, 1], strides = [1, 1]} : vector<8x128xf32> to vector<8x1xf32>
    %355 = vector.broadcast %354 : vector<8x1xf32> to vector<8x256xf32>
    %356 = arith.mulf %40, %355 : vector<8x256xf32>
    %357 = arith.addf %353, %356 : vector<8x256xf32>
    %358 = vector.extract_strided_slice %5 {offsets = [0, 71], sizes = [8, 1], strides = [1, 1]} : vector<8x128xf32> to vector<8x1xf32>
    %359 = vector.broadcast %358 : vector<8x1xf32> to vector<8x256xf32>
    %360 = arith.mulf %45, %359 : vector<8x256xf32>
    %361 = arith.addf %357, %360 : vector<8x256xf32>
    %c208_i32 = arith.constant 208 : i32
    %362 = tpu.dynamic_rotate %361 by %c208_i32 dim 1 : vector<8x256xf32>, i32 -> vector<8x256xf32>
    %c208_i32_28 = arith.constant 208 : i32
    %363 = vector.broadcast %c208_i32_28 : i32 to vector<8x256xi32>
    %364 = arith.cmpi slt, %1, %363 : vector<8x256xi32>
    %cst_29 = arith.constant 0.000000e+00 : f32
    %365 = vector.broadcast %cst_29 : f32 to vector<8x256xf32>
    %366 = arith.select %364, %362, %365 : vector<8x256xi1>, vector<8x256xf32>
    %367 = arith.addf %326, %366 : vector<8x256xf32>
    %368 = vector.extract_strided_slice %5 {offsets = [0, 72], sizes = [8, 1], strides = [1, 1]} : vector<8x128xf32> to vector<8x1xf32>
    %369 = vector.broadcast %368 : vector<8x1xf32> to vector<8x256xf32>
    %370 = arith.mulf %10, %369 : vector<8x256xf32>
    %371 = vector.extract_strided_slice %5 {offsets = [0, 73], sizes = [8, 1], strides = [1, 1]} : vector<8x128xf32> to vector<8x1xf32>
    %372 = vector.broadcast %371 : vector<8x1xf32> to vector<8x256xf32>
    %373 = arith.mulf %15, %372 : vector<8x256xf32>
    %374 = arith.addf %370, %373 : vector<8x256xf32>
    %375 = vector.extract_strided_slice %5 {offsets = [0, 74], sizes = [8, 1], strides = [1, 1]} : vector<8x128xf32> to vector<8x1xf32>
    %376 = vector.broadcast %375 : vector<8x1xf32> to vector<8x256xf32>
    %377 = arith.mulf %20, %376 : vector<8x256xf32>
    %378 = arith.addf %374, %377 : vector<8x256xf32>
    %379 = vector.extract_strided_slice %5 {offsets = [0, 75], sizes = [8, 1], strides = [1, 1]} : vector<8x128xf32> to vector<8x1xf32>
    %380 = vector.broadcast %379 : vector<8x1xf32> to vector<8x256xf32>
    %381 = arith.mulf %25, %380 : vector<8x256xf32>
    %382 = arith.addf %378, %381 : vector<8x256xf32>
    %383 = vector.extract_strided_slice %5 {offsets = [0, 76], sizes = [8, 1], strides = [1, 1]} : vector<8x128xf32> to vector<8x1xf32>
    %384 = vector.broadcast %383 : vector<8x1xf32> to vector<8x256xf32>
    %385 = arith.mulf %0, %384 : vector<8x256xf32>
    %386 = arith.addf %382, %385 : vector<8x256xf32>
    %387 = vector.extract_strided_slice %5 {offsets = [0, 77], sizes = [8, 1], strides = [1, 1]} : vector<8x128xf32> to vector<8x1xf32>
    %388 = vector.broadcast %387 : vector<8x1xf32> to vector<8x256xf32>
    %389 = arith.mulf %30, %388 : vector<8x256xf32>
    %390 = arith.addf %386, %389 : vector<8x256xf32>
    %391 = vector.extract_strided_slice %5 {offsets = [0, 78], sizes = [8, 1], strides = [1, 1]} : vector<8x128xf32> to vector<8x1xf32>
    %392 = vector.broadcast %391 : vector<8x1xf32> to vector<8x256xf32>
    %393 = arith.mulf %35, %392 : vector<8x256xf32>
    %394 = arith.addf %390, %393 : vector<8x256xf32>
    %395 = vector.extract_strided_slice %5 {offsets = [0, 79], sizes = [8, 1], strides = [1, 1]} : vector<8x128xf32> to vector<8x1xf32>
    %396 = vector.broadcast %395 : vector<8x1xf32> to vector<8x256xf32>
    %397 = arith.mulf %40, %396 : vector<8x256xf32>
    %398 = arith.addf %394, %397 : vector<8x256xf32>
    %399 = vector.extract_strided_slice %5 {offsets = [0, 80], sizes = [8, 1], strides = [1, 1]} : vector<8x128xf32> to vector<8x1xf32>
    %400 = vector.broadcast %399 : vector<8x1xf32> to vector<8x256xf32>
    %401 = arith.mulf %45, %400 : vector<8x256xf32>
    %402 = arith.addf %398, %401 : vector<8x256xf32>
    %c192_i32 = arith.constant 192 : i32
    %403 = tpu.dynamic_rotate %402 by %c192_i32 dim 1 : vector<8x256xf32>, i32 -> vector<8x256xf32>
    %c192_i32_30 = arith.constant 192 : i32
    %404 = vector.broadcast %c192_i32_30 : i32 to vector<8x256xi32>
    %405 = arith.cmpi slt, %1, %404 : vector<8x256xi32>
    %cst_31 = arith.constant 0.000000e+00 : f32
    %406 = vector.broadcast %cst_31 : f32 to vector<8x256xf32>
    %407 = arith.select %405, %403, %406 : vector<8x256xi1>, vector<8x256xf32>
    %408 = arith.addf %367, %407 : vector<8x256xf32>
    %409 = vector.extract_strided_slice %5 {offsets = [0, 89], sizes = [8, 1], strides = [1, 1]} : vector<8x128xf32> to vector<8x1xf32>
    %410 = vector.extract_strided_slice %5 {offsets = [0, 81], sizes = [8, 1], strides = [1, 1]} : vector<8x128xf32> to vector<8x1xf32>
    %411 = vector.extract_strided_slice %408 {offsets = [0, 0], sizes = [1, 256], strides = [1, 1]} : vector<8x256xf32> to vector<1x256xf32>
    %412 = vector.broadcast %410 : vector<8x1xf32> to vector<8x256xf32>
    %413 = vector.broadcast %411 : vector<1x256xf32> to vector<8x256xf32>
    %414 = arith.mulf %412, %413 : vector<8x256xf32>
    %415 = vector.broadcast %409 : vector<8x1xf32> to vector<8x256xf32>
    %416 = arith.addf %415, %414 : vector<8x256xf32>
    %417 = vector.extract_strided_slice %5 {offsets = [0, 82], sizes = [8, 1], strides = [1, 1]} : vector<8x128xf32> to vector<8x1xf32>
    %418 = vector.extract_strided_slice %408 {offsets = [1, 0], sizes = [1, 256], strides = [1, 1]} : vector<8x256xf32> to vector<1x256xf32>
    %419 = vector.broadcast %417 : vector<8x1xf32> to vector<8x256xf32>
    %420 = vector.broadcast %418 : vector<1x256xf32> to vector<8x256xf32>
    %421 = arith.mulf %419, %420 : vector<8x256xf32>
    %422 = arith.addf %416, %421 : vector<8x256xf32>
    %423 = vector.extract_strided_slice %5 {offsets = [0, 83], sizes = [8, 1], strides = [1, 1]} : vector<8x128xf32> to vector<8x1xf32>
    %424 = vector.extract_strided_slice %408 {offsets = [2, 0], sizes = [1, 256], strides = [1, 1]} : vector<8x256xf32> to vector<1x256xf32>
    %425 = vector.broadcast %423 : vector<8x1xf32> to vector<8x256xf32>
    %426 = vector.broadcast %424 : vector<1x256xf32> to vector<8x256xf32>
    %427 = arith.mulf %425, %426 : vector<8x256xf32>
    %428 = arith.addf %422, %427 : vector<8x256xf32>
    %429 = vector.extract_strided_slice %5 {offsets = [0, 84], sizes = [8, 1], strides = [1, 1]} : vector<8x128xf32> to vector<8x1xf32>
    %430 = vector.extract_strided_slice %408 {offsets = [3, 0], sizes = [1, 256], strides = [1, 1]} : vector<8x256xf32> to vector<1x256xf32>
    %431 = vector.broadcast %429 : vector<8x1xf32> to vector<8x256xf32>
    %432 = vector.broadcast %430 : vector<1x256xf32> to vector<8x256xf32>
    %433 = arith.mulf %431, %432 : vector<8x256xf32>
    %434 = arith.addf %428, %433 : vector<8x256xf32>
    %435 = vector.extract_strided_slice %5 {offsets = [0, 85], sizes = [8, 1], strides = [1, 1]} : vector<8x128xf32> to vector<8x1xf32>
    %436 = vector.extract_strided_slice %408 {offsets = [4, 0], sizes = [1, 256], strides = [1, 1]} : vector<8x256xf32> to vector<1x256xf32>
    %437 = vector.broadcast %435 : vector<8x1xf32> to vector<8x256xf32>
    %438 = vector.broadcast %436 : vector<1x256xf32> to vector<8x256xf32>
    %439 = arith.mulf %437, %438 : vector<8x256xf32>
    %440 = arith.addf %434, %439 : vector<8x256xf32>
    %441 = vector.extract_strided_slice %5 {offsets = [0, 86], sizes = [8, 1], strides = [1, 1]} : vector<8x128xf32> to vector<8x1xf32>
    %442 = vector.extract_strided_slice %408 {offsets = [5, 0], sizes = [1, 256], strides = [1, 1]} : vector<8x256xf32> to vector<1x256xf32>
    %443 = vector.broadcast %441 : vector<8x1xf32> to vector<8x256xf32>
    %444 = vector.broadcast %442 : vector<1x256xf32> to vector<8x256xf32>
    %445 = arith.mulf %443, %444 : vector<8x256xf32>
    %446 = arith.addf %440, %445 : vector<8x256xf32>
    %447 = vector.extract_strided_slice %5 {offsets = [0, 87], sizes = [8, 1], strides = [1, 1]} : vector<8x128xf32> to vector<8x1xf32>
    %448 = vector.extract_strided_slice %408 {offsets = [6, 0], sizes = [1, 256], strides = [1, 1]} : vector<8x256xf32> to vector<1x256xf32>
    %449 = vector.broadcast %447 : vector<8x1xf32> to vector<8x256xf32>
    %450 = vector.broadcast %448 : vector<1x256xf32> to vector<8x256xf32>
    %451 = arith.mulf %449, %450 : vector<8x256xf32>
    %452 = arith.addf %446, %451 : vector<8x256xf32>
    %453 = vector.extract_strided_slice %5 {offsets = [0, 88], sizes = [8, 1], strides = [1, 1]} : vector<8x128xf32> to vector<8x1xf32>
    %454 = vector.extract_strided_slice %408 {offsets = [7, 0], sizes = [1, 256], strides = [1, 1]} : vector<8x256xf32> to vector<1x256xf32>
    %455 = vector.broadcast %453 : vector<8x1xf32> to vector<8x256xf32>
    %456 = vector.broadcast %454 : vector<1x256xf32> to vector<8x256xf32>
    %457 = arith.mulf %455, %456 : vector<8x256xf32>
    %458 = arith.addf %452, %457 : vector<8x256xf32>
    %cst_32 = arith.constant 0.000000e+00 : f32
    %459 = vector.broadcast %cst_32 : f32 to vector<8x256xf32>
    %460 = arith.maximumf %458, %459 : vector<8x256xf32>
    %c1 = arith.constant 1 : index
    %c0_33 = arith.constant 0 : index
    %c0_34 = arith.constant 0 : index
    %461 = vector.load %arg2[%c1, %c0_33, %c0_34] : memref<2x8x128xf32, #tpu.memory_space<vmem>>, vector<1x8x128xf32>
    %462 = vector.shape_cast %461 : vector<1x8x128xf32> to vector<8x128xf32>
    %c4_i32_35 = arith.constant 4 : i32
    %463 = tpu.dynamic_rotate %460 by %c4_i32_35 dim 1 : vector<8x256xf32>, i32 -> vector<8x256xf32>
    %c4_i32_36 = arith.constant 4 : i32
    %464 = vector.broadcast %c4_i32_36 : i32 to vector<8x256xi32>
    %465 = arith.cmpi sge, %3, %464 : vector<8x256xi32>
    %cst_37 = arith.constant 0.000000e+00 : f32
    %466 = vector.broadcast %cst_37 : f32 to vector<8x256xf32>
    %467 = arith.select %465, %463, %466 : vector<8x256xi1>, vector<8x256xf32>
    %c3_i32_38 = arith.constant 3 : i32
    %468 = tpu.dynamic_rotate %460 by %c3_i32_38 dim 1 : vector<8x256xf32>, i32 -> vector<8x256xf32>
    %c3_i32_39 = arith.constant 3 : i32
    %469 = vector.broadcast %c3_i32_39 : i32 to vector<8x256xi32>
    %470 = arith.cmpi sge, %3, %469 : vector<8x256xi32>
    %cst_40 = arith.constant 0.000000e+00 : f32
    %471 = vector.broadcast %cst_40 : f32 to vector<8x256xf32>
    %472 = arith.select %470, %468, %471 : vector<8x256xi1>, vector<8x256xf32>
    %c2_i32_41 = arith.constant 2 : i32
    %473 = tpu.dynamic_rotate %460 by %c2_i32_41 dim 1 : vector<8x256xf32>, i32 -> vector<8x256xf32>
    %c2_i32_42 = arith.constant 2 : i32
    %474 = vector.broadcast %c2_i32_42 : i32 to vector<8x256xi32>
    %475 = arith.cmpi sge, %3, %474 : vector<8x256xi32>
    %cst_43 = arith.constant 0.000000e+00 : f32
    %476 = vector.broadcast %cst_43 : f32 to vector<8x256xf32>
    %477 = arith.select %475, %473, %476 : vector<8x256xi1>, vector<8x256xf32>
    %c1_i32_44 = arith.constant 1 : i32
    %478 = tpu.dynamic_rotate %460 by %c1_i32_44 dim 1 : vector<8x256xf32>, i32 -> vector<8x256xf32>
    %c1_i32_45 = arith.constant 1 : i32
    %479 = vector.broadcast %c1_i32_45 : i32 to vector<8x256xi32>
    %480 = arith.cmpi sge, %3, %479 : vector<8x256xi32>
    %cst_46 = arith.constant 0.000000e+00 : f32
    %481 = vector.broadcast %cst_46 : f32 to vector<8x256xf32>
    %482 = arith.select %480, %478, %481 : vector<8x256xi1>, vector<8x256xf32>
    %c255_i32_47 = arith.constant 255 : i32
    %483 = tpu.dynamic_rotate %460 by %c255_i32_47 dim 1 : vector<8x256xf32>, i32 -> vector<8x256xf32>
    %c15_i32_48 = arith.constant 15 : i32
    %484 = vector.broadcast %c15_i32_48 : i32 to vector<8x256xi32>
    %485 = arith.cmpi slt, %3, %484 : vector<8x256xi32>
    %cst_49 = arith.constant 0.000000e+00 : f32
    %486 = vector.broadcast %cst_49 : f32 to vector<8x256xf32>
    %487 = arith.select %485, %483, %486 : vector<8x256xi1>, vector<8x256xf32>
    %c254_i32_50 = arith.constant 254 : i32
    %488 = tpu.dynamic_rotate %460 by %c254_i32_50 dim 1 : vector<8x256xf32>, i32 -> vector<8x256xf32>
    %c14_i32_51 = arith.constant 14 : i32
    %489 = vector.broadcast %c14_i32_51 : i32 to vector<8x256xi32>
    %490 = arith.cmpi slt, %3, %489 : vector<8x256xi32>
    %cst_52 = arith.constant 0.000000e+00 : f32
    %491 = vector.broadcast %cst_52 : f32 to vector<8x256xf32>
    %492 = arith.select %490, %488, %491 : vector<8x256xi1>, vector<8x256xf32>
    %c253_i32_53 = arith.constant 253 : i32
    %493 = tpu.dynamic_rotate %460 by %c253_i32_53 dim 1 : vector<8x256xf32>, i32 -> vector<8x256xf32>
    %c13_i32_54 = arith.constant 13 : i32
    %494 = vector.broadcast %c13_i32_54 : i32 to vector<8x256xi32>
    %495 = arith.cmpi slt, %3, %494 : vector<8x256xi32>
    %cst_55 = arith.constant 0.000000e+00 : f32
    %496 = vector.broadcast %cst_55 : f32 to vector<8x256xf32>
    %497 = arith.select %495, %493, %496 : vector<8x256xi1>, vector<8x256xf32>
    %c252_i32_56 = arith.constant 252 : i32
    %498 = tpu.dynamic_rotate %460 by %c252_i32_56 dim 1 : vector<8x256xf32>, i32 -> vector<8x256xf32>
    %c12_i32_57 = arith.constant 12 : i32
    %499 = vector.broadcast %c12_i32_57 : i32 to vector<8x256xi32>
    %500 = arith.cmpi slt, %3, %499 : vector<8x256xi32>
    %cst_58 = arith.constant 0.000000e+00 : f32
    %501 = vector.broadcast %cst_58 : f32 to vector<8x256xf32>
    %502 = arith.select %500, %498, %501 : vector<8x256xi1>, vector<8x256xf32>
    %503 = vector.extract_strided_slice %462 {offsets = [0, 0], sizes = [8, 1], strides = [1, 1]} : vector<8x128xf32> to vector<8x1xf32>
    %504 = vector.broadcast %503 : vector<8x1xf32> to vector<8x256xf32>
    %505 = arith.mulf %467, %504 : vector<8x256xf32>
    %506 = vector.extract_strided_slice %462 {offsets = [0, 1], sizes = [8, 1], strides = [1, 1]} : vector<8x128xf32> to vector<8x1xf32>
    %507 = vector.broadcast %506 : vector<8x1xf32> to vector<8x256xf32>
    %508 = arith.mulf %472, %507 : vector<8x256xf32>
    %509 = arith.addf %505, %508 : vector<8x256xf32>
    %510 = vector.extract_strided_slice %462 {offsets = [0, 2], sizes = [8, 1], strides = [1, 1]} : vector<8x128xf32> to vector<8x1xf32>
    %511 = vector.broadcast %510 : vector<8x1xf32> to vector<8x256xf32>
    %512 = arith.mulf %477, %511 : vector<8x256xf32>
    %513 = arith.addf %509, %512 : vector<8x256xf32>
    %514 = vector.extract_strided_slice %462 {offsets = [0, 3], sizes = [8, 1], strides = [1, 1]} : vector<8x128xf32> to vector<8x1xf32>
    %515 = vector.broadcast %514 : vector<8x1xf32> to vector<8x256xf32>
    %516 = arith.mulf %482, %515 : vector<8x256xf32>
    %517 = arith.addf %513, %516 : vector<8x256xf32>
    %518 = vector.extract_strided_slice %462 {offsets = [0, 4], sizes = [8, 1], strides = [1, 1]} : vector<8x128xf32> to vector<8x1xf32>
    %519 = vector.broadcast %518 : vector<8x1xf32> to vector<8x256xf32>
    %520 = arith.mulf %460, %519 : vector<8x256xf32>
    %521 = arith.addf %517, %520 : vector<8x256xf32>
    %522 = vector.extract_strided_slice %462 {offsets = [0, 5], sizes = [8, 1], strides = [1, 1]} : vector<8x128xf32> to vector<8x1xf32>
    %523 = vector.broadcast %522 : vector<8x1xf32> to vector<8x256xf32>
    %524 = arith.mulf %487, %523 : vector<8x256xf32>
    %525 = arith.addf %521, %524 : vector<8x256xf32>
    %526 = vector.extract_strided_slice %462 {offsets = [0, 6], sizes = [8, 1], strides = [1, 1]} : vector<8x128xf32> to vector<8x1xf32>
    %527 = vector.broadcast %526 : vector<8x1xf32> to vector<8x256xf32>
    %528 = arith.mulf %492, %527 : vector<8x256xf32>
    %529 = arith.addf %525, %528 : vector<8x256xf32>
    %530 = vector.extract_strided_slice %462 {offsets = [0, 7], sizes = [8, 1], strides = [1, 1]} : vector<8x128xf32> to vector<8x1xf32>
    %531 = vector.broadcast %530 : vector<8x1xf32> to vector<8x256xf32>
    %532 = arith.mulf %497, %531 : vector<8x256xf32>
    %533 = arith.addf %529, %532 : vector<8x256xf32>
    %534 = vector.extract_strided_slice %462 {offsets = [0, 8], sizes = [8, 1], strides = [1, 1]} : vector<8x128xf32> to vector<8x1xf32>
    %535 = vector.broadcast %534 : vector<8x1xf32> to vector<8x256xf32>
    %536 = arith.mulf %502, %535 : vector<8x256xf32>
    %537 = arith.addf %533, %536 : vector<8x256xf32>
    %c64_i32_59 = arith.constant 64 : i32
    %538 = tpu.dynamic_rotate %537 by %c64_i32_59 dim 1 : vector<8x256xf32>, i32 -> vector<8x256xf32>
    %c64_i32_60 = arith.constant 64 : i32
    %539 = vector.broadcast %c64_i32_60 : i32 to vector<8x256xi32>
    %540 = arith.cmpi sge, %1, %539 : vector<8x256xi32>
    %cst_61 = arith.constant 0.000000e+00 : f32
    %541 = vector.broadcast %cst_61 : f32 to vector<8x256xf32>
    %542 = arith.select %540, %538, %541 : vector<8x256xi1>, vector<8x256xf32>
    %543 = vector.extract_strided_slice %462 {offsets = [0, 9], sizes = [8, 1], strides = [1, 1]} : vector<8x128xf32> to vector<8x1xf32>
    %544 = vector.broadcast %543 : vector<8x1xf32> to vector<8x256xf32>
    %545 = arith.mulf %467, %544 : vector<8x256xf32>
    %546 = vector.extract_strided_slice %462 {offsets = [0, 10], sizes = [8, 1], strides = [1, 1]} : vector<8x128xf32> to vector<8x1xf32>
    %547 = vector.broadcast %546 : vector<8x1xf32> to vector<8x256xf32>
    %548 = arith.mulf %472, %547 : vector<8x256xf32>
    %549 = arith.addf %545, %548 : vector<8x256xf32>
    %550 = vector.extract_strided_slice %462 {offsets = [0, 11], sizes = [8, 1], strides = [1, 1]} : vector<8x128xf32> to vector<8x1xf32>
    %551 = vector.broadcast %550 : vector<8x1xf32> to vector<8x256xf32>
    %552 = arith.mulf %477, %551 : vector<8x256xf32>
    %553 = arith.addf %549, %552 : vector<8x256xf32>
    %554 = vector.extract_strided_slice %462 {offsets = [0, 12], sizes = [8, 1], strides = [1, 1]} : vector<8x128xf32> to vector<8x1xf32>
    %555 = vector.broadcast %554 : vector<8x1xf32> to vector<8x256xf32>
    %556 = arith.mulf %482, %555 : vector<8x256xf32>
    %557 = arith.addf %553, %556 : vector<8x256xf32>
    %558 = vector.extract_strided_slice %462 {offsets = [0, 13], sizes = [8, 1], strides = [1, 1]} : vector<8x128xf32> to vector<8x1xf32>
    %559 = vector.broadcast %558 : vector<8x1xf32> to vector<8x256xf32>
    %560 = arith.mulf %460, %559 : vector<8x256xf32>
    %561 = arith.addf %557, %560 : vector<8x256xf32>
    %562 = vector.extract_strided_slice %462 {offsets = [0, 14], sizes = [8, 1], strides = [1, 1]} : vector<8x128xf32> to vector<8x1xf32>
    %563 = vector.broadcast %562 : vector<8x1xf32> to vector<8x256xf32>
    %564 = arith.mulf %487, %563 : vector<8x256xf32>
    %565 = arith.addf %561, %564 : vector<8x256xf32>
    %566 = vector.extract_strided_slice %462 {offsets = [0, 15], sizes = [8, 1], strides = [1, 1]} : vector<8x128xf32> to vector<8x1xf32>
    %567 = vector.broadcast %566 : vector<8x1xf32> to vector<8x256xf32>
    %568 = arith.mulf %492, %567 : vector<8x256xf32>
    %569 = arith.addf %565, %568 : vector<8x256xf32>
    %570 = vector.extract_strided_slice %462 {offsets = [0, 16], sizes = [8, 1], strides = [1, 1]} : vector<8x128xf32> to vector<8x1xf32>
    %571 = vector.broadcast %570 : vector<8x1xf32> to vector<8x256xf32>
    %572 = arith.mulf %497, %571 : vector<8x256xf32>
    %573 = arith.addf %569, %572 : vector<8x256xf32>
    %574 = vector.extract_strided_slice %462 {offsets = [0, 17], sizes = [8, 1], strides = [1, 1]} : vector<8x128xf32> to vector<8x1xf32>
    %575 = vector.broadcast %574 : vector<8x1xf32> to vector<8x256xf32>
    %576 = arith.mulf %502, %575 : vector<8x256xf32>
    %577 = arith.addf %573, %576 : vector<8x256xf32>
    %c48_i32_62 = arith.constant 48 : i32
    %578 = tpu.dynamic_rotate %577 by %c48_i32_62 dim 1 : vector<8x256xf32>, i32 -> vector<8x256xf32>
    %c48_i32_63 = arith.constant 48 : i32
    %579 = vector.broadcast %c48_i32_63 : i32 to vector<8x256xi32>
    %580 = arith.cmpi sge, %1, %579 : vector<8x256xi32>
    %cst_64 = arith.constant 0.000000e+00 : f32
    %581 = vector.broadcast %cst_64 : f32 to vector<8x256xf32>
    %582 = arith.select %580, %578, %581 : vector<8x256xi1>, vector<8x256xf32>
    %583 = arith.addf %542, %582 : vector<8x256xf32>
    %584 = vector.extract_strided_slice %462 {offsets = [0, 18], sizes = [8, 1], strides = [1, 1]} : vector<8x128xf32> to vector<8x1xf32>
    %585 = vector.broadcast %584 : vector<8x1xf32> to vector<8x256xf32>
    %586 = arith.mulf %467, %585 : vector<8x256xf32>
    %587 = vector.extract_strided_slice %462 {offsets = [0, 19], sizes = [8, 1], strides = [1, 1]} : vector<8x128xf32> to vector<8x1xf32>
    %588 = vector.broadcast %587 : vector<8x1xf32> to vector<8x256xf32>
    %589 = arith.mulf %472, %588 : vector<8x256xf32>
    %590 = arith.addf %586, %589 : vector<8x256xf32>
    %591 = vector.extract_strided_slice %462 {offsets = [0, 20], sizes = [8, 1], strides = [1, 1]} : vector<8x128xf32> to vector<8x1xf32>
    %592 = vector.broadcast %591 : vector<8x1xf32> to vector<8x256xf32>
    %593 = arith.mulf %477, %592 : vector<8x256xf32>
    %594 = arith.addf %590, %593 : vector<8x256xf32>
    %595 = vector.extract_strided_slice %462 {offsets = [0, 21], sizes = [8, 1], strides = [1, 1]} : vector<8x128xf32> to vector<8x1xf32>
    %596 = vector.broadcast %595 : vector<8x1xf32> to vector<8x256xf32>
    %597 = arith.mulf %482, %596 : vector<8x256xf32>
    %598 = arith.addf %594, %597 : vector<8x256xf32>
    %599 = vector.extract_strided_slice %462 {offsets = [0, 22], sizes = [8, 1], strides = [1, 1]} : vector<8x128xf32> to vector<8x1xf32>
    %600 = vector.broadcast %599 : vector<8x1xf32> to vector<8x256xf32>
    %601 = arith.mulf %460, %600 : vector<8x256xf32>
    %602 = arith.addf %598, %601 : vector<8x256xf32>
    %603 = vector.extract_strided_slice %462 {offsets = [0, 23], sizes = [8, 1], strides = [1, 1]} : vector<8x128xf32> to vector<8x1xf32>
    %604 = vector.broadcast %603 : vector<8x1xf32> to vector<8x256xf32>
    %605 = arith.mulf %487, %604 : vector<8x256xf32>
    %606 = arith.addf %602, %605 : vector<8x256xf32>
    %607 = vector.extract_strided_slice %462 {offsets = [0, 24], sizes = [8, 1], strides = [1, 1]} : vector<8x128xf32> to vector<8x1xf32>
    %608 = vector.broadcast %607 : vector<8x1xf32> to vector<8x256xf32>
    %609 = arith.mulf %492, %608 : vector<8x256xf32>
    %610 = arith.addf %606, %609 : vector<8x256xf32>
    %611 = vector.extract_strided_slice %462 {offsets = [0, 25], sizes = [8, 1], strides = [1, 1]} : vector<8x128xf32> to vector<8x1xf32>
    %612 = vector.broadcast %611 : vector<8x1xf32> to vector<8x256xf32>
    %613 = arith.mulf %497, %612 : vector<8x256xf32>
    %614 = arith.addf %610, %613 : vector<8x256xf32>
    %615 = vector.extract_strided_slice %462 {offsets = [0, 26], sizes = [8, 1], strides = [1, 1]} : vector<8x128xf32> to vector<8x1xf32>
    %616 = vector.broadcast %615 : vector<8x1xf32> to vector<8x256xf32>
    %617 = arith.mulf %502, %616 : vector<8x256xf32>
    %618 = arith.addf %614, %617 : vector<8x256xf32>
    %c32_i32_65 = arith.constant 32 : i32
    %619 = tpu.dynamic_rotate %618 by %c32_i32_65 dim 1 : vector<8x256xf32>, i32 -> vector<8x256xf32>
    %c32_i32_66 = arith.constant 32 : i32
    %620 = vector.broadcast %c32_i32_66 : i32 to vector<8x256xi32>
    %621 = arith.cmpi sge, %1, %620 : vector<8x256xi32>
    %cst_67 = arith.constant 0.000000e+00 : f32
    %622 = vector.broadcast %cst_67 : f32 to vector<8x256xf32>
    %623 = arith.select %621, %619, %622 : vector<8x256xi1>, vector<8x256xf32>
    %624 = arith.addf %583, %623 : vector<8x256xf32>
    %625 = vector.extract_strided_slice %462 {offsets = [0, 27], sizes = [8, 1], strides = [1, 1]} : vector<8x128xf32> to vector<8x1xf32>
    %626 = vector.broadcast %625 : vector<8x1xf32> to vector<8x256xf32>
    %627 = arith.mulf %467, %626 : vector<8x256xf32>
    %628 = vector.extract_strided_slice %462 {offsets = [0, 28], sizes = [8, 1], strides = [1, 1]} : vector<8x128xf32> to vector<8x1xf32>
    %629 = vector.broadcast %628 : vector<8x1xf32> to vector<8x256xf32>
    %630 = arith.mulf %472, %629 : vector<8x256xf32>
    %631 = arith.addf %627, %630 : vector<8x256xf32>
    %632 = vector.extract_strided_slice %462 {offsets = [0, 29], sizes = [8, 1], strides = [1, 1]} : vector<8x128xf32> to vector<8x1xf32>
    %633 = vector.broadcast %632 : vector<8x1xf32> to vector<8x256xf32>
    %634 = arith.mulf %477, %633 : vector<8x256xf32>
    %635 = arith.addf %631, %634 : vector<8x256xf32>
    %636 = vector.extract_strided_slice %462 {offsets = [0, 30], sizes = [8, 1], strides = [1, 1]} : vector<8x128xf32> to vector<8x1xf32>
    %637 = vector.broadcast %636 : vector<8x1xf32> to vector<8x256xf32>
    %638 = arith.mulf %482, %637 : vector<8x256xf32>
    %639 = arith.addf %635, %638 : vector<8x256xf32>
    %640 = vector.extract_strided_slice %462 {offsets = [0, 31], sizes = [8, 1], strides = [1, 1]} : vector<8x128xf32> to vector<8x1xf32>
    %641 = vector.broadcast %640 : vector<8x1xf32> to vector<8x256xf32>
    %642 = arith.mulf %460, %641 : vector<8x256xf32>
    %643 = arith.addf %639, %642 : vector<8x256xf32>
    %644 = vector.extract_strided_slice %462 {offsets = [0, 32], sizes = [8, 1], strides = [1, 1]} : vector<8x128xf32> to vector<8x1xf32>
    %645 = vector.broadcast %644 : vector<8x1xf32> to vector<8x256xf32>
    %646 = arith.mulf %487, %645 : vector<8x256xf32>
    %647 = arith.addf %643, %646 : vector<8x256xf32>
    %648 = vector.extract_strided_slice %462 {offsets = [0, 33], sizes = [8, 1], strides = [1, 1]} : vector<8x128xf32> to vector<8x1xf32>
    %649 = vector.broadcast %648 : vector<8x1xf32> to vector<8x256xf32>
    %650 = arith.mulf %492, %649 : vector<8x256xf32>
    %651 = arith.addf %647, %650 : vector<8x256xf32>
    %652 = vector.extract_strided_slice %462 {offsets = [0, 34], sizes = [8, 1], strides = [1, 1]} : vector<8x128xf32> to vector<8x1xf32>
    %653 = vector.broadcast %652 : vector<8x1xf32> to vector<8x256xf32>
    %654 = arith.mulf %497, %653 : vector<8x256xf32>
    %655 = arith.addf %651, %654 : vector<8x256xf32>
    %656 = vector.extract_strided_slice %462 {offsets = [0, 35], sizes = [8, 1], strides = [1, 1]} : vector<8x128xf32> to vector<8x1xf32>
    %657 = vector.broadcast %656 : vector<8x1xf32> to vector<8x256xf32>
    %658 = arith.mulf %502, %657 : vector<8x256xf32>
    %659 = arith.addf %655, %658 : vector<8x256xf32>
    %c16_i32_68 = arith.constant 16 : i32
    %660 = tpu.dynamic_rotate %659 by %c16_i32_68 dim 1 : vector<8x256xf32>, i32 -> vector<8x256xf32>
    %c16_i32_69 = arith.constant 16 : i32
    %661 = vector.broadcast %c16_i32_69 : i32 to vector<8x256xi32>
    %662 = arith.cmpi sge, %1, %661 : vector<8x256xi32>
    %cst_70 = arith.constant 0.000000e+00 : f32
    %663 = vector.broadcast %cst_70 : f32 to vector<8x256xf32>
    %664 = arith.select %662, %660, %663 : vector<8x256xi1>, vector<8x256xf32>
    %665 = arith.addf %624, %664 : vector<8x256xf32>
    %666 = vector.extract_strided_slice %462 {offsets = [0, 36], sizes = [8, 1], strides = [1, 1]} : vector<8x128xf32> to vector<8x1xf32>
    %667 = vector.broadcast %666 : vector<8x1xf32> to vector<8x256xf32>
    %668 = arith.mulf %467, %667 : vector<8x256xf32>
    %669 = vector.extract_strided_slice %462 {offsets = [0, 37], sizes = [8, 1], strides = [1, 1]} : vector<8x128xf32> to vector<8x1xf32>
    %670 = vector.broadcast %669 : vector<8x1xf32> to vector<8x256xf32>
    %671 = arith.mulf %472, %670 : vector<8x256xf32>
    %672 = arith.addf %668, %671 : vector<8x256xf32>
    %673 = vector.extract_strided_slice %462 {offsets = [0, 38], sizes = [8, 1], strides = [1, 1]} : vector<8x128xf32> to vector<8x1xf32>
    %674 = vector.broadcast %673 : vector<8x1xf32> to vector<8x256xf32>
    %675 = arith.mulf %477, %674 : vector<8x256xf32>
    %676 = arith.addf %672, %675 : vector<8x256xf32>
    %677 = vector.extract_strided_slice %462 {offsets = [0, 39], sizes = [8, 1], strides = [1, 1]} : vector<8x128xf32> to vector<8x1xf32>
    %678 = vector.broadcast %677 : vector<8x1xf32> to vector<8x256xf32>
    %679 = arith.mulf %482, %678 : vector<8x256xf32>
    %680 = arith.addf %676, %679 : vector<8x256xf32>
    %681 = vector.extract_strided_slice %462 {offsets = [0, 40], sizes = [8, 1], strides = [1, 1]} : vector<8x128xf32> to vector<8x1xf32>
    %682 = vector.broadcast %681 : vector<8x1xf32> to vector<8x256xf32>
    %683 = arith.mulf %460, %682 : vector<8x256xf32>
    %684 = arith.addf %680, %683 : vector<8x256xf32>
    %685 = vector.extract_strided_slice %462 {offsets = [0, 41], sizes = [8, 1], strides = [1, 1]} : vector<8x128xf32> to vector<8x1xf32>
    %686 = vector.broadcast %685 : vector<8x1xf32> to vector<8x256xf32>
    %687 = arith.mulf %487, %686 : vector<8x256xf32>
    %688 = arith.addf %684, %687 : vector<8x256xf32>
    %689 = vector.extract_strided_slice %462 {offsets = [0, 42], sizes = [8, 1], strides = [1, 1]} : vector<8x128xf32> to vector<8x1xf32>
    %690 = vector.broadcast %689 : vector<8x1xf32> to vector<8x256xf32>
    %691 = arith.mulf %492, %690 : vector<8x256xf32>
    %692 = arith.addf %688, %691 : vector<8x256xf32>
    %693 = vector.extract_strided_slice %462 {offsets = [0, 43], sizes = [8, 1], strides = [1, 1]} : vector<8x128xf32> to vector<8x1xf32>
    %694 = vector.broadcast %693 : vector<8x1xf32> to vector<8x256xf32>
    %695 = arith.mulf %497, %694 : vector<8x256xf32>
    %696 = arith.addf %692, %695 : vector<8x256xf32>
    %697 = vector.extract_strided_slice %462 {offsets = [0, 44], sizes = [8, 1], strides = [1, 1]} : vector<8x128xf32> to vector<8x1xf32>
    %698 = vector.broadcast %697 : vector<8x1xf32> to vector<8x256xf32>
    %699 = arith.mulf %502, %698 : vector<8x256xf32>
    %700 = arith.addf %696, %699 : vector<8x256xf32>
    %701 = arith.addf %665, %700 : vector<8x256xf32>
    %702 = vector.extract_strided_slice %462 {offsets = [0, 45], sizes = [8, 1], strides = [1, 1]} : vector<8x128xf32> to vector<8x1xf32>
    %703 = vector.broadcast %702 : vector<8x1xf32> to vector<8x256xf32>
    %704 = arith.mulf %467, %703 : vector<8x256xf32>
    %705 = vector.extract_strided_slice %462 {offsets = [0, 46], sizes = [8, 1], strides = [1, 1]} : vector<8x128xf32> to vector<8x1xf32>
    %706 = vector.broadcast %705 : vector<8x1xf32> to vector<8x256xf32>
    %707 = arith.mulf %472, %706 : vector<8x256xf32>
    %708 = arith.addf %704, %707 : vector<8x256xf32>
    %709 = vector.extract_strided_slice %462 {offsets = [0, 47], sizes = [8, 1], strides = [1, 1]} : vector<8x128xf32> to vector<8x1xf32>
    %710 = vector.broadcast %709 : vector<8x1xf32> to vector<8x256xf32>
    %711 = arith.mulf %477, %710 : vector<8x256xf32>
    %712 = arith.addf %708, %711 : vector<8x256xf32>
    %713 = vector.extract_strided_slice %462 {offsets = [0, 48], sizes = [8, 1], strides = [1, 1]} : vector<8x128xf32> to vector<8x1xf32>
    %714 = vector.broadcast %713 : vector<8x1xf32> to vector<8x256xf32>
    %715 = arith.mulf %482, %714 : vector<8x256xf32>
    %716 = arith.addf %712, %715 : vector<8x256xf32>
    %717 = vector.extract_strided_slice %462 {offsets = [0, 49], sizes = [8, 1], strides = [1, 1]} : vector<8x128xf32> to vector<8x1xf32>
    %718 = vector.broadcast %717 : vector<8x1xf32> to vector<8x256xf32>
    %719 = arith.mulf %460, %718 : vector<8x256xf32>
    %720 = arith.addf %716, %719 : vector<8x256xf32>
    %721 = vector.extract_strided_slice %462 {offsets = [0, 50], sizes = [8, 1], strides = [1, 1]} : vector<8x128xf32> to vector<8x1xf32>
    %722 = vector.broadcast %721 : vector<8x1xf32> to vector<8x256xf32>
    %723 = arith.mulf %487, %722 : vector<8x256xf32>
    %724 = arith.addf %720, %723 : vector<8x256xf32>
    %725 = vector.extract_strided_slice %462 {offsets = [0, 51], sizes = [8, 1], strides = [1, 1]} : vector<8x128xf32> to vector<8x1xf32>
    %726 = vector.broadcast %725 : vector<8x1xf32> to vector<8x256xf32>
    %727 = arith.mulf %492, %726 : vector<8x256xf32>
    %728 = arith.addf %724, %727 : vector<8x256xf32>
    %729 = vector.extract_strided_slice %462 {offsets = [0, 52], sizes = [8, 1], strides = [1, 1]} : vector<8x128xf32> to vector<8x1xf32>
    %730 = vector.broadcast %729 : vector<8x1xf32> to vector<8x256xf32>
    %731 = arith.mulf %497, %730 : vector<8x256xf32>
    %732 = arith.addf %728, %731 : vector<8x256xf32>
    %733 = vector.extract_strided_slice %462 {offsets = [0, 53], sizes = [8, 1], strides = [1, 1]} : vector<8x128xf32> to vector<8x1xf32>
    %734 = vector.broadcast %733 : vector<8x1xf32> to vector<8x256xf32>
    %735 = arith.mulf %502, %734 : vector<8x256xf32>
    %736 = arith.addf %732, %735 : vector<8x256xf32>
    %c240_i32_71 = arith.constant 240 : i32
    %737 = tpu.dynamic_rotate %736 by %c240_i32_71 dim 1 : vector<8x256xf32>, i32 -> vector<8x256xf32>
    %c240_i32_72 = arith.constant 240 : i32
    %738 = vector.broadcast %c240_i32_72 : i32 to vector<8x256xi32>
    %739 = arith.cmpi slt, %1, %738 : vector<8x256xi32>
    %cst_73 = arith.constant 0.000000e+00 : f32
    %740 = vector.broadcast %cst_73 : f32 to vector<8x256xf32>
    %741 = arith.select %739, %737, %740 : vector<8x256xi1>, vector<8x256xf32>
    %742 = arith.addf %701, %741 : vector<8x256xf32>
    %743 = vector.extract_strided_slice %462 {offsets = [0, 54], sizes = [8, 1], strides = [1, 1]} : vector<8x128xf32> to vector<8x1xf32>
    %744 = vector.broadcast %743 : vector<8x1xf32> to vector<8x256xf32>
    %745 = arith.mulf %467, %744 : vector<8x256xf32>
    %746 = vector.extract_strided_slice %462 {offsets = [0, 55], sizes = [8, 1], strides = [1, 1]} : vector<8x128xf32> to vector<8x1xf32>
    %747 = vector.broadcast %746 : vector<8x1xf32> to vector<8x256xf32>
    %748 = arith.mulf %472, %747 : vector<8x256xf32>
    %749 = arith.addf %745, %748 : vector<8x256xf32>
    %750 = vector.extract_strided_slice %462 {offsets = [0, 56], sizes = [8, 1], strides = [1, 1]} : vector<8x128xf32> to vector<8x1xf32>
    %751 = vector.broadcast %750 : vector<8x1xf32> to vector<8x256xf32>
    %752 = arith.mulf %477, %751 : vector<8x256xf32>
    %753 = arith.addf %749, %752 : vector<8x256xf32>
    %754 = vector.extract_strided_slice %462 {offsets = [0, 57], sizes = [8, 1], strides = [1, 1]} : vector<8x128xf32> to vector<8x1xf32>
    %755 = vector.broadcast %754 : vector<8x1xf32> to vector<8x256xf32>
    %756 = arith.mulf %482, %755 : vector<8x256xf32>
    %757 = arith.addf %753, %756 : vector<8x256xf32>
    %758 = vector.extract_strided_slice %462 {offsets = [0, 58], sizes = [8, 1], strides = [1, 1]} : vector<8x128xf32> to vector<8x1xf32>
    %759 = vector.broadcast %758 : vector<8x1xf32> to vector<8x256xf32>
    %760 = arith.mulf %460, %759 : vector<8x256xf32>
    %761 = arith.addf %757, %760 : vector<8x256xf32>
    %762 = vector.extract_strided_slice %462 {offsets = [0, 59], sizes = [8, 1], strides = [1, 1]} : vector<8x128xf32> to vector<8x1xf32>
    %763 = vector.broadcast %762 : vector<8x1xf32> to vector<8x256xf32>
    %764 = arith.mulf %487, %763 : vector<8x256xf32>
    %765 = arith.addf %761, %764 : vector<8x256xf32>
    %766 = vector.extract_strided_slice %462 {offsets = [0, 60], sizes = [8, 1], strides = [1, 1]} : vector<8x128xf32> to vector<8x1xf32>
    %767 = vector.broadcast %766 : vector<8x1xf32> to vector<8x256xf32>
    %768 = arith.mulf %492, %767 : vector<8x256xf32>
    %769 = arith.addf %765, %768 : vector<8x256xf32>
    %770 = vector.extract_strided_slice %462 {offsets = [0, 61], sizes = [8, 1], strides = [1, 1]} : vector<8x128xf32> to vector<8x1xf32>
    %771 = vector.broadcast %770 : vector<8x1xf32> to vector<8x256xf32>
    %772 = arith.mulf %497, %771 : vector<8x256xf32>
    %773 = arith.addf %769, %772 : vector<8x256xf32>
    %774 = vector.extract_strided_slice %462 {offsets = [0, 62], sizes = [8, 1], strides = [1, 1]} : vector<8x128xf32> to vector<8x1xf32>
    %775 = vector.broadcast %774 : vector<8x1xf32> to vector<8x256xf32>
    %776 = arith.mulf %502, %775 : vector<8x256xf32>
    %777 = arith.addf %773, %776 : vector<8x256xf32>
    %c224_i32_74 = arith.constant 224 : i32
    %778 = tpu.dynamic_rotate %777 by %c224_i32_74 dim 1 : vector<8x256xf32>, i32 -> vector<8x256xf32>
    %c224_i32_75 = arith.constant 224 : i32
    %779 = vector.broadcast %c224_i32_75 : i32 to vector<8x256xi32>
    %780 = arith.cmpi slt, %1, %779 : vector<8x256xi32>
    %cst_76 = arith.constant 0.000000e+00 : f32
    %781 = vector.broadcast %cst_76 : f32 to vector<8x256xf32>
    %782 = arith.select %780, %778, %781 : vector<8x256xi1>, vector<8x256xf32>
    %783 = arith.addf %742, %782 : vector<8x256xf32>
    %784 = vector.extract_strided_slice %462 {offsets = [0, 63], sizes = [8, 1], strides = [1, 1]} : vector<8x128xf32> to vector<8x1xf32>
    %785 = vector.broadcast %784 : vector<8x1xf32> to vector<8x256xf32>
    %786 = arith.mulf %467, %785 : vector<8x256xf32>
    %787 = vector.extract_strided_slice %462 {offsets = [0, 64], sizes = [8, 1], strides = [1, 1]} : vector<8x128xf32> to vector<8x1xf32>
    %788 = vector.broadcast %787 : vector<8x1xf32> to vector<8x256xf32>
    %789 = arith.mulf %472, %788 : vector<8x256xf32>
    %790 = arith.addf %786, %789 : vector<8x256xf32>
    %791 = vector.extract_strided_slice %462 {offsets = [0, 65], sizes = [8, 1], strides = [1, 1]} : vector<8x128xf32> to vector<8x1xf32>
    %792 = vector.broadcast %791 : vector<8x1xf32> to vector<8x256xf32>
    %793 = arith.mulf %477, %792 : vector<8x256xf32>
    %794 = arith.addf %790, %793 : vector<8x256xf32>
    %795 = vector.extract_strided_slice %462 {offsets = [0, 66], sizes = [8, 1], strides = [1, 1]} : vector<8x128xf32> to vector<8x1xf32>
    %796 = vector.broadcast %795 : vector<8x1xf32> to vector<8x256xf32>
    %797 = arith.mulf %482, %796 : vector<8x256xf32>
    %798 = arith.addf %794, %797 : vector<8x256xf32>
    %799 = vector.extract_strided_slice %462 {offsets = [0, 67], sizes = [8, 1], strides = [1, 1]} : vector<8x128xf32> to vector<8x1xf32>
    %800 = vector.broadcast %799 : vector<8x1xf32> to vector<8x256xf32>
    %801 = arith.mulf %460, %800 : vector<8x256xf32>
    %802 = arith.addf %798, %801 : vector<8x256xf32>
    %803 = vector.extract_strided_slice %462 {offsets = [0, 68], sizes = [8, 1], strides = [1, 1]} : vector<8x128xf32> to vector<8x1xf32>
    %804 = vector.broadcast %803 : vector<8x1xf32> to vector<8x256xf32>
    %805 = arith.mulf %487, %804 : vector<8x256xf32>
    %806 = arith.addf %802, %805 : vector<8x256xf32>
    %807 = vector.extract_strided_slice %462 {offsets = [0, 69], sizes = [8, 1], strides = [1, 1]} : vector<8x128xf32> to vector<8x1xf32>
    %808 = vector.broadcast %807 : vector<8x1xf32> to vector<8x256xf32>
    %809 = arith.mulf %492, %808 : vector<8x256xf32>
    %810 = arith.addf %806, %809 : vector<8x256xf32>
    %811 = vector.extract_strided_slice %462 {offsets = [0, 70], sizes = [8, 1], strides = [1, 1]} : vector<8x128xf32> to vector<8x1xf32>
    %812 = vector.broadcast %811 : vector<8x1xf32> to vector<8x256xf32>
    %813 = arith.mulf %497, %812 : vector<8x256xf32>
    %814 = arith.addf %810, %813 : vector<8x256xf32>
    %815 = vector.extract_strided_slice %462 {offsets = [0, 71], sizes = [8, 1], strides = [1, 1]} : vector<8x128xf32> to vector<8x1xf32>
    %816 = vector.broadcast %815 : vector<8x1xf32> to vector<8x256xf32>
    %817 = arith.mulf %502, %816 : vector<8x256xf32>
    %818 = arith.addf %814, %817 : vector<8x256xf32>
    %c208_i32_77 = arith.constant 208 : i32
    %819 = tpu.dynamic_rotate %818 by %c208_i32_77 dim 1 : vector<8x256xf32>, i32 -> vector<8x256xf32>
    %c208_i32_78 = arith.constant 208 : i32
    %820 = vector.broadcast %c208_i32_78 : i32 to vector<8x256xi32>
    %821 = arith.cmpi slt, %1, %820 : vector<8x256xi32>
    %cst_79 = arith.constant 0.000000e+00 : f32
    %822 = vector.broadcast %cst_79 : f32 to vector<8x256xf32>
    %823 = arith.select %821, %819, %822 : vector<8x256xi1>, vector<8x256xf32>
    %824 = arith.addf %783, %823 : vector<8x256xf32>
    %825 = vector.extract_strided_slice %462 {offsets = [0, 72], sizes = [8, 1], strides = [1, 1]} : vector<8x128xf32> to vector<8x1xf32>
    %826 = vector.broadcast %825 : vector<8x1xf32> to vector<8x256xf32>
    %827 = arith.mulf %467, %826 : vector<8x256xf32>
    %828 = vector.extract_strided_slice %462 {offsets = [0, 73], sizes = [8, 1], strides = [1, 1]} : vector<8x128xf32> to vector<8x1xf32>
    %829 = vector.broadcast %828 : vector<8x1xf32> to vector<8x256xf32>
    %830 = arith.mulf %472, %829 : vector<8x256xf32>
    %831 = arith.addf %827, %830 : vector<8x256xf32>
    %832 = vector.extract_strided_slice %462 {offsets = [0, 74], sizes = [8, 1], strides = [1, 1]} : vector<8x128xf32> to vector<8x1xf32>
    %833 = vector.broadcast %832 : vector<8x1xf32> to vector<8x256xf32>
    %834 = arith.mulf %477, %833 : vector<8x256xf32>
    %835 = arith.addf %831, %834 : vector<8x256xf32>
    %836 = vector.extract_strided_slice %462 {offsets = [0, 75], sizes = [8, 1], strides = [1, 1]} : vector<8x128xf32> to vector<8x1xf32>
    %837 = vector.broadcast %836 : vector<8x1xf32> to vector<8x256xf32>
    %838 = arith.mulf %482, %837 : vector<8x256xf32>
    %839 = arith.addf %835, %838 : vector<8x256xf32>
    %840 = vector.extract_strided_slice %462 {offsets = [0, 76], sizes = [8, 1], strides = [1, 1]} : vector<8x128xf32> to vector<8x1xf32>
    %841 = vector.broadcast %840 : vector<8x1xf32> to vector<8x256xf32>
    %842 = arith.mulf %460, %841 : vector<8x256xf32>
    %843 = arith.addf %839, %842 : vector<8x256xf32>
    %844 = vector.extract_strided_slice %462 {offsets = [0, 77], sizes = [8, 1], strides = [1, 1]} : vector<8x128xf32> to vector<8x1xf32>
    %845 = vector.broadcast %844 : vector<8x1xf32> to vector<8x256xf32>
    %846 = arith.mulf %487, %845 : vector<8x256xf32>
    %847 = arith.addf %843, %846 : vector<8x256xf32>
    %848 = vector.extract_strided_slice %462 {offsets = [0, 78], sizes = [8, 1], strides = [1, 1]} : vector<8x128xf32> to vector<8x1xf32>
    %849 = vector.broadcast %848 : vector<8x1xf32> to vector<8x256xf32>
    %850 = arith.mulf %492, %849 : vector<8x256xf32>
    %851 = arith.addf %847, %850 : vector<8x256xf32>
    %852 = vector.extract_strided_slice %462 {offsets = [0, 79], sizes = [8, 1], strides = [1, 1]} : vector<8x128xf32> to vector<8x1xf32>
    %853 = vector.broadcast %852 : vector<8x1xf32> to vector<8x256xf32>
    %854 = arith.mulf %497, %853 : vector<8x256xf32>
    %855 = arith.addf %851, %854 : vector<8x256xf32>
    %856 = vector.extract_strided_slice %462 {offsets = [0, 80], sizes = [8, 1], strides = [1, 1]} : vector<8x128xf32> to vector<8x1xf32>
    %857 = vector.broadcast %856 : vector<8x1xf32> to vector<8x256xf32>
    %858 = arith.mulf %502, %857 : vector<8x256xf32>
    %859 = arith.addf %855, %858 : vector<8x256xf32>
    %c192_i32_80 = arith.constant 192 : i32
    %860 = tpu.dynamic_rotate %859 by %c192_i32_80 dim 1 : vector<8x256xf32>, i32 -> vector<8x256xf32>
    %c192_i32_81 = arith.constant 192 : i32
    %861 = vector.broadcast %c192_i32_81 : i32 to vector<8x256xi32>
    %862 = arith.cmpi slt, %1, %861 : vector<8x256xi32>
    %cst_82 = arith.constant 0.000000e+00 : f32
    %863 = vector.broadcast %cst_82 : f32 to vector<8x256xf32>
    %864 = arith.select %862, %860, %863 : vector<8x256xi1>, vector<8x256xf32>
    %865 = arith.addf %824, %864 : vector<8x256xf32>
    %866 = vector.extract_strided_slice %462 {offsets = [0, 89], sizes = [8, 1], strides = [1, 1]} : vector<8x128xf32> to vector<8x1xf32>
    %867 = vector.extract_strided_slice %462 {offsets = [0, 81], sizes = [8, 1], strides = [1, 1]} : vector<8x128xf32> to vector<8x1xf32>
    %868 = vector.extract_strided_slice %865 {offsets = [0, 0], sizes = [1, 256], strides = [1, 1]} : vector<8x256xf32> to vector<1x256xf32>
    %869 = vector.broadcast %867 : vector<8x1xf32> to vector<8x256xf32>
    %870 = vector.broadcast %868 : vector<1x256xf32> to vector<8x256xf32>
    %871 = arith.mulf %869, %870 : vector<8x256xf32>
    %872 = vector.broadcast %866 : vector<8x1xf32> to vector<8x256xf32>
    %873 = arith.addf %872, %871 : vector<8x256xf32>
    %874 = vector.extract_strided_slice %462 {offsets = [0, 82], sizes = [8, 1], strides = [1, 1]} : vector<8x128xf32> to vector<8x1xf32>
    %875 = vector.extract_strided_slice %865 {offsets = [1, 0], sizes = [1, 256], strides = [1, 1]} : vector<8x256xf32> to vector<1x256xf32>
    %876 = vector.broadcast %874 : vector<8x1xf32> to vector<8x256xf32>
    %877 = vector.broadcast %875 : vector<1x256xf32> to vector<8x256xf32>
    %878 = arith.mulf %876, %877 : vector<8x256xf32>
    %879 = arith.addf %873, %878 : vector<8x256xf32>
    %880 = vector.extract_strided_slice %462 {offsets = [0, 83], sizes = [8, 1], strides = [1, 1]} : vector<8x128xf32> to vector<8x1xf32>
    %881 = vector.extract_strided_slice %865 {offsets = [2, 0], sizes = [1, 256], strides = [1, 1]} : vector<8x256xf32> to vector<1x256xf32>
    %882 = vector.broadcast %880 : vector<8x1xf32> to vector<8x256xf32>
    %883 = vector.broadcast %881 : vector<1x256xf32> to vector<8x256xf32>
    %884 = arith.mulf %882, %883 : vector<8x256xf32>
    %885 = arith.addf %879, %884 : vector<8x256xf32>
    %886 = vector.extract_strided_slice %462 {offsets = [0, 84], sizes = [8, 1], strides = [1, 1]} : vector<8x128xf32> to vector<8x1xf32>
    %887 = vector.extract_strided_slice %865 {offsets = [3, 0], sizes = [1, 256], strides = [1, 1]} : vector<8x256xf32> to vector<1x256xf32>
    %888 = vector.broadcast %886 : vector<8x1xf32> to vector<8x256xf32>
    %889 = vector.broadcast %887 : vector<1x256xf32> to vector<8x256xf32>
    %890 = arith.mulf %888, %889 : vector<8x256xf32>
    %891 = arith.addf %885, %890 : vector<8x256xf32>
    %892 = vector.extract_strided_slice %462 {offsets = [0, 85], sizes = [8, 1], strides = [1, 1]} : vector<8x128xf32> to vector<8x1xf32>
    %893 = vector.extract_strided_slice %865 {offsets = [4, 0], sizes = [1, 256], strides = [1, 1]} : vector<8x256xf32> to vector<1x256xf32>
    %894 = vector.broadcast %892 : vector<8x1xf32> to vector<8x256xf32>
    %895 = vector.broadcast %893 : vector<1x256xf32> to vector<8x256xf32>
    %896 = arith.mulf %894, %895 : vector<8x256xf32>
    %897 = arith.addf %891, %896 : vector<8x256xf32>
    %898 = vector.extract_strided_slice %462 {offsets = [0, 86], sizes = [8, 1], strides = [1, 1]} : vector<8x128xf32> to vector<8x1xf32>
    %899 = vector.extract_strided_slice %865 {offsets = [5, 0], sizes = [1, 256], strides = [1, 1]} : vector<8x256xf32> to vector<1x256xf32>
    %900 = vector.broadcast %898 : vector<8x1xf32> to vector<8x256xf32>
    %901 = vector.broadcast %899 : vector<1x256xf32> to vector<8x256xf32>
    %902 = arith.mulf %900, %901 : vector<8x256xf32>
    %903 = arith.addf %897, %902 : vector<8x256xf32>
    %904 = vector.extract_strided_slice %462 {offsets = [0, 87], sizes = [8, 1], strides = [1, 1]} : vector<8x128xf32> to vector<8x1xf32>
    %905 = vector.extract_strided_slice %865 {offsets = [6, 0], sizes = [1, 256], strides = [1, 1]} : vector<8x256xf32> to vector<1x256xf32>
    %906 = vector.broadcast %904 : vector<8x1xf32> to vector<8x256xf32>
    %907 = vector.broadcast %905 : vector<1x256xf32> to vector<8x256xf32>
    %908 = arith.mulf %906, %907 : vector<8x256xf32>
    %909 = arith.addf %903, %908 : vector<8x256xf32>
    %910 = vector.extract_strided_slice %462 {offsets = [0, 88], sizes = [8, 1], strides = [1, 1]} : vector<8x128xf32> to vector<8x1xf32>
    %911 = vector.extract_strided_slice %865 {offsets = [7, 0], sizes = [1, 256], strides = [1, 1]} : vector<8x256xf32> to vector<1x256xf32>
    %912 = vector.broadcast %910 : vector<8x1xf32> to vector<8x256xf32>
    %913 = vector.broadcast %911 : vector<1x256xf32> to vector<8x256xf32>
    %914 = arith.mulf %912, %913 : vector<8x256xf32>
    %915 = arith.addf %909, %914 : vector<8x256xf32>
    %cst_83 = arith.constant 0.000000e+00 : f32
    %916 = vector.broadcast %cst_83 : f32 to vector<8x256xf32>
    %917 = arith.maximumf %915, %916 : vector<8x256xf32>
    %c0_84 = arith.constant 0 : index
    %c0_85 = arith.constant 0 : index
    %918 = vector.load %arg3[%c0_84, %c0_85] : memref<8x256xf32, #tpu.memory_space<vmem>>, vector<8x256xf32>
    tpu.vector_store %arg3[%c0_84, %c0_85], %917 {strides = array<i32>} : memref<8x256xf32, #tpu.memory_space<vmem>>, vector<8x256xf32>,
    return
  }
  func.func @transform_0(%arg0: i32) -> (i32, i32) {
    %c0_i32 = arith.constant 0 : i32
    %c0_i32_0 = arith.constant 0 : i32
    %c0_i32_1 = arith.constant 0 : i32
    return %c0_i32, %c0_i32_0 : i32, i32
  }
  func.func @transform_1(%arg0: i32) -> (i32, i32, i32) {
    %c0_i32 = arith.constant 0 : i32
    %c0_i32_0 = arith.constant 0 : i32
    %c0_i32_1 = arith.constant 0 : i32
    %c0_i32_2 = arith.constant 0 : i32
    return %c0_i32, %c0_i32_0, %c0_i32_1 : i32, i32, i32
  }
  func.func @transform_2(%arg0: i32) -> (i32, i32) {
    %c0_i32 = arith.constant 0 : i32
    %c0_i32_0 = arith.constant 0 : i32
    %c0_i32_1 = arith.constant 0 : i32
    return %c0_i32, %c0_i32_0 : i32, i32
  }
}

</mosaic_0001>

<llo_original>
// kernel: tpu_custom_call.1
$region0: #{tpu_custom_call.1}
  #allocation0 [shape = 'u32[]', space=smem, size = 0x4, offset = 0x4, fixed_abs, tag = 'smem constant byte address 0x4 - core index']
  #allocation1 [shape = 'u32[144,128]{1,0:T(1,128)}', space=vmem, size = 0x12000, scoped, tag = 'internal scratch']
  %s0 = inlined_call_operand.hbm [shape: f32[8,256], index: 0, kind: input, shape index: {}]
  %s1 = inlined_call_operand.hbm [shape: f32[2,8,128], index: 1, kind: input, shape index: {}]
  %s2 = inlined_call_operand.hbm [shape: f32[8,256], index: 2, kind: output, shape index: {}]
  %s3 = sld [smem:[#allocation0]]
  $region26: #{tpu_custom_call.1} parent=0
    _
  %s5 = ssub.s32 1, %s3
  %s6 = scalar_select 0, %s5, %s3
  $region1: #{tpu_custom_call.1} parent=0
    #allocation2 [shape = 'u8[8192]{0}', space=vmem, size = 0x2000, scoped, tag = 'input window, operand 0, single buffered']
    #allocation3 [shape = 's32[1]{0}', space=sflag, size = 0x4, scoped, tag = 'scoped memory for tpu_custom_call.1']
    #allocation4 [shape = 's32[1]{0}', space=sflag, size = 0x4, scoped, tag = 'scoped memory for tpu_custom_call.1']
    #allocation5 [shape = 'u8[8192]{0}', space=vmem, size = 0x2000, scoped, tag = 'input window, operand 1, single buffered']
    #allocation6 [shape = 's32[1]{0}', space=sflag, size = 0x4, scoped, tag = 'scoped memory for tpu_custom_call.1']
    #allocation7 [shape = 'u8[8192]{0}', space=vmem, size = 0x2000, scoped, tag = 'output window, operand 0, single buffered']
    %7 = vsyncpa [#allocation3], 0
    %8 = vsyncpa [#allocation6], 0
    %9 = vsyncpa [#allocation4], 0
    // Predicated region
    $region2: #{tpu_custom_call.1} parent=1 // pred_check
      _
    $region3: #{tpu_custom_call.1} parent=1 // pred_check_branch
      %11 = sbr.rel (0) target = $region5
    $region4: #{tpu_custom_call.1} parent=1 // pred_region
      %s13 = ssub.s32 256, 256
      %14 = vsyncadd [#allocation3], %s13
      %s16 = sshll.u32 [#allocation2], 4
      %s17 = int_to_ptr.vmem [resolvable:$true] %s16
      %19 = dma.hbm_to_vmem [thread:$0]  %s0, 256, %s17, [#allocation3]
    $region5: #{tpu_custom_call.1} parent=1 // pred_fallthru
      _
    // Predicated region
    $region6: #{tpu_custom_call.1} parent=1 // pred_check
      _
    $region7: #{tpu_custom_call.1} parent=1 // pred_check_branch
      %21 = sbr.rel (0) target = $region9
    $region8: #{tpu_custom_call.1} parent=1 // pred_region
      %s23 = ssub.s32 256, 256
      %24 = vsyncadd [#allocation6], %s23
      %s25 = sshll.u32 [#allocation5], 4
      %s26 = int_to_ptr.vmem [resolvable:$true] %s25
      %31 = dma.hbm_to_vmem [thread:$0]  %s1, 256, %s26, [#allocation6], 128, 128, 8
    $region9: #{tpu_custom_call.1} parent=1 // pred_fallthru
      _
    // Predicated region
    $region10: #{tpu_custom_call.1} parent=1 // pred_check
      _
    $region11: #{tpu_custom_call.1} parent=1 // pred_check_branch
      %33 = sbr.rel (0) target = $region13
    $region12: #{tpu_custom_call.1} parent=1 // pred_region
      %34 = dma.done [#allocation3], 256
    $region13: #{tpu_custom_call.1} parent=1 // pred_fallthru
      _
    // Predicated region
    $region14: #{tpu_custom_call.1} parent=1 // pred_check
      _
    $region15: #{tpu_custom_call.1} parent=1 // pred_check_branch
      %36 = sbr.rel (0) target = $region17
    $region16: #{tpu_custom_call.1} parent=1 // pred_region
      %37 = dma.done [#allocation6], 256
    $region17: #{tpu_custom_call.1} parent=1 // pred_fallthru
      _
    %v38 = vld [vmem:[#allocation2] sm:$0xff]
    %v39 = vld [vmem:[#allocation2 + $0x8] sm:$0xff]
    %v40 = vlaneseq
    %v41 = vand.u32 %v40, 127
    %v42 = vadd.s32 %v41, 128
    %v43 = vand.u32 %v41, 15
    %v44 = vand.u32 %v42, 15
    %v45 = vld [vmem:[#allocation5] sm:$0xff]
    %46 = vrot.lane.b32.xlu0 %v38, 4
    %v47 = vpop.permute.xlu0 %46
    %48 = vrot.lane.b32.xlu0 %v39, 4
    %v49 = vpop.permute.xlu0 %48
    %vm50 = vcmp.lt.s32.totalorder %v41, 4
    %v51 = vsel %vm50, %v47, %v49
    %v52 = vsel %vm50, %v49, %v47
    %vm53 = vcmp.ge.s32.totalorder %v43, 4
    %vm54 = vcmp.ge.s32.totalorder %v44, 4
    %v55 = vsel %vm53, %v52, 0.0
    %v56 = vsel %vm54, %v51, 0.0
    %57 = vrot.lane.b32.xlu0 %v38, 3
    %v58 = vpop.permute.xlu0 %57
    %59 = vrot.lane.b32.xlu0 %v39, 3
    %v60 = vpop.permute.xlu0 %59
    %vm61 = vcmp.lt.s32.totalorder %v41, 3
    %v62 = vsel %vm61, %v58, %v60
    %v63 = vsel %vm61, %v60, %v58
    %vm64 = vcmp.ge.s32.totalorder %v43, 3
    %vm65 = vcmp.ge.s32.totalorder %v44, 3
    %v66 = vsel %vm64, %v63, 0.0
    %v67 = vsel %vm65, %v62, 0.0
    %68 = vrot.lane.b32.xlu0 %v38, 2
    %v69 = vpop.permute.xlu0 %68
    %70 = vrot.lane.b32.xlu0 %v39, 2
    %v71 = vpop.permute.xlu0 %70
    %vm72 = vcmp.lt.s32.totalorder %v41, 2
    %v73 = vsel %vm72, %v69, %v71
    %v74 = vsel %vm72, %v71, %v69
    %vm75 = vcmp.ge.s32.totalorder %v43, 2
    %vm76 = vcmp.ge.s32.totalorder %v44, 2
    %v77 = vsel %vm75, %v74, 0.0
    %v78 = vsel %vm76, %v73, 0.0
    %79 = vrot.lane.b32.xlu0 %v38, 1
    %v80 = vpop.permute.xlu0 %79
    %81 = vrot.lane.b32.xlu0 %v39, 1
    %v82 = vpop.permute.xlu0 %81
    %vm83 = vcmp.lt.s32.totalorder %v41, 1
    %v84 = vsel %vm83, %v80, %v82
    %v85 = vsel %vm83, %v82, %v80
    %vm86 = vcmp.ge.s32.totalorder %v43, 1
    %vm87 = vcmp.ge.s32.totalorder %v44, 1
    %v88 = vsel %vm86, %v85, 0.0
    %v89 = vsel %vm87, %v84, 0.0
    %90 = vrot.lane.b32.xlu0 %v38, 127
    %v91 = vpop.permute.xlu0 %90
    %92 = vrot.lane.b32.xlu0 %v39, 127
    %v93 = vpop.permute.xlu0 %92
    %vm94 = vcmp.lt.s32.totalorder %v41, 127
    %v95 = vsel %vm94, %v91, %v93
    %v96 = vsel %vm94, %v93, %v91
    %vm97 = vcmp.lt.s32.totalorder %v43, 15
    %vm98 = vcmp.lt.s32.totalorder %v44, 15
    %v99 = vsel %vm97, %v95, 0.0
    %v100 = vsel %vm98, %v96, 0.0
    %101 = vrot.lane.b32.xlu0 %v38, 126
    %v102 = vpop.permute.xlu0 %101
    %103 = vrot.lane.b32.xlu0 %v39, 126
    %v104 = vpop.permute.xlu0 %103
    %vm105 = vcmp.lt.s32.totalorder %v41, 126
    %v106 = vsel %vm105, %v102, %v104
    %v107 = vsel %vm105, %v104, %v102
    %vm108 = vcmp.lt.s32.totalorder %v43, 14
    %vm109 = vcmp.lt.s32.totalorder %v44, 14
    %v110 = vsel %vm108, %v106, 0.0
    %v111 = vsel %vm109, %v107, 0.0
    %112 = vrot.lane.b32.xlu0 %v38, 125
    %v113 = vpop.permute.xlu0 %112
    %114 = vrot.lane.b32.xlu0 %v39, 125
    %v115 = vpop.permute.xlu0 %114
    %vm116 = vcmp.lt.s32.totalorder %v41, 125
    %v117 = vsel %vm116, %v113, %v115
    %v118 = vsel %vm116, %v115, %v113
    %vm119 = vcmp.lt.s32.totalorder %v43, 13
    %vm120 = vcmp.lt.s32.totalorder %v44, 13
    %v121 = vsel %vm119, %v117, 0.0
    %v122 = vsel %vm120, %v118, 0.0
    %123 = vrot.lane.b32.xlu0 %v38, 124
    %v124 = vpop.permute.xlu0 %123
    %125 = vrot.lane.b32.xlu0 %v39, 124
    %v126 = vpop.permute.xlu0 %125
    %vm127 = vcmp.lt.s32.totalorder %v41, 124
    %v128 = vsel %vm127, %v124, %v126
    %v129 = vsel %vm127, %v126, %v124
    %vm130 = vcmp.lt.s32.totalorder %v43, 12
    %vm131 = vcmp.lt.s32.totalorder %v44, 12
    %v132 = vsel %vm130, %v128, 0.0
    %v133 = vsel %vm131, %v129, 0.0
    %135 = vset.pattern.permute.xlu0 0
    %136 = vperm.xlu0 %135, %v45
    %v137 = vpop.permute.xlu0 %136
    %v139 = vmul.f32 %v55, %v137
    %v140 = vmul.f32 %v56, %v137
    %141 = vset.pattern.permute.xlu0 1
    %142 = vperm.xlu0 %141, %v45
    %v143 = vpop.permute.xlu0 %142
    %v145 = vmul.f32 %v66, %v143
    %v146 = vmul.f32 %v67, %v143
    %v147 = vadd.f32 %v139, %v145
    %v148 = vadd.f32 %v140, %v146
    %149 = vset.pattern.permute.xlu0 2
    %150 = vperm.xlu0 %149, %v45
    %v151 = vpop.permute.xlu0 %150
    %v153 = vmul.f32 %v77, %v151
    %v154 = vmul.f32 %v78, %v151
    %v155 = vadd.f32 %v147, %v153
    %v156 = vadd.f32 %v148, %v154
    %157 = vset.pattern.permute.xlu0 3
    %158 = vperm.xlu0 %157, %v45
    %v159 = vpop.permute.xlu0 %158
    %v161 = vmul.f32 %v88, %v159
    %v162 = vmul.f32 %v89, %v159
    %v163 = vadd.f32 %v155, %v161
    %v164 = vadd.f32 %v156, %v162
    %165 = vset.pattern.permute.xlu0 4
    %166 = vperm.xlu0 %165, %v45
    %v167 = vpop.permute.xlu0 %166
    %v169 = vmul.f32 %v38, %v167
    %v170 = vmul.f32 %v39, %v167
    %v171 = vadd.f32 %v163, %v169
    %v172 = vadd.f32 %v164, %v170
    %173 = vset.pattern.permute.xlu0 5
    %174 = vperm.xlu0 %173, %v45
    %v175 = vpop.permute.xlu0 %174
    %v177 = vmul.f32 %v99, %v175
    %v178 = vmul.f32 %v100, %v175
    %v179 = vadd.f32 %v171, %v177
    %v180 = vadd.f32 %v172, %v178
    %181 = vset.pattern.permute.xlu0 6
    %182 = vperm.xlu0 %181, %v45
    %v183 = vpop.permute.xlu0 %182
    %v185 = vmul.f32 %v110, %v183
    %v186 = vmul.f32 %v111, %v183
    %v187 = vadd.f32 %v179, %v185
    %v188 = vadd.f32 %v180, %v186
    %189 = vset.pattern.permute.xlu0 7
    %190 = vperm.xlu0 %189, %v45
    %v191 = vpop.permute.xlu0 %190
    %v193 = vmul.f32 %v121, %v191
    %v194 = vmul.f32 %v122, %v191
    %v195 = vadd.f32 %v187, %v193
    %v196 = vadd.f32 %v188, %v194
    %197 = vset.pattern.permute.xlu0 8
    %198 = vperm.xlu0 %197, %v45
    %v199 = vpop.permute.xlu0 %198
    %v201 = vmul.f32 %v132, %v199
    %v202 = vmul.f32 %v133, %v199
    %v203 = vadd.f32 %v195, %v201
    %v204 = vadd.f32 %v196, %v202
    %205 = vrot.lane.b32.xlu0 %v203, 64
    %v206 = vpop.permute.xlu0 %205
    %207 = vrot.lane.b32.xlu0 %v204, 64
    %v208 = vpop.permute.xlu0 %207
    %vm209 = vcmp.lt.s32.totalorder %v41, 64
    %v210 = vsel %vm209, %v206, %v208
    %v211 = vsel %vm209, %v208, %v206
    %vm212 = vcmp.ge.s32.totalorder %v41, 64
    %vm213 = vcmp.ge.s32.totalorder %v42, 64
    %v214 = vsel %vm212, %v211, 0.0
    %v215 = vsel %vm213, %v210, 0.0
    %216 = vset.pattern.permute.xlu0 9
    %217 = vperm.xlu0 %216, %v45
    %v218 = vpop.permute.xlu0 %217
    %v220 = vmul.f32 %v55, %v218
    %v221 = vmul.f32 %v56, %v218
    %222 = vset.pattern.permute.xlu0 10
    %223 = vperm.xlu0 %222, %v45
    %v224 = vpop.permute.xlu0 %223
    %v226 = vmul.f32 %v66, %v224
    %v227 = vmul.f32 %v67, %v224
    %v228 = vadd.f32 %v220, %v226
    %v229 = vadd.f32 %v221, %v227
    %230 = vset.pattern.permute.xlu0 11
    %231 = vperm.xlu0 %230, %v45
    %v232 = vpop.permute.xlu0 %231
    %v234 = vmul.f32 %v77, %v232
    %v235 = vmul.f32 %v78, %v232
    %v236 = vadd.f32 %v228, %v234
    %v237 = vadd.f32 %v229, %v235
    %238 = vset.pattern.permute.xlu0 12
    %239 = vperm.xlu0 %238, %v45
    %v240 = vpop.permute.xlu0 %239
    %v242 = vmul.f32 %v88, %v240
    %v243 = vmul.f32 %v89, %v240
    %v244 = vadd.f32 %v236, %v242
    %v245 = vadd.f32 %v237, %v243
    %246 = vset.pattern.permute.xlu0 13
    %247 = vperm.xlu0 %246, %v45
    %v248 = vpop.permute.xlu0 %247
    %v250 = vmul.f32 %v38, %v248
    %v251 = vmul.f32 %v39, %v248
    %v252 = vadd.f32 %v244, %v250
    %v253 = vadd.f32 %v245, %v251
    %254 = vset.pattern.permute.xlu0 14
    %255 = vperm.xlu0 %254, %v45
    %v256 = vpop.permute.xlu0 %255
    %v258 = vmul.f32 %v99, %v256
    %v259 = vmul.f32 %v100, %v256
    %v260 = vadd.f32 %v252, %v258
    %v261 = vadd.f32 %v253, %v259
    %262 = vset.pattern.permute.xlu0 15
    %263 = vperm.xlu0 %262, %v45
    %v264 = vpop.permute.xlu0 %263
    %v266 = vmul.f32 %v110, %v264
    %v267 = vmul.f32 %v111, %v264
    %v268 = vadd.f32 %v260, %v266
    %v269 = vadd.f32 %v261, %v267
    %270 = vset.pattern.permute.xlu0 16
    %271 = vperm.xlu0 %270, %v45
    %v272 = vpop.permute.xlu0 %271
    %v274 = vmul.f32 %v121, %v272
    %v275 = vmul.f32 %v122, %v272
    %v276 = vadd.f32 %v268, %v274
    %v277 = vadd.f32 %v269, %v275
    %278 = vset.pattern.permute.xlu0 17
    %279 = vperm.xlu0 %278, %v45
    %v280 = vpop.permute.xlu0 %279
    %v282 = vmul.f32 %v132, %v280
    %v283 = vmul.f32 %v133, %v280
    %v284 = vadd.f32 %v276, %v282
    %v285 = vadd.f32 %v277, %v283
    %286 = vrot.lane.b32.xlu0 %v284, 48
    %v287 = vpop.permute.xlu0 %286
    %288 = vrot.lane.b32.xlu0 %v285, 48
    %v289 = vpop.permute.xlu0 %288
    %vm290 = vcmp.lt.s32.totalorder %v41, 48
    %v291 = vsel %vm290, %v287, %v289
    %v292 = vsel %vm290, %v289, %v287
    %vm293 = vcmp.ge.s32.totalorder %v41, 48
    %vm294 = vcmp.ge.s32.totalorder %v42, 48
    %v295 = vsel %vm293, %v292, 0.0
    %v296 = vsel %vm294, %v291, 0.0
    %v297 = vadd.f32 %v214, %v295
    %v298 = vadd.f32 %v215, %v296
    %299 = vset.pattern.permute.xlu0 18
    %300 = vperm.xlu0 %299, %v45
    %v301 = vpop.permute.xlu0 %300
    %v303 = vmul.f32 %v55, %v301
    %v304 = vmul.f32 %v56, %v301
    %305 = vset.pattern.permute.xlu0 19
    %306 = vperm.xlu0 %305, %v45
    %v307 = vpop.permute.xlu0 %306
    %v309 = vmul.f32 %v66, %v307
    %v310 = vmul.f32 %v67, %v307
    %v311 = vadd.f32 %v303, %v309
    %v312 = vadd.f32 %v304, %v310
    %313 = vset.pattern.permute.xlu0 20
    %314 = vperm.xlu0 %313, %v45
    %v315 = vpop.permute.xlu0 %314
    %v317 = vmul.f32 %v77, %v315
    %v318 = vmul.f32 %v78, %v315
    %v319 = vadd.f32 %v311, %v317
    %v320 = vadd.f32 %v312, %v318
    %321 = vset.pattern.permute.xlu0 21
    %322 = vperm.xlu0 %321, %v45
    %v323 = vpop.permute.xlu0 %322
    %v325 = vmul.f32 %v88, %v323
    %v326 = vmul.f32 %v89, %v323
    %v327 = vadd.f32 %v319, %v325
    %v328 = vadd.f32 %v320, %v326
    %329 = vset.pattern.permute.xlu0 22
    %330 = vperm.xlu0 %329, %v45
    %v331 = vpop.permute.xlu0 %330
    %v333 = vmul.f32 %v38, %v331
    %v334 = vmul.f32 %v39, %v331
    %v335 = vadd.f32 %v327, %v333
    %v336 = vadd.f32 %v328, %v334
    %337 = vset.pattern.permute.xlu0 23
    %338 = vperm.xlu0 %337, %v45
    %v339 = vpop.permute.xlu0 %338
    %v341 = vmul.f32 %v99, %v339
    %v342 = vmul.f32 %v100, %v339
    %v343 = vadd.f32 %v335, %v341
    %v344 = vadd.f32 %v336, %v342
    %345 = vset.pattern.permute.xlu0 24
    %346 = vperm.xlu0 %345, %v45
    %v347 = vpop.permute.xlu0 %346
    %v349 = vmul.f32 %v110, %v347
    %v350 = vmul.f32 %v111, %v347
    %v351 = vadd.f32 %v343, %v349
    %v352 = vadd.f32 %v344, %v350
    %353 = vset.pattern.permute.xlu0 25
    %354 = vperm.xlu0 %353, %v45
    %v355 = vpop.permute.xlu0 %354
    %v357 = vmul.f32 %v121, %v355
    %v358 = vmul.f32 %v122, %v355
    %v359 = vadd.f32 %v351, %v357
    %v360 = vadd.f32 %v352, %v358
    %361 = vset.pattern.permute.xlu0 26
    %362 = vperm.xlu0 %361, %v45
    %v363 = vpop.permute.xlu0 %362
    %v365 = vmul.f32 %v132, %v363
    %v366 = vmul.f32 %v133, %v363
    %v367 = vadd.f32 %v359, %v365
    %v368 = vadd.f32 %v360, %v366
    %369 = vrot.lane.b32.xlu0 %v367, 32
    %v370 = vpop.permute.xlu0 %369
    %371 = vrot.lane.b32.xlu0 %v368, 32
    %v372 = vpop.permute.xlu0 %371
    %vm373 = vcmp.lt.s32.totalorder %v41, 32
    %v374 = vsel %vm373, %v370, %v372
    %v375 = vsel %vm373, %v372, %v370
    %vm376 = vcmp.ge.s32.totalorder %v41, 32
    %vm377 = vcmp.ge.s32.totalorder %v42, 32
    %v378 = vsel %vm376, %v375, 0.0
    %v379 = vsel %vm377, %v374, 0.0
    %v380 = vadd.f32 %v297, %v378
    %v381 = vadd.f32 %v298, %v379
    %382 = vset.pattern.permute.xlu0 27
    %383 = vperm.xlu0 %382, %v45
    %v384 = vpop.permute.xlu0 %383
    %v386 = vmul.f32 %v55, %v384
    %v387 = vmul.f32 %v56, %v384
    %388 = vset.pattern.permute.xlu0 28
    %389 = vperm.xlu0 %388, %v45
    %v390 = vpop.permute.xlu0 %389
    %v392 = vmul.f32 %v66, %v390
    %v393 = vmul.f32 %v67, %v390
    %v394 = vadd.f32 %v386, %v392
    %v395 = vadd.f32 %v387, %v393
    %396 = vset.pattern.permute.xlu0 29
    %397 = vperm.xlu0 %396, %v45
    %v398 = vpop.permute.xlu0 %397
    %v400 = vmul.f32 %v77, %v398
    %v401 = vmul.f32 %v78, %v398
    %v402 = vadd.f32 %v394, %v400
    %v403 = vadd.f32 %v395, %v401
    %404 = vset.pattern.permute.xlu0 30
    %405 = vperm.xlu0 %404, %v45
    %v406 = vpop.permute.xlu0 %405
    %v408 = vmul.f32 %v88, %v406
    %v409 = vmul.f32 %v89, %v406
    %v410 = vadd.f32 %v402, %v408
    %v411 = vadd.f32 %v403, %v409
    %412 = vset.pattern.permute.xlu0 31
    %413 = vperm.xlu0 %412, %v45
    %v414 = vpop.permute.xlu0 %413
    %v416 = vmul.f32 %v38, %v414
    %v417 = vmul.f32 %v39, %v414
    %v418 = vadd.f32 %v410, %v416
    %v419 = vadd.f32 %v411, %v417
    %420 = vset.pattern.permute.xlu0 32
    %421 = vperm.xlu0 %420, %v45
    %v422 = vpop.permute.xlu0 %421
    %v424 = vmul.f32 %v99, %v422
    %v425 = vmul.f32 %v100, %v422
    %v426 = vadd.f32 %v418, %v424
    %v427 = vadd.f32 %v419, %v425
    %428 = vset.pattern.permute.xlu0 33
    %429 = vperm.xlu0 %428, %v45
    %v430 = vpop.permute.xlu0 %429
    %v432 = vmul.f32 %v110, %v430
    %v433 = vmul.f32 %v111, %v430
    %v434 = vadd.f32 %v426, %v432
    %v435 = vadd.f32 %v427, %v433
    %436 = vset.pattern.permute.xlu0 34
    %437 = vperm.xlu0 %436, %v45
    %v438 = vpop.permute.xlu0 %437
    %v440 = vmul.f32 %v121, %v438
    %v441 = vmul.f32 %v122, %v438
    %v442 = vadd.f32 %v434, %v440
    %v443 = vadd.f32 %v435, %v441
    %444 = vset.pattern.permute.xlu0 35
    %445 = vperm.xlu0 %444, %v45
    %v446 = vpop.permute.xlu0 %445
    %v448 = vmul.f32 %v132, %v446
    %v449 = vmul.f32 %v133, %v446
    %v450 = vadd.f32 %v442, %v448
    %v451 = vadd.f32 %v443, %v449
    %452 = vrot.lane.b32.xlu0 %v450, 16
    %v453 = vpop.permute.xlu0 %452
    %454 = vrot.lane.b32.xlu0 %v451, 16
    %v455 = vpop.permute.xlu0 %454
    %vm456 = vcmp.lt.s32.totalorder %v41, 16
    %v457 = vsel %vm456, %v453, %v455
    %v458 = vsel %vm456, %v455, %v453
    %vm459 = vcmp.ge.s32.totalorder %v41, 16
    %vm460 = vcmp.ge.s32.totalorder %v42, 16
    %v461 = vsel %vm459, %v458, 0.0
    %v462 = vsel %vm460, %v457, 0.0
    %v463 = vadd.f32 %v380, %v461
    %v464 = vadd.f32 %v381, %v462
    %465 = vset.pattern.permute.xlu0 36
    %466 = vperm.xlu0 %465, %v45
    %v467 = vpop.permute.xlu0 %466
    %v469 = vmul.f32 %v55, %v467
    %v470 = vmul.f32 %v56, %v467
    %471 = vset.pattern.permute.xlu0 37
    %472 = vperm.xlu0 %471, %v45
    %v473 = vpop.permute.xlu0 %472
    %v475 = vmul.f32 %v66, %v473
    %v476 = vmul.f32 %v67, %v473
    %v477 = vadd.f32 %v469, %v475
    %v478 = vadd.f32 %v470, %v476
    %479 = vset.pattern.permute.xlu0 38
    %480 = vperm.xlu0 %479, %v45
    %v481 = vpop.permute.xlu0 %480
    %v483 = vmul.f32 %v77, %v481
    %v484 = vmul.f32 %v78, %v481
    %v485 = vadd.f32 %v477, %v483
    %v486 = vadd.f32 %v478, %v484
    %487 = vset.pattern.permute.xlu0 39
    %488 = vperm.xlu0 %487, %v45
    %v489 = vpop.permute.xlu0 %488
    %v491 = vmul.f32 %v88, %v489
    %v492 = vmul.f32 %v89, %v489
    %v493 = vadd.f32 %v485, %v491
    %v494 = vadd.f32 %v486, %v492
    %495 = vset.pattern.permute.xlu0 40
    %496 = vperm.xlu0 %495, %v45
    %v497 = vpop.permute.xlu0 %496
    %v499 = vmul.f32 %v38, %v497
    %v500 = vmul.f32 %v39, %v497
    %v501 = vadd.f32 %v493, %v499
    %v502 = vadd.f32 %v494, %v500
    %503 = vset.pattern.permute.xlu0 41
    %504 = vperm.xlu0 %503, %v45
    %v505 = vpop.permute.xlu0 %504
    %v507 = vmul.f32 %v99, %v505
    %v508 = vmul.f32 %v100, %v505
    %v509 = vadd.f32 %v501, %v507
    %v510 = vadd.f32 %v502, %v508
    %511 = vset.pattern.permute.xlu0 42
    %512 = vperm.xlu0 %511, %v45
    %v513 = vpop.permute.xlu0 %512
    %v515 = vmul.f32 %v110, %v513
    %v516 = vmul.f32 %v111, %v513
    %v517 = vadd.f32 %v509, %v515
    %v518 = vadd.f32 %v510, %v516
    %519 = vset.pattern.permute.xlu0 43
    %520 = vperm.xlu0 %519, %v45
    %v521 = vpop.permute.xlu0 %520
    %v523 = vmul.f32 %v121, %v521
    %v524 = vmul.f32 %v122, %v521
    %v525 = vadd.f32 %v517, %v523
    %v526 = vadd.f32 %v518, %v524
    %527 = vset.pattern.permute.xlu0 44
    %528 = vperm.xlu0 %527, %v45
    %v529 = vpop.permute.xlu0 %528
    %v531 = vmul.f32 %v132, %v529
    %v532 = vmul.f32 %v133, %v529
    %v533 = vadd.f32 %v525, %v531
    %v534 = vadd.f32 %v526, %v532
    %v535 = vadd.f32 %v463, %v533
    %v536 = vadd.f32 %v464, %v534
    %537 = vset.pattern.permute.xlu0 45
    %538 = vperm.xlu0 %537, %v45
    %v539 = vpop.permute.xlu0 %538
    %v541 = vmul.f32 %v55, %v539
    %v542 = vmul.f32 %v56, %v539
    %543 = vset.pattern.permute.xlu0 46
    %544 = vperm.xlu0 %543, %v45
    %v545 = vpop.permute.xlu0 %544
    %v547 = vmul.f32 %v66, %v545
    %v548 = vmul.f32 %v67, %v545
    %v549 = vadd.f32 %v541, %v547
    %v550 = vadd.f32 %v542, %v548
    %551 = vset.pattern.permute.xlu0 47
    %552 = vperm.xlu0 %551, %v45
    %v553 = vpop.permute.xlu0 %552
    %v555 = vmul.f32 %v77, %v553
    %v556 = vmul.f32 %v78, %v553
    %v557 = vadd.f32 %v549, %v555
    %v558 = vadd.f32 %v550, %v556
    %559 = vset.pattern.permute.xlu0 48
    %560 = vperm.xlu0 %559, %v45
    %v561 = vpop.permute.xlu0 %560
    %v563 = vmul.f32 %v88, %v561
    %v564 = vmul.f32 %v89, %v561
    %v565 = vadd.f32 %v557, %v563
    %v566 = vadd.f32 %v558, %v564
    %567 = vset.pattern.permute.xlu0 49
    %568 = vperm.xlu0 %567, %v45
    %v569 = vpop.permute.xlu0 %568
    %v571 = vmul.f32 %v38, %v569
    %v572 = vmul.f32 %v39, %v569
    %v573 = vadd.f32 %v565, %v571
    %v574 = vadd.f32 %v566, %v572
    %575 = vset.pattern.permute.xlu0 50
    %576 = vperm.xlu0 %575, %v45
    %v577 = vpop.permute.xlu0 %576
    %v579 = vmul.f32 %v99, %v577
    %v580 = vmul.f32 %v100, %v577
    %v581 = vadd.f32 %v573, %v579
    %v582 = vadd.f32 %v574, %v580
    %583 = vset.pattern.permute.xlu0 51
    %584 = vperm.xlu0 %583, %v45
    %v585 = vpop.permute.xlu0 %584
    %v587 = vmul.f32 %v110, %v585
    %v588 = vmul.f32 %v111, %v585
    %v589 = vadd.f32 %v581, %v587
    %v590 = vadd.f32 %v582, %v588
    %591 = vset.pattern.permute.xlu0 52
    %592 = vperm.xlu0 %591, %v45
    %v593 = vpop.permute.xlu0 %592
    %v595 = vmul.f32 %v121, %v593
    %v596 = vmul.f32 %v122, %v593
    %v597 = vadd.f32 %v589, %v595
    %v598 = vadd.f32 %v590, %v596
    %599 = vset.pattern.permute.xlu0 53
    %600 = vperm.xlu0 %599, %v45
    %v601 = vpop.permute.xlu0 %600
    %v603 = vmul.f32 %v132, %v601
    %v604 = vmul.f32 %v133, %v601
    %v605 = vadd.f32 %v597, %v603
    %v606 = vadd.f32 %v598, %v604
    %607 = vrot.lane.b32.xlu0 %v605, 112
    %v608 = vpop.permute.xlu0 %607
    %609 = vrot.lane.b32.xlu0 %v606, 112
    %v610 = vpop.permute.xlu0 %609
    %vm611 = vcmp.lt.s32.totalorder %v41, 112
    %v612 = vsel %vm611, %v608, %v610
    %v613 = vsel %vm611, %v610, %v608
    %vm614 = vcmp.lt.s32.totalorder %v41, 240
    %vm615 = vcmp.lt.s32.totalorder %v42, 240
    %v616 = vsel %vm614, %v612, 0.0
    %v617 = vsel %vm615, %v613, 0.0
    %v618 = vadd.f32 %v535, %v616
    %v619 = vadd.f32 %v536, %v617
    %620 = vset.pattern.permute.xlu0 54
    %621 = vperm.xlu0 %620, %v45
    %v622 = vpop.permute.xlu0 %621
    %v624 = vmul.f32 %v55, %v622
    %v625 = vmul.f32 %v56, %v622
    %626 = vset.pattern.permute.xlu0 55
    %627 = vperm.xlu0 %626, %v45
    %v628 = vpop.permute.xlu0 %627
    %v630 = vmul.f32 %v66, %v628
    %v631 = vmul.f32 %v67, %v628
    %v632 = vadd.f32 %v624, %v630
    %v633 = vadd.f32 %v625, %v631
    %634 = vset.pattern.permute.xlu0 56
    %635 = vperm.xlu0 %634, %v45
    %v636 = vpop.permute.xlu0 %635
    %v638 = vmul.f32 %v77, %v636
    %v639 = vmul.f32 %v78, %v636
    %v640 = vadd.f32 %v632, %v638
    %v641 = vadd.f32 %v633, %v639
    %642 = vset.pattern.permute.xlu0 57
    %643 = vperm.xlu0 %642, %v45
    %v644 = vpop.permute.xlu0 %643
    %v646 = vmul.f32 %v88, %v644
    %v647 = vmul.f32 %v89, %v644
    %v648 = vadd.f32 %v640, %v646
    %v649 = vadd.f32 %v641, %v647
    %650 = vset.pattern.permute.xlu0 58
    %651 = vperm.xlu0 %650, %v45
    %v652 = vpop.permute.xlu0 %651
    %v654 = vmul.f32 %v38, %v652
    %v655 = vmul.f32 %v39, %v652
    %v656 = vadd.f32 %v648, %v654
    %v657 = vadd.f32 %v649, %v655
    %658 = vset.pattern.permute.xlu0 59
    %659 = vperm.xlu0 %658, %v45
    %v660 = vpop.permute.xlu0 %659
    %v662 = vmul.f32 %v99, %v660
    %v663 = vmul.f32 %v100, %v660
    %v664 = vadd.f32 %v656, %v662
    %v665 = vadd.f32 %v657, %v663
    %666 = vset.pattern.permute.xlu0 60
    %667 = vperm.xlu0 %666, %v45
    %v668 = vpop.permute.xlu0 %667
    %v670 = vmul.f32 %v110, %v668
    %v671 = vmul.f32 %v111, %v668
    %v672 = vadd.f32 %v664, %v670
    %v673 = vadd.f32 %v665, %v671
    %674 = vset.pattern.permute.xlu0 61
    %675 = vperm.xlu0 %674, %v45
    %v676 = vpop.permute.xlu0 %675
    %v678 = vmul.f32 %v121, %v676
    %v679 = vmul.f32 %v122, %v676
    %v680 = vadd.f32 %v672, %v678
    %v681 = vadd.f32 %v673, %v679
    %682 = vset.pattern.permute.xlu0 62
    %683 = vperm.xlu0 %682, %v45
    %v684 = vpop.permute.xlu0 %683
    %v686 = vmul.f32 %v132, %v684
    %v687 = vmul.f32 %v133, %v684
    %v688 = vadd.f32 %v680, %v686
    %v689 = vadd.f32 %v681, %v687
    %690 = vrot.lane.b32.xlu0 %v688, 96
    %v691 = vpop.permute.xlu0 %690
    %692 = vrot.lane.b32.xlu0 %v689, 96
    %v693 = vpop.permute.xlu0 %692
    %vm694 = vcmp.lt.s32.totalorder %v41, 96
    %v695 = vsel %vm694, %v691, %v693
    %v696 = vsel %vm694, %v693, %v691
    %vm697 = vcmp.lt.s32.totalorder %v41, 224
    %vm698 = vcmp.lt.s32.totalorder %v42, 224
    %v699 = vsel %vm697, %v695, 0.0
    %v700 = vsel %vm698, %v696, 0.0
    %v701 = vadd.f32 %v618, %v699
    %v702 = vadd.f32 %v619, %v700
    %703 = vset.pattern.permute.xlu0 63
    %704 = vperm.xlu0 %703, %v45
    %v705 = vpop.permute.xlu0 %704
    %v707 = vmul.f32 %v55, %v705
    %v708 = vmul.f32 %v56, %v705
    %709 = vset.pattern.permute.xlu0 64
    %710 = vperm.xlu0 %709, %v45
    %v711 = vpop.permute.xlu0 %710
    %v713 = vmul.f32 %v66, %v711
    %v714 = vmul.f32 %v67, %v711
    %v715 = vadd.f32 %v707, %v713
    %v716 = vadd.f32 %v708, %v714
    %717 = vset.pattern.permute.xlu0 65
    %718 = vperm.xlu0 %717, %v45
    %v719 = vpop.permute.xlu0 %718
    %v721 = vmul.f32 %v77, %v719
    %v722 = vmul.f32 %v78, %v719
    %v723 = vadd.f32 %v715, %v721
    %v724 = vadd.f32 %v716, %v722
    %725 = vset.pattern.permute.xlu0 66
    %726 = vperm.xlu0 %725, %v45
    %v727 = vpop.permute.xlu0 %726
    %v729 = vmul.f32 %v88, %v727
    %v730 = vmul.f32 %v89, %v727
    %v731 = vadd.f32 %v723, %v729
    %v732 = vadd.f32 %v724, %v730
    %733 = vset.pattern.permute.xlu0 67
    %734 = vperm.xlu0 %733, %v45
    %v735 = vpop.permute.xlu0 %734
    %v737 = vmul.f32 %v38, %v735
    %v738 = vmul.f32 %v39, %v735
    %v739 = vadd.f32 %v731, %v737
    %v740 = vadd.f32 %v732, %v738
    %741 = vset.pattern.permute.xlu0 68
    %742 = vperm.xlu0 %741, %v45
    %v743 = vpop.permute.xlu0 %742
    %v745 = vmul.f32 %v99, %v743
    %v746 = vmul.f32 %v100, %v743
    %v747 = vadd.f32 %v739, %v745
    %v748 = vadd.f32 %v740, %v746
    %749 = vset.pattern.permute.xlu0 69
    %750 = vperm.xlu0 %749, %v45
    %v751 = vpop.permute.xlu0 %750
    %v753 = vmul.f32 %v110, %v751
    %v754 = vmul.f32 %v111, %v751
    %v755 = vadd.f32 %v747, %v753
    %v756 = vadd.f32 %v748, %v754
    %757 = vset.pattern.permute.xlu0 70
    %758 = vperm.xlu0 %757, %v45
    %v759 = vpop.permute.xlu0 %758
    %v761 = vmul.f32 %v121, %v759
    %v762 = vmul.f32 %v122, %v759
    %v763 = vadd.f32 %v755, %v761
    %v764 = vadd.f32 %v756, %v762
    %765 = vset.pattern.permute.xlu0 71
    %766 = vperm.xlu0 %765, %v45
    %v767 = vpop.permute.xlu0 %766
    %v769 = vmul.f32 %v132, %v767
    %v770 = vmul.f32 %v133, %v767
    %v771 = vadd.f32 %v763, %v769
    %v772 = vadd.f32 %v764, %v770
    %773 = vrot.lane.b32.xlu0 %v771, 80
    %v774 = vpop.permute.xlu0 %773
    %775 = vrot.lane.b32.xlu0 %v772, 80
    %v776 = vpop.permute.xlu0 %775
    %vm777 = vcmp.lt.s32.totalorder %v41, 80
    %v778 = vsel %vm777, %v774, %v776
    %v779 = vsel %vm777, %v776, %v774
    %vm780 = vcmp.lt.s32.totalorder %v41, 208
    %vm781 = vcmp.lt.s32.totalorder %v42, 208
    %v782 = vsel %vm780, %v778, 0.0
    %v783 = vsel %vm781, %v779, 0.0
    %v784 = vadd.f32 %v701, %v782
    %v785 = vadd.f32 %v702, %v783
    %786 = vset.pattern.permute.xlu0 72
    %787 = vperm.xlu0 %786, %v45
    %v788 = vpop.permute.xlu0 %787
    %v790 = vmul.f32 %v55, %v788
    %v791 = vmul.f32 %v56, %v788
    %792 = vset.pattern.permute.xlu0 73
    %793 = vperm.xlu0 %792, %v45
    %v794 = vpop.permute.xlu0 %793
    %v796 = vmul.f32 %v66, %v794
    %v797 = vmul.f32 %v67, %v794
    %v798 = vadd.f32 %v790, %v796
    %v799 = vadd.f32 %v791, %v797
    %800 = vset.pattern.permute.xlu0 74
    %801 = vperm.xlu0 %800, %v45
    %v802 = vpop.permute.xlu0 %801
    %v804 = vmul.f32 %v77, %v802
    %v805 = vmul.f32 %v78, %v802
    %v806 = vadd.f32 %v798, %v804
    %v807 = vadd.f32 %v799, %v805
    %808 = vset.pattern.permute.xlu0 75
    %809 = vperm.xlu0 %808, %v45
    %v810 = vpop.permute.xlu0 %809
    %v812 = vmul.f32 %v88, %v810
    %v813 = vmul.f32 %v89, %v810
    %v814 = vadd.f32 %v806, %v812
    %v815 = vadd.f32 %v807, %v813
    %816 = vset.pattern.permute.xlu0 76
    %817 = vperm.xlu0 %816, %v45
    %v818 = vpop.permute.xlu0 %817
    %v820 = vmul.f32 %v38, %v818
    %v821 = vmul.f32 %v39, %v818
    %v822 = vadd.f32 %v814, %v820
    %v823 = vadd.f32 %v815, %v821
    %824 = vset.pattern.permute.xlu0 77
    %825 = vperm.xlu0 %824, %v45
    %v826 = vpop.permute.xlu0 %825
    %v828 = vmul.f32 %v99, %v826
    %v829 = vmul.f32 %v100, %v826
    %v830 = vadd.f32 %v822, %v828
    %v831 = vadd.f32 %v823, %v829
    %832 = vset.pattern.permute.xlu0 78
    %833 = vperm.xlu0 %832, %v45
    %v834 = vpop.permute.xlu0 %833
    %v836 = vmul.f32 %v110, %v834
    %v837 = vmul.f32 %v111, %v834
    %v838 = vadd.f32 %v830, %v836
    %v839 = vadd.f32 %v831, %v837
    %840 = vset.pattern.permute.xlu0 79
    %841 = vperm.xlu0 %840, %v45
    %v842 = vpop.permute.xlu0 %841
    %v844 = vmul.f32 %v121, %v842
    %v845 = vmul.f32 %v122, %v842
    %v846 = vadd.f32 %v838, %v844
    %v847 = vadd.f32 %v839, %v845
    %848 = vset.pattern.permute.xlu0 80
    %849 = vperm.xlu0 %848, %v45
    %v850 = vpop.permute.xlu0 %849
    %v852 = vmul.f32 %v132, %v850
    %v853 = vmul.f32 %v133, %v850
    %v854 = vadd.f32 %v846, %v852
    %v855 = vadd.f32 %v847, %v853
    %856 = vrot.lane.b32.xlu0 %v854, 64
    %v857 = vpop.permute.xlu0 %856
    %858 = vrot.lane.b32.xlu0 %v855, 64
    %v859 = vpop.permute.xlu0 %858
    %v860 = vsel %vm209, %v857, %v859
    %v861 = vsel %vm209, %v859, %v857
    %vm862 = vcmp.lt.s32.totalorder %v41, 192
    %vm863 = vcmp.lt.s32.totalorder %v42, 192
    %v864 = vsel %vm862, %v860, 0.0
    %v865 = vsel %vm863, %v861, 0.0
    %v866 = vadd.f32 %v784, %v864
    %v867 = vadd.f32 %v785, %v865
    %868 = vset.pattern.permute.xlu0 81
    %869 = vperm.xlu0 %868, %v45
    %v870 = vpop.permute.xlu0 %869
    %v872 = vlaneseq
    %v873 = vshrl.u32 %v872, 7
    %v874 = vsub.s32 0, %v873
    %v875 = vrot.slane %v866, %v874
    %v876 = vlaneseq
    %v877 = vshrl.u32 %v876, 7
    %v878 = vsub.s32 0, %v877
    %v879 = vrot.slane %v867, %v878
    %v880 = vmul.f32 %v870, %v875
    %v881 = vmul.f32 %v870, %v879
    %882 = vset.pattern.permute.xlu0 89
    %883 = vperm.xlu0 %882, %v45
    %v884 = vpop.permute.xlu0 %883
    %v886 = vadd.f32 %v884, %v880
    %v887 = vadd.f32 %v884, %v881
    %888 = vset.pattern.permute.xlu0 82
    %889 = vperm.xlu0 %888, %v45
    %v890 = vpop.permute.xlu0 %889
    %v892 = vlaneseq
    %v893 = vshrl.u32 %v892, 7
    %v894 = vsub.s32 1, %v893
    %v895 = vrot.slane %v866, %v894
    %v896 = vlaneseq
    %v897 = vshrl.u32 %v896, 7
    %v898 = vsub.s32 1, %v897
    %v899 = vrot.slane %v867, %v898
    %v900 = vmul.f32 %v890, %v895
    %v901 = vmul.f32 %v890, %v899
    %v902 = vadd.f32 %v886, %v900
    %v903 = vadd.f32 %v887, %v901
    %904 = vset.pattern.permute.xlu0 83
    %905 = vperm.xlu0 %904, %v45
    %v906 = vpop.permute.xlu0 %905
    %v908 = vlaneseq
    %v909 = vshrl.u32 %v908, 7
    %v910 = vsub.s32 2, %v909
    %v911 = vrot.slane %v866, %v910
    %v912 = vlaneseq
    %v913 = vshrl.u32 %v912, 7
    %v914 = vsub.s32 2, %v913
    %v915 = vrot.slane %v867, %v914
    %v916 = vmul.f32 %v906, %v911
    %v917 = vmul.f32 %v906, %v915
    %v918 = vadd.f32 %v902, %v916
    %v919 = vadd.f32 %v903, %v917
    %920 = vset.pattern.permute.xlu0 84
    %921 = vperm.xlu0 %920, %v45
    %v922 = vpop.permute.xlu0 %921
    %v924 = vlaneseq
    %v925 = vshrl.u32 %v924, 7
    %v926 = vsub.s32 3, %v925
    %v927 = vrot.slane %v866, %v926
    %v928 = vlaneseq
    %v929 = vshrl.u32 %v928, 7
    %v930 = vsub.s32 3, %v929
    %v931 = vrot.slane %v867, %v930
    %v932 = vmul.f32 %v922, %v927
    %v933 = vmul.f32 %v922, %v931
    %v934 = vadd.f32 %v918, %v932
    %v935 = vadd.f32 %v919, %v933
    %936 = vset.pattern.permute.xlu0 85
    %937 = vperm.xlu0 %936, %v45
    %v938 = vpop.permute.xlu0 %937
    %v940 = vlaneseq
    %v941 = vshrl.u32 %v940, 7
    %v942 = vsub.s32 4, %v941
    %v943 = vrot.slane %v866, %v942
    %v944 = vlaneseq
    %v945 = vshrl.u32 %v944, 7
    %v946 = vsub.s32 4, %v945
    %v947 = vrot.slane %v867, %v946
    %v948 = vmul.f32 %v938, %v943
    %v949 = vmul.f32 %v938, %v947
    %v950 = vadd.f32 %v934, %v948
    %v951 = vadd.f32 %v935, %v949
    %952 = vset.pattern.permute.xlu0 86
    %953 = vperm.xlu0 %952, %v45
    %v954 = vpop.permute.xlu0 %953
    %v956 = vlaneseq
    %v957 = vshrl.u32 %v956, 7
    %v958 = vsub.s32 5, %v957
    %v959 = vrot.slane %v866, %v958
    %v960 = vlaneseq
    %v961 = vshrl.u32 %v960, 7
    %v962 = vsub.s32 5, %v961
    %v963 = vrot.slane %v867, %v962
    %v964 = vmul.f32 %v954, %v959
    %v965 = vmul.f32 %v954, %v963
    %v966 = vadd.f32 %v950, %v964
    %v967 = vadd.f32 %v951, %v965
    %968 = vset.pattern.permute.xlu0 87
    %969 = vperm.xlu0 %968, %v45
    %v970 = vpop.permute.xlu0 %969
    %v972 = vlaneseq
    %v973 = vshrl.u32 %v972, 7
    %v974 = vsub.s32 6, %v973
    %v975 = vrot.slane %v866, %v974
    %v976 = vlaneseq
    %v977 = vshrl.u32 %v976, 7
    %v978 = vsub.s32 6, %v977
    %v979 = vrot.slane %v867, %v978
    %v980 = vmul.f32 %v970, %v975
    %v981 = vmul.f32 %v970, %v979
    %v982 = vadd.f32 %v966, %v980
    %v983 = vadd.f32 %v967, %v981
    %984 = vset.pattern.permute.xlu0 88
    %985 = vperm.xlu0 %984, %v45
    %v986 = vpop.permute.xlu0 %985
    %v988 = vlaneseq
    %v989 = vshrl.u32 %v988, 7
    %v990 = vsub.s32 7, %v989
    %v991 = vrot.slane %v866, %v990
    %v992 = vlaneseq
    %v993 = vshrl.u32 %v992, 7
    %v994 = vsub.s32 7, %v993
    %v995 = vrot.slane %v867, %v994
    %v996 = vmul.f32 %v986, %v991
    %v997 = vmul.f32 %v986, %v995
    %v998 = vadd.f32 %v982, %v996
    %v999 = vadd.f32 %v983, %v997
    %v1000 = vmax.f32 %v998, 0.0
    %v1001 = vmax.f32 %v999, 0.0
    %s1002 = scalar_lea.vmem [#allocation5], 8
    %v1003 = vld [vmem:[%s1002] sm:$0xff]
    %1004 = vrot.lane.b32.xlu0 %v1000, 4
    %v1005 = vpop.permute.xlu0 %1004
    %1006 = vrot.lane.b32.xlu0 %v1001, 4
    %v1007 = vpop.permute.xlu0 %1006
    %v1008 = vsel %vm50, %v1005, %v1007
    %v1009 = vsel %vm50, %v1007, %v1005
    %v1010 = vsel %vm53, %v1009, 0.0
    %v1011 = vsel %vm54, %v1008, 0.0
    %1012 = vrot.lane.b32.xlu0 %v1000, 3
    %v1013 = vpop.permute.xlu0 %1012
    %1014 = vrot.lane.b32.xlu0 %v1001, 3
    %v1015 = vpop.permute.xlu0 %1014
    %v1016 = vsel %vm61, %v1013, %v1015
    %v1017 = vsel %vm61, %v1015, %v1013
    %v1018 = vsel %vm64, %v1017, 0.0
    %v1019 = vsel %vm65, %v1016, 0.0
    %1020 = vrot.lane.b32.xlu0 %v1000, 2
    %v1021 = vpop.permute.xlu0 %1020
    %1022 = vrot.lane.b32.xlu0 %v1001, 2
    %v1023 = vpop.permute.xlu0 %1022
    %v1024 = vsel %vm72, %v1021, %v1023
    %v1025 = vsel %vm72, %v1023, %v1021
    %v1026 = vsel %vm75, %v1025, 0.0
    %v1027 = vsel %vm76, %v1024, 0.0
    %1028 = vrot.lane.b32.xlu0 %v1000, 1
    %v1029 = vpop.permute.xlu0 %1028
    %1030 = vrot.lane.b32.xlu0 %v1001, 1
    %v1031 = vpop.permute.xlu0 %1030
    %v1032 = vsel %vm83, %v1029, %v1031
    %v1033 = vsel %vm83, %v1031, %v1029
    %v1034 = vsel %vm86, %v1033, 0.0
    %v1035 = vsel %vm87, %v1032, 0.0
    %1036 = vrot.lane.b32.xlu0 %v1000, 127
    %v1037 = vpop.permute.xlu0 %1036
    %1038 = vrot.lane.b32.xlu0 %v1001, 127
    %v1039 = vpop.permute.xlu0 %1038
    %v1040 = vsel %vm94, %v1037, %v1039
    %v1041 = vsel %vm94, %v1039, %v1037
    %v1042 = vsel %vm97, %v1040, 0.0
    %v1043 = vsel %vm98, %v1041, 0.0
    %1044 = vrot.lane.b32.xlu0 %v1000, 126
    %v1045 = vpop.permute.xlu0 %1044
    %1046 = vrot.lane.b32.xlu0 %v1001, 126
    %v1047 = vpop.permute.xlu0 %1046
    %v1048 = vsel %vm105, %v1045, %v1047
    %v1049 = vsel %vm105, %v1047, %v1045
    %v1050 = vsel %vm108, %v1048, 0.0
    %v1051 = vsel %vm109, %v1049, 0.0
    %1052 = vrot.lane.b32.xlu0 %v1000, 125
    %v1053 = vpop.permute.xlu0 %1052
    %1054 = vrot.lane.b32.xlu0 %v1001, 125
    %v1055 = vpop.permute.xlu0 %1054
    %v1056 = vsel %vm116, %v1053, %v1055
    %v1057 = vsel %vm116, %v1055, %v1053
    %v1058 = vsel %vm119, %v1056, 0.0
    %v1059 = vsel %vm120, %v1057, 0.0
    %1060 = vrot.lane.b32.xlu0 %v1000, 124
    %v1061 = vpop.permute.xlu0 %1060
    %1062 = vrot.lane.b32.xlu0 %v1001, 124
    %v1063 = vpop.permute.xlu0 %1062
    %v1064 = vsel %vm127, %v1061, %v1063
    %v1065 = vsel %vm127, %v1063, %v1061
    %v1066 = vsel %vm130, %v1064, 0.0
    %v1067 = vsel %vm131, %v1065, 0.0
    %1069 = vset.pattern.permute.xlu0 0
    %1070 = vperm.xlu0 %1069, %v1003
    %v1071 = vpop.permute.xlu0 %1070
    %v1073 = vmul.f32 %v1010, %v1071
    %v1074 = vmul.f32 %v1011, %v1071
    %1075 = vset.pattern.permute.xlu0 1
    %1076 = vperm.xlu0 %1075, %v1003
    %v1077 = vpop.permute.xlu0 %1076
    %v1079 = vmul.f32 %v1018, %v1077
    %v1080 = vmul.f32 %v1019, %v1077
    %v1081 = vadd.f32 %v1073, %v1079
    %v1082 = vadd.f32 %v1074, %v1080
    %1083 = vset.pattern.permute.xlu0 2
    %1084 = vperm.xlu0 %1083, %v1003
    %v1085 = vpop.permute.xlu0 %1084
    %v1087 = vmul.f32 %v1026, %v1085
    %v1088 = vmul.f32 %v1027, %v1085
    %v1089 = vadd.f32 %v1081, %v1087
    %v1090 = vadd.f32 %v1082, %v1088
    %1091 = vset.pattern.permute.xlu0 3
    %1092 = vperm.xlu0 %1091, %v1003
    %v1093 = vpop.permute.xlu0 %1092
    %v1095 = vmul.f32 %v1034, %v1093
    %v1096 = vmul.f32 %v1035, %v1093
    %v1097 = vadd.f32 %v1089, %v1095
    %v1098 = vadd.f32 %v1090, %v1096
    %1099 = vset.pattern.permute.xlu0 4
    %1100 = vperm.xlu0 %1099, %v1003
    %v1101 = vpop.permute.xlu0 %1100
    %v1103 = vmul.f32 %v1000, %v1101
    %v1104 = vmul.f32 %v1001, %v1101
    %v1105 = vadd.f32 %v1097, %v1103
    %v1106 = vadd.f32 %v1098, %v1104
    %1107 = vset.pattern.permute.xlu0 5
    %1108 = vperm.xlu0 %1107, %v1003
    %v1109 = vpop.permute.xlu0 %1108
    %v1111 = vmul.f32 %v1042, %v1109
    %v1112 = vmul.f32 %v1043, %v1109
    %v1113 = vadd.f32 %v1105, %v1111
    %v1114 = vadd.f32 %v1106, %v1112
    %1115 = vset.pattern.permute.xlu0 6
    %1116 = vperm.xlu0 %1115, %v1003
    %v1117 = vpop.permute.xlu0 %1116
    %v1119 = vmul.f32 %v1050, %v1117
    %v1120 = vmul.f32 %v1051, %v1117
    %v1121 = vadd.f32 %v1113, %v1119
    %v1122 = vadd.f32 %v1114, %v1120
    %1123 = vset.pattern.permute.xlu0 7
    %1124 = vperm.xlu0 %1123, %v1003
    %v1125 = vpop.permute.xlu0 %1124
    %v1127 = vmul.f32 %v1058, %v1125
    %v1128 = vmul.f32 %v1059, %v1125
    %v1129 = vadd.f32 %v1121, %v1127
    %v1130 = vadd.f32 %v1122, %v1128
    %1131 = vset.pattern.permute.xlu0 8
    %1132 = vperm.xlu0 %1131, %v1003
    %v1133 = vpop.permute.xlu0 %1132
    %v1135 = vmul.f32 %v1066, %v1133
    %v1136 = vmul.f32 %v1067, %v1133
    %v1137 = vadd.f32 %v1129, %v1135
    %v1138 = vadd.f32 %v1130, %v1136
    %1139 = vrot.lane.b32.xlu0 %v1137, 64
    %v1140 = vpop.permute.xlu0 %1139
    %1141 = vrot.lane.b32.xlu0 %v1138, 64
    %v1142 = vpop.permute.xlu0 %1141
    %v1143 = vsel %vm209, %v1140, %v1142
    %v1144 = vsel %vm209, %v1142, %v1140
    %v1145 = vsel %vm212, %v1144, 0.0
    %v1146 = vsel %vm213, %v1143, 0.0
    %1147 = vset.pattern.permute.xlu0 9
    %1148 = vperm.xlu0 %1147, %v1003
    %v1149 = vpop.permute.xlu0 %1148
    %v1151 = vmul.f32 %v1010, %v1149
    %v1152 = vmul.f32 %v1011, %v1149
    %1153 = vset.pattern.permute.xlu0 10
    %1154 = vperm.xlu0 %1153, %v1003
    %v1155 = vpop.permute.xlu0 %1154
    %v1157 = vmul.f32 %v1018, %v1155
    %v1158 = vmul.f32 %v1019, %v1155
    %v1159 = vadd.f32 %v1151, %v1157
    %v1160 = vadd.f32 %v1152, %v1158
    %1161 = vset.pattern.permute.xlu0 11
    %1162 = vperm.xlu0 %1161, %v1003
    %v1163 = vpop.permute.xlu0 %1162
    %v1165 = vmul.f32 %v1026, %v1163
    %v1166 = vmul.f32 %v1027, %v1163
    %v1167 = vadd.f32 %v1159, %v1165
    %v1168 = vadd.f32 %v1160, %v1166
    %1169 = vset.pattern.permute.xlu0 12
    %1170 = vperm.xlu0 %1169, %v1003
    %v1171 = vpop.permute.xlu0 %1170
    %v1173 = vmul.f32 %v1034, %v1171
    %v1174 = vmul.f32 %v1035, %v1171
    %v1175 = vadd.f32 %v1167, %v1173
    %v1176 = vadd.f32 %v1168, %v1174
    %1177 = vset.pattern.permute.xlu0 13
    %1178 = vperm.xlu0 %1177, %v1003
    %v1179 = vpop.permute.xlu0 %1178
    %v1181 = vmul.f32 %v1000, %v1179
    %v1182 = vmul.f32 %v1001, %v1179
    %v1183 = vadd.f32 %v1175, %v1181
    %v1184 = vadd.f32 %v1176, %v1182
    %1185 = vset.pattern.permute.xlu0 14
    %1186 = vperm.xlu0 %1185, %v1003
    %v1187 = vpop.permute.xlu0 %1186
    %v1189 = vmul.f32 %v1042, %v1187
    %v1190 = vmul.f32 %v1043, %v1187
    %v1191 = vadd.f32 %v1183, %v1189
    %v1192 = vadd.f32 %v1184, %v1190
    %1193 = vset.pattern.permute.xlu0 15
    %1194 = vperm.xlu0 %1193, %v1003
    %v1195 = vpop.permute.xlu0 %1194
    %v1197 = vmul.f32 %v1050, %v1195
    %v1198 = vmul.f32 %v1051, %v1195
    %v1199 = vadd.f32 %v1191, %v1197
    %v1200 = vadd.f32 %v1192, %v1198
    %1201 = vset.pattern.permute.xlu0 16
    %1202 = vperm.xlu0 %1201, %v1003
    %v1203 = vpop.permute.xlu0 %1202
    %v1205 = vmul.f32 %v1058, %v1203
    %v1206 = vmul.f32 %v1059, %v1203
    %v1207 = vadd.f32 %v1199, %v1205
    %v1208 = vadd.f32 %v1200, %v1206
    %1209 = vset.pattern.permute.xlu0 17
    %1210 = vperm.xlu0 %1209, %v1003
    %v1211 = vpop.permute.xlu0 %1210
    %v1213 = vmul.f32 %v1066, %v1211
    %v1214 = vmul.f32 %v1067, %v1211
    %v1215 = vadd.f32 %v1207, %v1213
    %v1216 = vadd.f32 %v1208, %v1214
    %1217 = vrot.lane.b32.xlu0 %v1215, 48
    %v1218 = vpop.permute.xlu0 %1217
    %1219 = vrot.lane.b32.xlu0 %v1216, 48
    %v1220 = vpop.permute.xlu0 %1219
    %v1221 = vsel %vm290, %v1218, %v1220
    %v1222 = vsel %vm290, %v1220, %v1218
    %v1223 = vsel %vm293, %v1222, 0.0
    %v1224 = vsel %vm294, %v1221, 0.0
    %v1225 = vadd.f32 %v1145, %v1223
    %v1226 = vadd.f32 %v1146, %v1224
    %1227 = vset.pattern.permute.xlu0 18
    %1228 = vperm.xlu0 %1227, %v1003
    %v1229 = vpop.permute.xlu0 %1228
    %v1231 = vmul.f32 %v1010, %v1229
    %v1232 = vmul.f32 %v1011, %v1229
    %1233 = vset.pattern.permute.xlu0 19
    %1234 = vperm.xlu0 %1233, %v1003
    %v1235 = vpop.permute.xlu0 %1234
    %v1237 = vmul.f32 %v1018, %v1235
    %v1238 = vmul.f32 %v1019, %v1235
    %v1239 = vadd.f32 %v1231, %v1237
    %v1240 = vadd.f32 %v1232, %v1238
    %1241 = vset.pattern.permute.xlu0 20
    %1242 = vperm.xlu0 %1241, %v1003
    %v1243 = vpop.permute.xlu0 %1242
    %v1245 = vmul.f32 %v1026, %v1243
    %v1246 = vmul.f32 %v1027, %v1243
    %v1247 = vadd.f32 %v1239, %v1245
    %v1248 = vadd.f32 %v1240, %v1246
    %1249 = vset.pattern.permute.xlu0 21
    %1250 = vperm.xlu0 %1249, %v1003
    %v1251 = vpop.permute.xlu0 %1250
    %v1253 = vmul.f32 %v1034, %v1251
    %v1254 = vmul.f32 %v1035, %v1251
    %v1255 = vadd.f32 %v1247, %v1253
    %v1256 = vadd.f32 %v1248, %v1254
    %1257 = vset.pattern.permute.xlu0 22
    %1258 = vperm.xlu0 %1257, %v1003
    %v1259 = vpop.permute.xlu0 %1258
    %v1261 = vmul.f32 %v1000, %v1259
    %v1262 = vmul.f32 %v1001, %v1259
    %v1263 = vadd.f32 %v1255, %v1261
    %v1264 = vadd.f32 %v1256, %v1262
    %1265 = vset.pattern.permute.xlu0 23
    %1266 = vperm.xlu0 %1265, %v1003
    %v1267 = vpop.permute.xlu0 %1266
    %v1269 = vmul.f32 %v1042, %v1267
    %v1270 = vmul.f32 %v1043, %v1267
    %v1271 = vadd.f32 %v1263, %v1269
    %v1272 = vadd.f32 %v1264, %v1270
    %1273 = vset.pattern.permute.xlu0 24
    %1274 = vperm.xlu0 %1273, %v1003
    %v1275 = vpop.permute.xlu0 %1274
    %v1277 = vmul.f32 %v1050, %v1275
    %v1278 = vmul.f32 %v1051, %v1275
    %v1279 = vadd.f32 %v1271, %v1277
    %v1280 = vadd.f32 %v1272, %v1278
    %1281 = vset.pattern.permute.xlu0 25
    %1282 = vperm.xlu0 %1281, %v1003
    %v1283 = vpop.permute.xlu0 %1282
    %v1285 = vmul.f32 %v1058, %v1283
    %v1286 = vmul.f32 %v1059, %v1283
    %v1287 = vadd.f32 %v1279, %v1285
    %v1288 = vadd.f32 %v1280, %v1286
    %1289 = vset.pattern.permute.xlu0 26
    %1290 = vperm.xlu0 %1289, %v1003
    %v1291 = vpop.permute.xlu0 %1290
    %v1293 = vmul.f32 %v1066, %v1291
    %v1294 = vmul.f32 %v1067, %v1291
    %v1295 = vadd.f32 %v1287, %v1293
    %v1296 = vadd.f32 %v1288, %v1294
    %1297 = vrot.lane.b32.xlu0 %v1295, 32
    %v1298 = vpop.permute.xlu0 %1297
    %1299 = vrot.lane.b32.xlu0 %v1296, 32
    %v1300 = vpop.permute.xlu0 %1299
    %v1301 = vsel %vm373, %v1298, %v1300
    %v1302 = vsel %vm373, %v1300, %v1298
    %v1303 = vsel %vm376, %v1302, 0.0
    %v1304 = vsel %vm377, %v1301, 0.0
    %v1305 = vadd.f32 %v1225, %v1303
    %v1306 = vadd.f32 %v1226, %v1304
    %1307 = vset.pattern.permute.xlu0 27
    %1308 = vperm.xlu0 %1307, %v1003
    %v1309 = vpop.permute.xlu0 %1308
    %v1311 = vmul.f32 %v1010, %v1309
    %v1312 = vmul.f32 %v1011, %v1309
    %1313 = vset.pattern.permute.xlu0 28
    %1314 = vperm.xlu0 %1313, %v1003
    %v1315 = vpop.permute.xlu0 %1314
    %v1317 = vmul.f32 %v1018, %v1315
    %v1318 = vmul.f32 %v1019, %v1315
    %v1319 = vadd.f32 %v1311, %v1317
    %v1320 = vadd.f32 %v1312, %v1318
    %1321 = vset.pattern.permute.xlu0 29
    %1322 = vperm.xlu0 %1321, %v1003
    %v1323 = vpop.permute.xlu0 %1322
    %v1325 = vmul.f32 %v1026, %v1323
    %v1326 = vmul.f32 %v1027, %v1323
    %v1327 = vadd.f32 %v1319, %v1325
    %v1328 = vadd.f32 %v1320, %v1326
    %1329 = vset.pattern.permute.xlu0 30
    %1330 = vperm.xlu0 %1329, %v1003
    %v1331 = vpop.permute.xlu0 %1330
    %v1333 = vmul.f32 %v1034, %v1331
    %v1334 = vmul.f32 %v1035, %v1331
    %v1335 = vadd.f32 %v1327, %v1333
    %v1336 = vadd.f32 %v1328, %v1334
    %1337 = vset.pattern.permute.xlu0 31
    %1338 = vperm.xlu0 %1337, %v1003
    %v1339 = vpop.permute.xlu0 %1338
    %v1341 = vmul.f32 %v1000, %v1339
    %v1342 = vmul.f32 %v1001, %v1339
    %v1343 = vadd.f32 %v1335, %v1341
    %v1344 = vadd.f32 %v1336, %v1342
    %1345 = vset.pattern.permute.xlu0 32
    %1346 = vperm.xlu0 %1345, %v1003
    %v1347 = vpop.permute.xlu0 %1346
    %v1349 = vmul.f32 %v1042, %v1347
    %v1350 = vmul.f32 %v1043, %v1347
    %v1351 = vadd.f32 %v1343, %v1349
    %v1352 = vadd.f32 %v1344, %v1350
    %1353 = vset.pattern.permute.xlu0 33
    %1354 = vperm.xlu0 %1353, %v1003
    %v1355 = vpop.permute.xlu0 %1354
    %v1357 = vmul.f32 %v1050, %v1355
    %v1358 = vmul.f32 %v1051, %v1355
    %v1359 = vadd.f32 %v1351, %v1357
    %v1360 = vadd.f32 %v1352, %v1358
    %1361 = vset.pattern.permute.xlu0 34
    %1362 = vperm.xlu0 %1361, %v1003
    %v1363 = vpop.permute.xlu0 %1362
    %v1365 = vmul.f32 %v1058, %v1363
    %v1366 = vmul.f32 %v1059, %v1363
    %v1367 = vadd.f32 %v1359, %v1365
    %v1368 = vadd.f32 %v1360, %v1366
    %1369 = vset.pattern.permute.xlu0 35
    %1370 = vperm.xlu0 %1369, %v1003
    %v1371 = vpop.permute.xlu0 %1370
    %v1373 = vmul.f32 %v1066, %v1371
    %v1374 = vmul.f32 %v1067, %v1371
    %v1375 = vadd.f32 %v1367, %v1373
    %v1376 = vadd.f32 %v1368, %v1374
    %1377 = vrot.lane.b32.xlu0 %v1375, 16
    %v1378 = vpop.permute.xlu0 %1377
    %1379 = vrot.lane.b32.xlu0 %v1376, 16
    %v1380 = vpop.permute.xlu0 %1379
    %v1381 = vsel %vm456, %v1378, %v1380
    %v1382 = vsel %vm456, %v1380, %v1378
    %v1383 = vsel %vm459, %v1382, 0.0
    %v1384 = vsel %vm460, %v1381, 0.0
    %v1385 = vadd.f32 %v1305, %v1383
    %v1386 = vadd.f32 %v1306, %v1384
    %1387 = vset.pattern.permute.xlu0 36
    %1388 = vperm.xlu0 %1387, %v1003
    %v1389 = vpop.permute.xlu0 %1388
    %v1391 = vmul.f32 %v1010, %v1389
    %v1392 = vmul.f32 %v1011, %v1389
    %1393 = vset.pattern.permute.xlu0 37
    %1394 = vperm.xlu0 %1393, %v1003
    %v1395 = vpop.permute.xlu0 %1394
    %v1397 = vmul.f32 %v1018, %v1395
    %v1398 = vmul.f32 %v1019, %v1395
    %v1399 = vadd.f32 %v1391, %v1397
    %v1400 = vadd.f32 %v1392, %v1398
    %1401 = vset.pattern.permute.xlu0 38
    %1402 = vperm.xlu0 %1401, %v1003
    %v1403 = vpop.permute.xlu0 %1402
    %v1405 = vmul.f32 %v1026, %v1403
    %v1406 = vmul.f32 %v1027, %v1403
    %v1407 = vadd.f32 %v1399, %v1405
    %v1408 = vadd.f32 %v1400, %v1406
    %1409 = vset.pattern.permute.xlu0 39
    %1410 = vperm.xlu0 %1409, %v1003
    %v1411 = vpop.permute.xlu0 %1410
    %v1413 = vmul.f32 %v1034, %v1411
    %v1414 = vmul.f32 %v1035, %v1411
    %v1415 = vadd.f32 %v1407, %v1413
    %v1416 = vadd.f32 %v1408, %v1414
    %1417 = vset.pattern.permute.xlu0 40
    %1418 = vperm.xlu0 %1417, %v1003
    %v1419 = vpop.permute.xlu0 %1418
    %v1421 = vmul.f32 %v1000, %v1419
    %v1422 = vmul.f32 %v1001, %v1419
    %v1423 = vadd.f32 %v1415, %v1421
    %v1424 = vadd.f32 %v1416, %v1422
    %1425 = vset.pattern.permute.xlu0 41
    %1426 = vperm.xlu0 %1425, %v1003
    %v1427 = vpop.permute.xlu0 %1426
    %v1429 = vmul.f32 %v1042, %v1427
    %v1430 = vmul.f32 %v1043, %v1427
    %v1431 = vadd.f32 %v1423, %v1429
    %v1432 = vadd.f32 %v1424, %v1430
    %1433 = vset.pattern.permute.xlu0 42
    %1434 = vperm.xlu0 %1433, %v1003
    %v1435 = vpop.permute.xlu0 %1434
    %v1437 = vmul.f32 %v1050, %v1435
    %v1438 = vmul.f32 %v1051, %v1435
    %v1439 = vadd.f32 %v1431, %v1437
    %v1440 = vadd.f32 %v1432, %v1438
    %1441 = vset.pattern.permute.xlu0 43
    %1442 = vperm.xlu0 %1441, %v1003
    %v1443 = vpop.permute.xlu0 %1442
    %v1445 = vmul.f32 %v1058, %v1443
    %v1446 = vmul.f32 %v1059, %v1443
    %v1447 = vadd.f32 %v1439, %v1445
    %v1448 = vadd.f32 %v1440, %v1446
    %1449 = vset.pattern.permute.xlu0 44
    %1450 = vperm.xlu0 %1449, %v1003
    %v1451 = vpop.permute.xlu0 %1450
    %v1453 = vmul.f32 %v1066, %v1451
    %v1454 = vmul.f32 %v1067, %v1451
    %v1455 = vadd.f32 %v1447, %v1453
    %v1456 = vadd.f32 %v1448, %v1454
    %v1457 = vadd.f32 %v1385, %v1455
    %v1458 = vadd.f32 %v1386, %v1456
    %1459 = vset.pattern.permute.xlu0 45
    %1460 = vperm.xlu0 %1459, %v1003
    %v1461 = vpop.permute.xlu0 %1460
    %v1463 = vmul.f32 %v1010, %v1461
    %v1464 = vmul.f32 %v1011, %v1461
    %1465 = vset.pattern.permute.xlu0 46
    %1466 = vperm.xlu0 %1465, %v1003
    %v1467 = vpop.permute.xlu0 %1466
    %v1469 = vmul.f32 %v1018, %v1467
    %v1470 = vmul.f32 %v1019, %v1467
    %v1471 = vadd.f32 %v1463, %v1469
    %v1472 = vadd.f32 %v1464, %v1470
    %1473 = vset.pattern.permute.xlu0 47
    %1474 = vperm.xlu0 %1473, %v1003
    %v1475 = vpop.permute.xlu0 %1474
    %v1477 = vmul.f32 %v1026, %v1475
    %v1478 = vmul.f32 %v1027, %v1475
    %v1479 = vadd.f32 %v1471, %v1477
    %v1480 = vadd.f32 %v1472, %v1478
    %1481 = vset.pattern.permute.xlu0 48
    %1482 = vperm.xlu0 %1481, %v1003
    %v1483 = vpop.permute.xlu0 %1482
    %v1485 = vmul.f32 %v1034, %v1483
    %v1486 = vmul.f32 %v1035, %v1483
    %v1487 = vadd.f32 %v1479, %v1485
    %v1488 = vadd.f32 %v1480, %v1486
    %1489 = vset.pattern.permute.xlu0 49
    %1490 = vperm.xlu0 %1489, %v1003
    %v1491 = vpop.permute.xlu0 %1490
    %v1493 = vmul.f32 %v1000, %v1491
    %v1494 = vmul.f32 %v1001, %v1491
    %v1495 = vadd.f32 %v1487, %v1493
    %v1496 = vadd.f32 %v1488, %v1494
    %1497 = vset.pattern.permute.xlu0 50
    %1498 = vperm.xlu0 %1497, %v1003
    %v1499 = vpop.permute.xlu0 %1498
    %v1501 = vmul.f32 %v1042, %v1499
    %v1502 = vmul.f32 %v1043, %v1499
    %v1503 = vadd.f32 %v1495, %v1501
    %v1504 = vadd.f32 %v1496, %v1502
    %1505 = vset.pattern.permute.xlu0 51
    %1506 = vperm.xlu0 %1505, %v1003
    %v1507 = vpop.permute.xlu0 %1506
    %v1509 = vmul.f32 %v1050, %v1507
    %v1510 = vmul.f32 %v1051, %v1507
    %v1511 = vadd.f32 %v1503, %v1509
    %v1512 = vadd.f32 %v1504, %v1510
    %1513 = vset.pattern.permute.xlu0 52
    %1514 = vperm.xlu0 %1513, %v1003
    %v1515 = vpop.permute.xlu0 %1514
    %v1517 = vmul.f32 %v1058, %v1515
    %v1518 = vmul.f32 %v1059, %v1515
    %v1519 = vadd.f32 %v1511, %v1517
    %v1520 = vadd.f32 %v1512, %v1518
    %1521 = vset.pattern.permute.xlu0 53
    %1522 = vperm.xlu0 %1521, %v1003
    %v1523 = vpop.permute.xlu0 %1522
    %v1525 = vmul.f32 %v1066, %v1523
    %v1526 = vmul.f32 %v1067, %v1523
    %v1527 = vadd.f32 %v1519, %v1525
    %v1528 = vadd.f32 %v1520, %v1526
    %1529 = vrot.lane.b32.xlu0 %v1527, 112
    %v1530 = vpop.permute.xlu0 %1529
    %1531 = vrot.lane.b32.xlu0 %v1528, 112
    %v1532 = vpop.permute.xlu0 %1531
    %v1533 = vsel %vm611, %v1530, %v1532
    %v1534 = vsel %vm611, %v1532, %v1530
    %v1535 = vsel %vm614, %v1533, 0.0
    %v1536 = vsel %vm615, %v1534, 0.0
    %v1537 = vadd.f32 %v1457, %v1535
    %v1538 = vadd.f32 %v1458, %v1536
    %1539 = vset.pattern.permute.xlu0 54
    %1540 = vperm.xlu0 %1539, %v1003
    %v1541 = vpop.permute.xlu0 %1540
    %v1543 = vmul.f32 %v1010, %v1541
    %v1544 = vmul.f32 %v1011, %v1541
    %1545 = vset.pattern.permute.xlu0 55
    %1546 = vperm.xlu0 %1545, %v1003
    %v1547 = vpop.permute.xlu0 %1546
    %v1549 = vmul.f32 %v1018, %v1547
    %v1550 = vmul.f32 %v1019, %v1547
    %v1551 = vadd.f32 %v1543, %v1549
    %v1552 = vadd.f32 %v1544, %v1550
    %1553 = vset.pattern.permute.xlu0 56
    %1554 = vperm.xlu0 %1553, %v1003
    %v1555 = vpop.permute.xlu0 %1554
    %v1557 = vmul.f32 %v1026, %v1555
    %v1558 = vmul.f32 %v1027, %v1555
    %v1559 = vadd.f32 %v1551, %v1557
    %v1560 = vadd.f32 %v1552, %v1558
    %1561 = vset.pattern.permute.xlu0 57
    %1562 = vperm.xlu0 %1561, %v1003
    %v1563 = vpop.permute.xlu0 %1562
    %v1565 = vmul.f32 %v1034, %v1563
    %v1566 = vmul.f32 %v1035, %v1563
    %v1567 = vadd.f32 %v1559, %v1565
    %v1568 = vadd.f32 %v1560, %v1566
    %1569 = vset.pattern.permute.xlu0 58
    %1570 = vperm.xlu0 %1569, %v1003
    %v1571 = vpop.permute.xlu0 %1570
    %v1573 = vmul.f32 %v1000, %v1571
    %v1574 = vmul.f32 %v1001, %v1571
    %v1575 = vadd.f32 %v1567, %v1573
    %v1576 = vadd.f32 %v1568, %v1574
    %1577 = vset.pattern.permute.xlu0 59
    %1578 = vperm.xlu0 %1577, %v1003
    %v1579 = vpop.permute.xlu0 %1578
    %v1581 = vmul.f32 %v1042, %v1579
    %v1582 = vmul.f32 %v1043, %v1579
    %v1583 = vadd.f32 %v1575, %v1581
    %v1584 = vadd.f32 %v1576, %v1582
    %1585 = vset.pattern.permute.xlu0 60
    %1586 = vperm.xlu0 %1585, %v1003
    %v1587 = vpop.permute.xlu0 %1586
    %v1589 = vmul.f32 %v1050, %v1587
    %v1590 = vmul.f32 %v1051, %v1587
    %v1591 = vadd.f32 %v1583, %v1589
    %v1592 = vadd.f32 %v1584, %v1590
    %1593 = vset.pattern.permute.xlu0 61
    %1594 = vperm.xlu0 %1593, %v1003
    %v1595 = vpop.permute.xlu0 %1594
    %v1597 = vmul.f32 %v1058, %v1595
    %v1598 = vmul.f32 %v1059, %v1595
    %v1599 = vadd.f32 %v1591, %v1597
    %v1600 = vadd.f32 %v1592, %v1598
    %1601 = vset.pattern.permute.xlu0 62
    %1602 = vperm.xlu0 %1601, %v1003
    %v1603 = vpop.permute.xlu0 %1602
    %v1605 = vmul.f32 %v1066, %v1603
    %v1606 = vmul.f32 %v1067, %v1603
    %v1607 = vadd.f32 %v1599, %v1605
    %v1608 = vadd.f32 %v1600, %v1606
    %1609 = vrot.lane.b32.xlu0 %v1607, 96
    %v1610 = vpop.permute.xlu0 %1609
    %1611 = vrot.lane.b32.xlu0 %v1608, 96
    %v1612 = vpop.permute.xlu0 %1611
    %v1613 = vsel %vm694, %v1610, %v1612
    %v1614 = vsel %vm694, %v1612, %v1610
    %v1615 = vsel %vm697, %v1613, 0.0
    %v1616 = vsel %vm698, %v1614, 0.0
    %v1617 = vadd.f32 %v1537, %v1615
    %v1618 = vadd.f32 %v1538, %v1616
    %1619 = vset.pattern.permute.xlu0 63
    %1620 = vperm.xlu0 %1619, %v1003
    %v1621 = vpop.permute.xlu0 %1620
    %v1623 = vmul.f32 %v1010, %v1621
    %v1624 = vmul.f32 %v1011, %v1621
    %1625 = vset.pattern.permute.xlu0 64
    %1626 = vperm.xlu0 %1625, %v1003
    %v1627 = vpop.permute.xlu0 %1626
    %v1629 = vmul.f32 %v1018, %v1627
    %v1630 = vmul.f32 %v1019, %v1627
    %v1631 = vadd.f32 %v1623, %v1629
    %v1632 = vadd.f32 %v1624, %v1630
    %1633 = vset.pattern.permute.xlu0 65
    %1634 = vperm.xlu0 %1633, %v1003
    %v1635 = vpop.permute.xlu0 %1634
    %v1637 = vmul.f32 %v1026, %v1635
    %v1638 = vmul.f32 %v1027, %v1635
    %v1639 = vadd.f32 %v1631, %v1637
    %v1640 = vadd.f32 %v1632, %v1638
    %1641 = vset.pattern.permute.xlu0 66
    %1642 = vperm.xlu0 %1641, %v1003
    %v1643 = vpop.permute.xlu0 %1642
    %v1645 = vmul.f32 %v1034, %v1643
    %v1646 = vmul.f32 %v1035, %v1643
    %v1647 = vadd.f32 %v1639, %v1645
    %v1648 = vadd.f32 %v1640, %v1646
    %1649 = vset.pattern.permute.xlu0 67
    %1650 = vperm.xlu0 %1649, %v1003
    %v1651 = vpop.permute.xlu0 %1650
    %v1653 = vmul.f32 %v1000, %v1651
    %v1654 = vmul.f32 %v1001, %v1651
    %v1655 = vadd.f32 %v1647, %v1653
    %v1656 = vadd.f32 %v1648, %v1654
    %1657 = vset.pattern.permute.xlu0 68
    %1658 = vperm.xlu0 %1657, %v1003
    %v1659 = vpop.permute.xlu0 %1658
    %v1661 = vmul.f32 %v1042, %v1659
    %v1662 = vmul.f32 %v1043, %v1659
    %v1663 = vadd.f32 %v1655, %v1661
    %v1664 = vadd.f32 %v1656, %v1662
    %1665 = vset.pattern.permute.xlu0 69
    %1666 = vperm.xlu0 %1665, %v1003
    %v1667 = vpop.permute.xlu0 %1666
    %v1669 = vmul.f32 %v1050, %v1667
    %v1670 = vmul.f32 %v1051, %v1667
    %v1671 = vadd.f32 %v1663, %v1669
    %v1672 = vadd.f32 %v1664, %v1670
    %1673 = vset.pattern.permute.xlu0 70
    %1674 = vperm.xlu0 %1673, %v1003
    %v1675 = vpop.permute.xlu0 %1674
    %v1677 = vmul.f32 %v1058, %v1675
    %v1678 = vmul.f32 %v1059, %v1675
    %v1679 = vadd.f32 %v1671, %v1677
    %v1680 = vadd.f32 %v1672, %v1678
    %1681 = vset.pattern.permute.xlu0 71
    %1682 = vperm.xlu0 %1681, %v1003
    %v1683 = vpop.permute.xlu0 %1682
    %v1685 = vmul.f32 %v1066, %v1683
    %v1686 = vmul.f32 %v1067, %v1683
    %v1687 = vadd.f32 %v1679, %v1685
    %v1688 = vadd.f32 %v1680, %v1686
    %1689 = vrot.lane.b32.xlu0 %v1687, 80
    %v1690 = vpop.permute.xlu0 %1689
    %1691 = vrot.lane.b32.xlu0 %v1688, 80
    %v1692 = vpop.permute.xlu0 %1691
    %v1693 = vsel %vm777, %v1690, %v1692
    %v1694 = vsel %vm777, %v1692, %v1690
    %v1695 = vsel %vm780, %v1693, 0.0
    %v1696 = vsel %vm781, %v1694, 0.0
    %v1697 = vadd.f32 %v1617, %v1695
    %v1698 = vadd.f32 %v1618, %v1696
    %1699 = vset.pattern.permute.xlu0 72
    %1700 = vperm.xlu0 %1699, %v1003
    %v1701 = vpop.permute.xlu0 %1700
    %v1703 = vmul.f32 %v1010, %v1701
    %v1704 = vmul.f32 %v1011, %v1701
    %1705 = vset.pattern.permute.xlu0 73
    %1706 = vperm.xlu0 %1705, %v1003
    %v1707 = vpop.permute.xlu0 %1706
    %v1709 = vmul.f32 %v1018, %v1707
    %v1710 = vmul.f32 %v1019, %v1707
    %v1711 = vadd.f32 %v1703, %v1709
    %v1712 = vadd.f32 %v1704, %v1710
    %1713 = vset.pattern.permute.xlu0 74
    %1714 = vperm.xlu0 %1713, %v1003
    %v1715 = vpop.permute.xlu0 %1714
    %v1717 = vmul.f32 %v1026, %v1715
    %v1718 = vmul.f32 %v1027, %v1715
    %v1719 = vadd.f32 %v1711, %v1717
    %v1720 = vadd.f32 %v1712, %v1718
    %1721 = vset.pattern.permute.xlu0 75
    %1722 = vperm.xlu0 %1721, %v1003
    %v1723 = vpop.permute.xlu0 %1722
    %v1725 = vmul.f32 %v1034, %v1723
    %v1726 = vmul.f32 %v1035, %v1723
    %v1727 = vadd.f32 %v1719, %v1725
    %v1728 = vadd.f32 %v1720, %v1726
    %1729 = vset.pattern.permute.xlu0 76
    %1730 = vperm.xlu0 %1729, %v1003
    %v1731 = vpop.permute.xlu0 %1730
    %v1733 = vmul.f32 %v1000, %v1731
    %v1734 = vmul.f32 %v1001, %v1731
    %v1735 = vadd.f32 %v1727, %v1733
    %v1736 = vadd.f32 %v1728, %v1734
    %1737 = vset.pattern.permute.xlu0 77
    %1738 = vperm.xlu0 %1737, %v1003
    %v1739 = vpop.permute.xlu0 %1738
    %v1741 = vmul.f32 %v1042, %v1739
    %v1742 = vmul.f32 %v1043, %v1739
    %v1743 = vadd.f32 %v1735, %v1741
    %v1744 = vadd.f32 %v1736, %v1742
    %1745 = vset.pattern.permute.xlu0 78
    %1746 = vperm.xlu0 %1745, %v1003
    %v1747 = vpop.permute.xlu0 %1746
    %v1749 = vmul.f32 %v1050, %v1747
    %v1750 = vmul.f32 %v1051, %v1747
    %v1751 = vadd.f32 %v1743, %v1749
    %v1752 = vadd.f32 %v1744, %v1750
    %1753 = vset.pattern.permute.xlu0 79
    %1754 = vperm.xlu0 %1753, %v1003
    %v1755 = vpop.permute.xlu0 %1754
    %v1757 = vmul.f32 %v1058, %v1755
    %v1758 = vmul.f32 %v1059, %v1755
    %v1759 = vadd.f32 %v1751, %v1757
    %v1760 = vadd.f32 %v1752, %v1758
    %1761 = vset.pattern.permute.xlu0 80
    %1762 = vperm.xlu0 %1761, %v1003
    %v1763 = vpop.permute.xlu0 %1762
    %v1765 = vmul.f32 %v1066, %v1763
    %v1766 = vmul.f32 %v1067, %v1763
    %v1767 = vadd.f32 %v1759, %v1765
    %v1768 = vadd.f32 %v1760, %v1766
    %1769 = vrot.lane.b32.xlu0 %v1767, 64
    %v1770 = vpop.permute.xlu0 %1769
    %1771 = vrot.lane.b32.xlu0 %v1768, 64
    %v1772 = vpop.permute.xlu0 %1771
    %v1773 = vsel %vm209, %v1770, %v1772
    %v1774 = vsel %vm209, %v1772, %v1770
    %v1775 = vsel %vm862, %v1773, 0.0
    %v1776 = vsel %vm863, %v1774, 0.0
    %v1777 = vadd.f32 %v1697, %v1775
    %v1778 = vadd.f32 %v1698, %v1776
    %1779 = vset.pattern.permute.xlu0 81
    %1780 = vperm.xlu0 %1779, %v1003
    %v1781 = vpop.permute.xlu0 %1780
    %v1783 = vlaneseq
    %v1784 = vshrl.u32 %v1783, 7
    %v1785 = vsub.s32 0, %v1784
    %v1786 = vrot.slane %v1777, %v1785
    %v1787 = vlaneseq
    %v1788 = vshrl.u32 %v1787, 7
    %v1789 = vsub.s32 0, %v1788
    %v1790 = vrot.slane %v1778, %v1789
    %v1791 = vmul.f32 %v1781, %v1786
    %v1792 = vmul.f32 %v1781, %v1790
    %1793 = vset.pattern.permute.xlu0 89
    %1794 = vperm.xlu0 %1793, %v1003
    %v1795 = vpop.permute.xlu0 %1794
    %v1797 = vadd.f32 %v1795, %v1791
    %v1798 = vadd.f32 %v1795, %v1792
    %1799 = vset.pattern.permute.xlu0 82
    %1800 = vperm.xlu0 %1799, %v1003
    %v1801 = vpop.permute.xlu0 %1800
    %v1803 = vlaneseq
    %v1804 = vshrl.u32 %v1803, 7
    %v1805 = vsub.s32 1, %v1804
    %v1806 = vrot.slane %v1777, %v1805
    %v1807 = vlaneseq
    %v1808 = vshrl.u32 %v1807, 7
    %v1809 = vsub.s32 1, %v1808
    %v1810 = vrot.slane %v1778, %v1809
    %v1811 = vmul.f32 %v1801, %v1806
    %v1812 = vmul.f32 %v1801, %v1810
    %v1813 = vadd.f32 %v1797, %v1811
    %v1814 = vadd.f32 %v1798, %v1812
    %1815 = vset.pattern.permute.xlu0 83
    %1816 = vperm.xlu0 %1815, %v1003
    %v1817 = vpop.permute.xlu0 %1816
    %v1819 = vlaneseq
    %v1820 = vshrl.u32 %v1819, 7
    %v1821 = vsub.s32 2, %v1820
    %v1822 = vrot.slane %v1777, %v1821
    %v1823 = vlaneseq
    %v1824 = vshrl.u32 %v1823, 7
    %v1825 = vsub.s32 2, %v1824
    %v1826 = vrot.slane %v1778, %v1825
    %v1827 = vmul.f32 %v1817, %v1822
    %v1828 = vmul.f32 %v1817, %v1826
    %v1829 = vadd.f32 %v1813, %v1827
    %v1830 = vadd.f32 %v1814, %v1828
    %1831 = vset.pattern.permute.xlu0 84
    %1832 = vperm.xlu0 %1831, %v1003
    %v1833 = vpop.permute.xlu0 %1832
    %v1835 = vlaneseq
    %v1836 = vshrl.u32 %v1835, 7
    %v1837 = vsub.s32 3, %v1836
    %v1838 = vrot.slane %v1777, %v1837
    %v1839 = vlaneseq
    %v1840 = vshrl.u32 %v1839, 7
    %v1841 = vsub.s32 3, %v1840
    %v1842 = vrot.slane %v1778, %v1841
    %v1843 = vmul.f32 %v1833, %v1838
    %v1844 = vmul.f32 %v1833, %v1842
    %v1845 = vadd.f32 %v1829, %v1843
    %v1846 = vadd.f32 %v1830, %v1844
    %1847 = vset.pattern.permute.xlu0 85
    %1848 = vperm.xlu0 %1847, %v1003
    %v1849 = vpop.permute.xlu0 %1848
    %v1851 = vlaneseq
    %v1852 = vshrl.u32 %v1851, 7
    %v1853 = vsub.s32 4, %v1852
    %v1854 = vrot.slane %v1777, %v1853
    %v1855 = vlaneseq
    %v1856 = vshrl.u32 %v1855, 7
    %v1857 = vsub.s32 4, %v1856
    %v1858 = vrot.slane %v1778, %v1857
    %v1859 = vmul.f32 %v1849, %v1854
    %v1860 = vmul.f32 %v1849, %v1858
    %v1861 = vadd.f32 %v1845, %v1859
    %v1862 = vadd.f32 %v1846, %v1860
    %1863 = vset.pattern.permute.xlu0 86
    %1864 = vperm.xlu0 %1863, %v1003
    %v1865 = vpop.permute.xlu0 %1864
    %v1867 = vlaneseq
    %v1868 = vshrl.u32 %v1867, 7
    %v1869 = vsub.s32 5, %v1868
    %v1870 = vrot.slane %v1777, %v1869
    %v1871 = vlaneseq
    %v1872 = vshrl.u32 %v1871, 7
    %v1873 = vsub.s32 5, %v1872
    %v1874 = vrot.slane %v1778, %v1873
    %v1875 = vmul.f32 %v1865, %v1870
    %v1876 = vmul.f32 %v1865, %v1874
    %v1877 = vadd.f32 %v1861, %v1875
    %v1878 = vadd.f32 %v1862, %v1876
    %1879 = vset.pattern.permute.xlu0 87
    %1880 = vperm.xlu0 %1879, %v1003
    %v1881 = vpop.permute.xlu0 %1880
    %v1883 = vlaneseq
    %v1884 = vshrl.u32 %v1883, 7
    %v1885 = vsub.s32 6, %v1884
    %v1886 = vrot.slane %v1777, %v1885
    %v1887 = vlaneseq
    %v1888 = vshrl.u32 %v1887, 7
    %v1889 = vsub.s32 6, %v1888
    %v1890 = vrot.slane %v1778, %v1889
    %v1891 = vmul.f32 %v1881, %v1886
    %v1892 = vmul.f32 %v1881, %v1890
    %v1893 = vadd.f32 %v1877, %v1891
    %v1894 = vadd.f32 %v1878, %v1892
    %1895 = vset.pattern.permute.xlu0 88
    %1896 = vperm.xlu0 %1895, %v1003
    %v1897 = vpop.permute.xlu0 %1896
    %v1899 = vlaneseq
    %v1900 = vshrl.u32 %v1899, 7
    %v1901 = vsub.s32 7, %v1900
    %v1902 = vrot.slane %v1777, %v1901
    %v1903 = vlaneseq
    %v1904 = vshrl.u32 %v1903, 7
    %v1905 = vsub.s32 7, %v1904
    %v1906 = vrot.slane %v1778, %v1905
    %v1907 = vmul.f32 %v1897, %v1902
    %v1908 = vmul.f32 %v1897, %v1906
    %v1909 = vadd.f32 %v1893, %v1907
    %v1910 = vadd.f32 %v1894, %v1908
    %v1911 = vmax.f32 %v1909, 0.0
    %v1912 = vmax.f32 %v1910, 0.0
    %1913 = vst [vmem:[#allocation7] sm:$0xff] %v1911
    %1914 = vst [vmem:[#allocation7 + $0x8] sm:$0xff] %v1912
    // Predicated region
    $region18: #{tpu_custom_call.1} parent=1 // pred_check
      _
    $region19: #{tpu_custom_call.1} parent=1 // pred_check_branch
      %1916 = sbr.rel (0) target = $region21
    $region20: #{tpu_custom_call.1} parent=1 // pred_region
      %s1918 = ssub.s32 256, 256
      %1919 = vsyncadd [#allocation4], %s1918
      %s1921 = sshll.u32 [#allocation7], 4
      %s1922 = int_to_ptr.vmem [resolvable:$true] %s1921
      %1924 = dma.vmem_to_hbm [thread:$0]  %s1922, 256, %s2, [#allocation4]
    $region21: #{tpu_custom_call.1} parent=1 // pred_fallthru
      _
    // Predicated region
    $region22: #{tpu_custom_call.1} parent=1 // pred_check
      _
    $region23: #{tpu_custom_call.1} parent=1 // pred_check_branch
      %1926 = sbr.rel (0) target = $region25
    $region24: #{tpu_custom_call.1} parent=1 // pred_region
      %1927 = dma.done [#allocation4], 256
    $region25: #{tpu_custom_call.1} parent=1 // pred_fallthru
      _
    %1928 = vsyncpa [#allocation3], 1
    %1929 = vsyncpa [#allocation6], 1
    %1930 = vsyncpa [#allocation4], 1

</llo_original>
